<compile_context>
chip_gen: v6e
topology: v6e:2x2x1
jax: 0.10.0
libtpu: 0.0.40
codegen_flags: <defaults>
</compile_context>

<pallas_src>
import functools

import jax
import jax.numpy as jnp
from jax.experimental import pallas as pl
from jax.experimental.pallas import tpu as pltpu


# ---------------------------------------------------------------------------
# In-kernel helpers: circular spatial shifts on the flat (C, H*W) layout.
# ---------------------------------------------------------------------------
def _flat_shift(v, delta, hw):
    """out[..., p] = v[..., (p + delta) % hw]  (circular shift of flat spatial)."""
    s = (-delta) % hw
    if s == 0:
        return v
    return pltpu.roll(v, s, axis=1)


def _col_shift(v, dx, w, hw, lane_x):
    """out[..., y*W + x] = v[..., y*W + (x + dx) % W]  (wrap inside each row)."""
    if dx == 0:
        return v
    main = _flat_shift(v, dx, hw)
    if dx > 0:
        fix = _flat_shift(v, dx - w, hw)
        keep = lane_x != (w - 1)
    else:
        fix = _flat_shift(v, dx + w, hw)
        keep = lane_x != 0
    return jnp.where(keep, main, fix)


def _im2col_store(p_ref, feat, row_off, w, hw, lane_x):
    """Write the 9 circularly shifted copies of `feat` (C, H*W) into the shared
    bf16 im2col scratch at rows [row_off, row_off + 9*C)."""
    cs = feat.shape[0]
    cols = {dx: _col_shift(feat, dx, w, hw, lane_x) for dx in (-1, 0, 1)}
    for kh in range(3):
        for kw in range(3):
            tap = _flat_shift(cols[kw - 1], (kh - 1) * w, hw)
            r0 = row_off + (kh * 3 + kw) * cs
            p_ref[r0:r0 + cs, :] = tap.astype(p_ref.dtype)


def _conv_from_p(p_ref, k_rows, w_ref, b_ref, lrelu):
    """One fused 3x3 circular conv: (Cout, 9*Cin) x (9*Cin, H*W) on the MXU."""
    y = jnp.dot(w_ref[...], p_ref[0:k_rows, :],
                preferred_element_type=jnp.float32)
    y = y + b_ref[...]                       # (Cout, H*W) + (Cout, 1)
    if lrelu:
        y = jnp.where(y > 0, y, 0.2 * y)
    return y


def _make_rdb_kernel(nf, gc, h, w):
    hw = h * w

    def kernel(x_ref, w1, b1, w2, b2, w3, b3, w4, b4, w5, b5, o_ref, p_ref):
        lane_x = jax.lax.broadcasted_iota(jnp.int32, (1, hw), 1) % w
        x = x_ref[0]                                        # (nf, HW) f32

        _im2col_store(p_ref, x, 0, w, hw, lane_x)
        y1 = _conv_from_p(p_ref, 9 * nf, w1, b1, True)
        _im2col_store(p_ref, y1, 9 * nf, w, hw, lane_x)
        y2 = _conv_from_p(p_ref, 9 * (nf + gc), w2, b2, True)
        _im2col_store(p_ref, y2, 9 * (nf + gc), w, hw, lane_x)
        y3 = _conv_from_p(p_ref, 9 * (nf + 2 * gc), w3, b3, True)
        _im2col_store(p_ref, y3, 9 * (nf + 2 * gc), w, hw, lane_x)
        y4 = _conv_from_p(p_ref, 9 * (nf + 3 * gc), w4, b4, True)
        _im2col_store(p_ref, y4, 9 * (nf + 3 * gc), w, hw, lane_x)
        y5 = _conv_from_p(p_ref, 9 * (nf + 4 * gc), w5, b5, False)

        res = (y5 * 0.2 + x).astype(o_ref.dtype)            # residual in f32
        o_ref[...] = res.reshape(1, nf, hw)

    return kernel


# ---------------------------------------------------------------------------
# Host-side weight packing + pallas_call wrapper
# ---------------------------------------------------------------------------
def _pack_weight(w_oihw, seg_sizes):
    """(Cout, Cin, 3, 3) -> (Cout, 9*Cin), segment-major then (kh, kw, ci)."""
    cout = w_oihw.shape[0]
    parts = []
    off = 0
    for cs in seg_sizes:
        wseg = w_oihw[:, off:off + cs, :, :]          # (Cout, cs, 3, 3)
        wseg = jnp.transpose(wseg, (0, 2, 3, 1))      # (Cout, 3, 3, cs)
        parts.append(wseg.reshape(cout, 9 * cs))
        off += cs
    return jnp.concatenate(parts, axis=1)


def residual_dense_block(x_nchw, params):
    """x_nchw: (N, num_feat, H, W) -> (N, num_feat, H, W)."""
    n, nf, h, w = x_nchw.shape
    gc = params["w1"].shape[0]
    hw = h * w
    c_total = nf + 4 * gc

    x_flat = x_nchw.reshape(n, nf, hw)                # free reshape, no transpose

    args = [x_flat]
    in_specs = [pl.BlockSpec((1, nf, hw), lambda i: (i, 0, 0))]
    flops = 0
    for k in range(1, 6):
        segs = [nf] + [gc] * (k - 1)
        wm = _pack_weight(params[f"w{k}"], segs).astype(jnp.bfloat16)
        bc = params[f"b{k}"].reshape(-1, 1).astype(jnp.float32)
        args += [wm, bc]
        in_specs += [pl.BlockSpec(wm.shape, lambda i: (0, 0)),
                     pl.BlockSpec(bc.shape, lambda i: (0, 0))]
        flops += 2 * n * hw * wm.shape[0] * wm.shape[1]

    bytes_accessed = (x_flat.size + n * nf * hw) * 4 + sum(
        int(a.size) * a.dtype.itemsize for a in args[1:])

    out = pl.pallas_call(
        _make_rdb_kernel(nf, gc, h, w),
        out_shape=jax.ShapeDtypeStruct((n, nf, hw), x_nchw.dtype),
        grid=(n,),
        in_specs=in_specs,
        out_specs=pl.BlockSpec((1, nf, hw), lambda i: (i, 0, 0)),
        scratch_shapes=[pltpu.VMEM((9 * c_total, hw), jnp.bfloat16)],
        compiler_params=pltpu.CompilerParams(
            dimension_semantics=("parallel",),
            vmem_limit_bytes=48 * 1024 * 1024),
        cost_estimate=pl.CostEstimate(
            flops=flops, transcendentals=0, bytes_accessed=bytes_accessed),
    )(*args)
    return out.reshape(n, nf, h, w)


# ---------------------------------------------------------------------------
# Pure-JAX f32 reference (matches the PyTorch module)
# ---------------------------------------------------------------------------
def _conv_ref(x, w, b, lrelu):
    xp = jnp.pad(x, ((0, 0), (0, 0), (1, 1), (1, 1)), mode="wrap")
    y = jax.lax.conv_general_dilated(
        xp, w, (1, 1), "VALID",
        dimension_numbers=("NCHW", "OIHW", "NCHW")) + b[None, :, None, None]
    if lrelu:
        y = jnp.where(y > 0, y, 0.2 * y)
    return y


def residual_dense_block_ref(x, params):
    x1 = _conv_ref(x, params["w1"], params["b1"], True)
    x2 = _conv_ref(jnp.concatenate([x, x1], 1), params["w2"], params["b2"], True)
    x3 = _conv_ref(jnp.concatenate([x, x1, x2], 1), params["w3"], params["b3"], True)
    x4 = _conv_ref(jnp.concatenate([x, x1, x2, x3], 1), params["w4"], params["b4"], True)
    x5 = _conv_ref(jnp.concatenate([x, x1, x2, x3, x4], 1), params["w5"], params["b5"], False)
    return x5 * 0.2 + x


# ---------------------------------------------------------------------------
# Deterministic init (mimics default_init_weights scale=0.1, bias=0); OIHW.
# ---------------------------------------------------------------------------
def init_params(key, num_feat, num_grow_ch):
    params = {}
    in_chs = [num_feat + i * num_grow_ch for i in range(5)]
    out_chs = [num_grow_ch] * 4 + [num_feat]
    keys = jax.random.split(key, 5)
    for i, (cin, cout, k) in enumerate(zip(in_chs, out_chs, keys), start=1):
        std = (2.0 / (cin * 9)) ** 0.5
        params[f"w{i}"] = 0.1 * std * jax.random.normal(
            k, (cout, cin, 3, 3), jnp.float32)
        params[f"b{i}"] = jnp.zeros((cout,), jnp.float32)
    return params


if __name__ == "__main__":
    num_feat, num_grow_ch = 16, 16
    N, H, W = 2, 16, 16

    key = jax.random.PRNGKey(0)
    kx, kp = jax.random.split(key)
    x = jax.random.normal(kx, (N, num_feat, H, W), jnp.float32)  # NCHW input
    params = init_params(kp, num_feat, num_grow_ch)

    fwd = jax.jit(functools.partial(residual_dense_block, params=params))
    out = jax.block_until_ready(fwd(x))

    ref = residual_dense_block_ref(x, params)
    assert out.shape == (N, num_feat, H, W)
    max_err = float(jnp.max(jnp.abs(out - ref)))
    assert jnp.allclose(out, ref, rtol=1e-2, atol=1e-2), max_err  # bf16 MXU tolerance

    print("KERNEL_OK")
</pallas_src>

<mosaic_0001>
module attributes {stable_mosaic.version = 11 : i64} {
  func.func @kernel(%arg0: i32, %arg1: memref<1x16x256xf32, #tpu.memory_space<vmem>>, %arg2: memref<16x144xbf16, #tpu.memory_space<vmem>>, %arg3: memref<16x1xf32, #tpu.memory_space<vmem>>, %arg4: memref<16x288xbf16, #tpu.memory_space<vmem>>, %arg5: memref<16x1xf32, #tpu.memory_space<vmem>>, %arg6: memref<16x432xbf16, #tpu.memory_space<vmem>>, %arg7: memref<16x1xf32, #tpu.memory_space<vmem>>, %arg8: memref<16x576xbf16, #tpu.memory_space<vmem>>, %arg9: memref<16x1xf32, #tpu.memory_space<vmem>>, %arg10: memref<16x720xbf16, #tpu.memory_space<vmem>>, %arg11: memref<16x1xf32, #tpu.memory_space<vmem>>, %arg12: memref<1x16x256xf32, #tpu.memory_space<vmem>>, %arg13: memref<720x256xbf16, #tpu.memory_space<vmem>>) attributes {dimension_semantics = [#tpu.dimension_semantics<parallel>], iteration_bounds = array<i64: 2>, scalar_prefetch = 0 : i64, scratch_operands = 1 : i64, tpu.core_type = #tpu.core_type<tc>, window_params = [{transform_indices = @transform_0, window_bounds = array<i64: 1, 16, 256>}, {pipeline_mode = #tpu.pipeline_mode<synchronous>, transform_indices = @transform_1, window_bounds = array<i64: 16, 144>}, {pipeline_mode = #tpu.pipeline_mode<synchronous>, transform_indices = @transform_2, window_bounds = array<i64: 16, 1>}, {pipeline_mode = #tpu.pipeline_mode<synchronous>, transform_indices = @transform_3, window_bounds = array<i64: 16, 288>}, {pipeline_mode = #tpu.pipeline_mode<synchronous>, transform_indices = @transform_4, window_bounds = array<i64: 16, 1>}, {pipeline_mode = #tpu.pipeline_mode<synchronous>, transform_indices = @transform_5, window_bounds = array<i64: 16, 432>}, {pipeline_mode = #tpu.pipeline_mode<synchronous>, transform_indices = @transform_6, window_bounds = array<i64: 16, 1>}, {pipeline_mode = #tpu.pipeline_mode<synchronous>, transform_indices = @transform_7, window_bounds = array<i64: 16, 576>}, {pipeline_mode = #tpu.pipeline_mode<synchronous>, transform_indices = @transform_8, window_bounds = array<i64: 16, 1>}, {pipeline_mode = #tpu.pipeline_mode<synchronous>, transform_indices = @transform_9, window_bounds = array<i64: 16, 720>}, {pipeline_mode = #tpu.pipeline_mode<synchronous>, transform_indices = @transform_10, window_bounds = array<i64: 16, 1>}, {transform_indices = @transform_11, window_bounds = array<i64: 1, 16, 256>}]} {
    %0 = tpu.iota {dimensions = array<i32: 1>} : vector<1x256xi32>
    %c16_i32 = arith.constant 16 : i32
    %c0_i32 = arith.constant 0 : i32
    %1 = arith.cmpi eq, %c16_i32, %c0_i32 : i32
    %c1_i32 = arith.constant 1 : i32
    %2 = arith.select %1, %c1_i32, %c16_i32 : i32
    %3 = vector.broadcast %2 : i32 to vector<1x256xi32>
    %4 = arith.remsi %0, %3 : vector<1x256xi32>
    %c0_i32_0 = arith.constant 0 : i32
    %5 = vector.broadcast %c0_i32_0 : i32 to vector<1x256xi32>
    %6 = arith.cmpi ne, %4, %5 : vector<1x256xi32>
    %c0_i32_1 = arith.constant 0 : i32
    %7 = vector.broadcast %c0_i32_1 : i32 to vector<1x256xi32>
    %8 = arith.cmpi slt, %4, %7 : vector<1x256xi32>
    %c0_i32_2 = arith.constant 0 : i32
    %9 = arith.cmpi slt, %2, %c0_i32_2 : i32
    %10 = vector.broadcast %9 : i1 to vector<1x256xi1>
    %11 = vector.broadcast %10 : vector<1x256xi1> to vector<1x256xi1>
    %12 = arith.xori %8, %11 : vector<1x256xi1>
    %13 = arith.andi %12, %6 : vector<1x256xi1>
    %14 = vector.broadcast %2 : i32 to vector<1x256xi32>
    %15 = arith.addi %4, %14 : vector<1x256xi32>
    %16 = arith.select %13, %15, %4 : vector<1x256xi1>, vector<1x256xi32>
    %c0 = arith.constant 0 : index
    %c0_3 = arith.constant 0 : index
    %c0_4 = arith.constant 0 : index
    %17 = vector.load %arg1[%c0, %c0_3, %c0_4] : memref<1x16x256xf32, #tpu.memory_space<vmem>>, vector<1x16x256xf32>
    %18 = vector.shape_cast %17 : vector<1x16x256xf32> to vector<16x256xf32>
    %c1_i32_5 = arith.constant 1 : i32
    %19 = tpu.dynamic_rotate %18 by %c1_i32_5 dim 1 : vector<16x256xf32>, i32 -> vector<16x256xf32>
    %c241_i32 = arith.constant 241 : i32
    %20 = tpu.dynamic_rotate %18 by %c241_i32 dim 1 : vector<16x256xf32>, i32 -> vector<16x256xf32>
    %c0_i32_6 = arith.constant 0 : i32
    %21 = vector.broadcast %c0_i32_6 : i32 to vector<1x256xi32>
    %22 = arith.cmpi ne, %16, %21 : vector<1x256xi32>
    %23 = vector.shape_cast %22 : vector<1x256xi1> to vector<1x256xi1>
    %24 = vector.broadcast %23 : vector<1x256xi1> to vector<16x256xi1>
    %25 = arith.select %24, %19, %20 : vector<16x256xi1>, vector<16x256xf32>
    %c255_i32 = arith.constant 255 : i32
    %26 = tpu.dynamic_rotate %18 by %c255_i32 dim 1 : vector<16x256xf32>, i32 -> vector<16x256xf32>
    %c15_i32 = arith.constant 15 : i32
    %27 = tpu.dynamic_rotate %18 by %c15_i32 dim 1 : vector<16x256xf32>, i32 -> vector<16x256xf32>
    %c15_i32_7 = arith.constant 15 : i32
    %28 = vector.broadcast %c15_i32_7 : i32 to vector<1x256xi32>
    %29 = arith.cmpi ne, %16, %28 : vector<1x256xi32>
    %30 = vector.shape_cast %29 : vector<1x256xi1> to vector<1x256xi1>
    %31 = vector.broadcast %30 : vector<1x256xi1> to vector<16x256xi1>
    %32 = arith.select %31, %26, %27 : vector<16x256xi1>, vector<16x256xf32>
    %c16_i32_8 = arith.constant 16 : i32
    %33 = tpu.dynamic_rotate %25 by %c16_i32_8 dim 1 : vector<16x256xf32>, i32 -> vector<16x256xf32>
    %34 = arith.truncf %33 : vector<16x256xf32> to vector<16x256xbf16>
    %c0_9 = arith.constant 0 : index
    %c0_10 = arith.constant 0 : index
    %35 = vector.load %arg13[%c0_9, %c0_10] : memref<720x256xbf16, #tpu.memory_space<vmem>>, vector<16x256xbf16>
    tpu.vector_store %arg13[%c0_9, %c0_10], %34 {strides = array<i32>} : memref<720x256xbf16, #tpu.memory_space<vmem>>, vector<16x256xbf16>,
    %c16_i32_11 = arith.constant 16 : i32
    %36 = tpu.dynamic_rotate %18 by %c16_i32_11 dim 1 : vector<16x256xf32>, i32 -> vector<16x256xf32>
    %37 = arith.truncf %36 : vector<16x256xf32> to vector<16x256xbf16>
    %c16 = arith.constant 16 : index
    %c0_12 = arith.constant 0 : index
    %38 = vector.load %arg13[%c16, %c0_12] : memref<720x256xbf16, #tpu.memory_space<vmem>>, vector<16x256xbf16>
    tpu.vector_store %arg13[%c16, %c0_12], %37 {strides = array<i32>} : memref<720x256xbf16, #tpu.memory_space<vmem>>, vector<16x256xbf16>,
    %c16_i32_13 = arith.constant 16 : i32
    %39 = tpu.dynamic_rotate %32 by %c16_i32_13 dim 1 : vector<16x256xf32>, i32 -> vector<16x256xf32>
    %40 = arith.truncf %39 : vector<16x256xf32> to vector<16x256xbf16>
    %c32 = arith.constant 32 : index
    %c0_14 = arith.constant 0 : index
    %41 = vector.load %arg13[%c32, %c0_14] : memref<720x256xbf16, #tpu.memory_space<vmem>>, vector<16x256xbf16>
    tpu.vector_store %arg13[%c32, %c0_14], %40 {strides = array<i32>} : memref<720x256xbf16, #tpu.memory_space<vmem>>, vector<16x256xbf16>,
    %42 = arith.truncf %25 : vector<16x256xf32> to vector<16x256xbf16>
    %c48 = arith.constant 48 : index
    %c0_15 = arith.constant 0 : index
    %43 = vector.load %arg13[%c48, %c0_15] : memref<720x256xbf16, #tpu.memory_space<vmem>>, vector<16x256xbf16>
    tpu.vector_store %arg13[%c48, %c0_15], %42 {strides = array<i32>} : memref<720x256xbf16, #tpu.memory_space<vmem>>, vector<16x256xbf16>,
    %44 = arith.truncf %18 : vector<16x256xf32> to vector<16x256xbf16>
    %c64 = arith.constant 64 : index
    %c0_16 = arith.constant 0 : index
    %45 = vector.load %arg13[%c64, %c0_16] : memref<720x256xbf16, #tpu.memory_space<vmem>>, vector<16x256xbf16>
    tpu.vector_store %arg13[%c64, %c0_16], %44 {strides = array<i32>} : memref<720x256xbf16, #tpu.memory_space<vmem>>, vector<16x256xbf16>,
    %46 = arith.truncf %32 : vector<16x256xf32> to vector<16x256xbf16>
    %c80 = arith.constant 80 : index
    %c0_17 = arith.constant 0 : index
    %47 = vector.load %arg13[%c80, %c0_17] : memref<720x256xbf16, #tpu.memory_space<vmem>>, vector<16x256xbf16>
    tpu.vector_store %arg13[%c80, %c0_17], %46 {strides = array<i32>} : memref<720x256xbf16, #tpu.memory_space<vmem>>, vector<16x256xbf16>,
    %c240_i32 = arith.constant 240 : i32
    %48 = tpu.dynamic_rotate %25 by %c240_i32 dim 1 : vector<16x256xf32>, i32 -> vector<16x256xf32>
    %49 = arith.truncf %48 : vector<16x256xf32> to vector<16x256xbf16>
    %c96 = arith.constant 96 : index
    %c0_18 = arith.constant 0 : index
    %50 = vector.load %arg13[%c96, %c0_18] : memref<720x256xbf16, #tpu.memory_space<vmem>>, vector<16x256xbf16>
    tpu.vector_store %arg13[%c96, %c0_18], %49 {strides = array<i32>} : memref<720x256xbf16, #tpu.memory_space<vmem>>, vector<16x256xbf16>,
    %c240_i32_19 = arith.constant 240 : i32
    %51 = tpu.dynamic_rotate %18 by %c240_i32_19 dim 1 : vector<16x256xf32>, i32 -> vector<16x256xf32>
    %52 = arith.truncf %51 : vector<16x256xf32> to vector<16x256xbf16>
    %c112 = arith.constant 112 : index
    %c0_20 = arith.constant 0 : index
    %53 = vector.load %arg13[%c112, %c0_20] : memref<720x256xbf16, #tpu.memory_space<vmem>>, vector<16x256xbf16>
    tpu.vector_store %arg13[%c112, %c0_20], %52 {strides = array<i32>} : memref<720x256xbf16, #tpu.memory_space<vmem>>, vector<16x256xbf16>,
    %c240_i32_21 = arith.constant 240 : i32
    %54 = tpu.dynamic_rotate %32 by %c240_i32_21 dim 1 : vector<16x256xf32>, i32 -> vector<16x256xf32>
    %55 = arith.truncf %54 : vector<16x256xf32> to vector<16x256xbf16>
    %c128 = arith.constant 128 : index
    %c0_22 = arith.constant 0 : index
    %56 = vector.load %arg13[%c128, %c0_22] : memref<720x256xbf16, #tpu.memory_space<vmem>>, vector<16x256xbf16>
    tpu.vector_store %arg13[%c128, %c0_22], %55 {strides = array<i32>} : memref<720x256xbf16, #tpu.memory_space<vmem>>, vector<16x256xbf16>,
    %c0_23 = arith.constant 0 : index
    %c0_24 = arith.constant 0 : index
    %57 = vector.load %arg2[%c0_23, %c0_24] : memref<16x144xbf16, #tpu.memory_space<vmem>>, vector<16x144xbf16>
    %c0_25 = arith.constant 0 : index
    %c0_26 = arith.constant 0 : index
    %58 = vector.load %arg13[%c0_25, %c0_26] : memref<720x256xbf16, #tpu.memory_space<vmem>>, vector<144x256xbf16>
    %cst = arith.constant dense<0.000000e+00> : vector<16x256xf32>
    %59 = tpu.matmul %57, %58, %cst {dimension_numbers = #tpu.dot_dimension_numbers<[1], [0], [0], [1], [0, 0, 1, 1], [], []>} : vector<16x144xbf16>, vector<144x256xbf16>, vector<16x256xf32> -> vector<16x256xf32>
    %c0_27 = arith.constant 0 : index
    %c0_28 = arith.constant 0 : index
    %60 = vector.load %arg3[%c0_27, %c0_28] : memref<16x1xf32, #tpu.memory_space<vmem>>, vector<16x1xf32>
    %61 = vector.broadcast %60 : vector<16x1xf32> to vector<16x256xf32>
    %62 = arith.addf %59, %61 : vector<16x256xf32>
    %cst_29 = arith.constant 0.000000e+00 : f32
    %63 = vector.broadcast %cst_29 : f32 to vector<16x256xf32>
    %64 = arith.cmpf ogt, %62, %63 : vector<16x256xf32>
    %cst_30 = arith.constant 2.000000e-01 : f32
    %65 = vector.broadcast %cst_30 : f32 to vector<16x256xf32>
    %66 = arith.mulf %65, %62 : vector<16x256xf32>
    %67 = arith.select %64, %62, %66 : vector<16x256xi1>, vector<16x256xf32>
    %c1_i32_31 = arith.constant 1 : i32
    %68 = tpu.dynamic_rotate %67 by %c1_i32_31 dim 1 : vector<16x256xf32>, i32 -> vector<16x256xf32>
    %c241_i32_32 = arith.constant 241 : i32
    %69 = tpu.dynamic_rotate %67 by %c241_i32_32 dim 1 : vector<16x256xf32>, i32 -> vector<16x256xf32>
    %c0_i32_33 = arith.constant 0 : i32
    %70 = vector.broadcast %c0_i32_33 : i32 to vector<1x256xi32>
    %71 = arith.cmpi ne, %16, %70 : vector<1x256xi32>
    %72 = vector.shape_cast %71 : vector<1x256xi1> to vector<1x256xi1>
    %73 = vector.broadcast %72 : vector<1x256xi1> to vector<16x256xi1>
    %74 = arith.select %73, %68, %69 : vector<16x256xi1>, vector<16x256xf32>
    %c255_i32_34 = arith.constant 255 : i32
    %75 = tpu.dynamic_rotate %67 by %c255_i32_34 dim 1 : vector<16x256xf32>, i32 -> vector<16x256xf32>
    %c15_i32_35 = arith.constant 15 : i32
    %76 = tpu.dynamic_rotate %67 by %c15_i32_35 dim 1 : vector<16x256xf32>, i32 -> vector<16x256xf32>
    %c15_i32_36 = arith.constant 15 : i32
    %77 = vector.broadcast %c15_i32_36 : i32 to vector<1x256xi32>
    %78 = arith.cmpi ne, %16, %77 : vector<1x256xi32>
    %79 = vector.shape_cast %78 : vector<1x256xi1> to vector<1x256xi1>
    %80 = vector.broadcast %79 : vector<1x256xi1> to vector<16x256xi1>
    %81 = arith.select %80, %75, %76 : vector<16x256xi1>, vector<16x256xf32>
    %c16_i32_37 = arith.constant 16 : i32
    %82 = tpu.dynamic_rotate %74 by %c16_i32_37 dim 1 : vector<16x256xf32>, i32 -> vector<16x256xf32>
    %83 = arith.truncf %82 : vector<16x256xf32> to vector<16x256xbf16>
    %c144 = arith.constant 144 : index
    %c0_38 = arith.constant 0 : index
    %84 = vector.load %arg13[%c144, %c0_38] : memref<720x256xbf16, #tpu.memory_space<vmem>>, vector<16x256xbf16>
    tpu.vector_store %arg13[%c144, %c0_38], %83 {strides = array<i32>} : memref<720x256xbf16, #tpu.memory_space<vmem>>, vector<16x256xbf16>,
    %c16_i32_39 = arith.constant 16 : i32
    %85 = tpu.dynamic_rotate %67 by %c16_i32_39 dim 1 : vector<16x256xf32>, i32 -> vector<16x256xf32>
    %86 = arith.truncf %85 : vector<16x256xf32> to vector<16x256xbf16>
    %c160 = arith.constant 160 : index
    %c0_40 = arith.constant 0 : index
    %87 = vector.load %arg13[%c160, %c0_40] : memref<720x256xbf16, #tpu.memory_space<vmem>>, vector<16x256xbf16>
    tpu.vector_store %arg13[%c160, %c0_40], %86 {strides = array<i32>} : memref<720x256xbf16, #tpu.memory_space<vmem>>, vector<16x256xbf16>,
    %c16_i32_41 = arith.constant 16 : i32
    %88 = tpu.dynamic_rotate %81 by %c16_i32_41 dim 1 : vector<16x256xf32>, i32 -> vector<16x256xf32>
    %89 = arith.truncf %88 : vector<16x256xf32> to vector<16x256xbf16>
    %c176 = arith.constant 176 : index
    %c0_42 = arith.constant 0 : index
    %90 = vector.load %arg13[%c176, %c0_42] : memref<720x256xbf16, #tpu.memory_space<vmem>>, vector<16x256xbf16>
    tpu.vector_store %arg13[%c176, %c0_42], %89 {strides = array<i32>} : memref<720x256xbf16, #tpu.memory_space<vmem>>, vector<16x256xbf16>,
    %91 = arith.truncf %74 : vector<16x256xf32> to vector<16x256xbf16>
    %c192 = arith.constant 192 : index
    %c0_43 = arith.constant 0 : index
    %92 = vector.load %arg13[%c192, %c0_43] : memref<720x256xbf16, #tpu.memory_space<vmem>>, vector<16x256xbf16>
    tpu.vector_store %arg13[%c192, %c0_43], %91 {strides = array<i32>} : memref<720x256xbf16, #tpu.memory_space<vmem>>, vector<16x256xbf16>,
    %93 = arith.truncf %67 : vector<16x256xf32> to vector<16x256xbf16>
    %c208 = arith.constant 208 : index
    %c0_44 = arith.constant 0 : index
    %94 = vector.load %arg13[%c208, %c0_44] : memref<720x256xbf16, #tpu.memory_space<vmem>>, vector<16x256xbf16>
    tpu.vector_store %arg13[%c208, %c0_44], %93 {strides = array<i32>} : memref<720x256xbf16, #tpu.memory_space<vmem>>, vector<16x256xbf16>,
    %95 = arith.truncf %81 : vector<16x256xf32> to vector<16x256xbf16>
    %c224 = arith.constant 224 : index
    %c0_45 = arith.constant 0 : index
    %96 = vector.load %arg13[%c224, %c0_45] : memref<720x256xbf16, #tpu.memory_space<vmem>>, vector<16x256xbf16>
    tpu.vector_store %arg13[%c224, %c0_45], %95 {strides = array<i32>} : memref<720x256xbf16, #tpu.memory_space<vmem>>, vector<16x256xbf16>,
    %c240_i32_46 = arith.constant 240 : i32
    %97 = tpu.dynamic_rotate %74 by %c240_i32_46 dim 1 : vector<16x256xf32>, i32 -> vector<16x256xf32>
    %98 = arith.truncf %97 : vector<16x256xf32> to vector<16x256xbf16>
    %c240 = arith.constant 240 : index
    %c0_47 = arith.constant 0 : index
    %99 = vector.load %arg13[%c240, %c0_47] : memref<720x256xbf16, #tpu.memory_space<vmem>>, vector<16x256xbf16>
    tpu.vector_store %arg13[%c240, %c0_47], %98 {strides = array<i32>} : memref<720x256xbf16, #tpu.memory_space<vmem>>, vector<16x256xbf16>,
    %c240_i32_48 = arith.constant 240 : i32
    %100 = tpu.dynamic_rotate %67 by %c240_i32_48 dim 1 : vector<16x256xf32>, i32 -> vector<16x256xf32>
    %101 = arith.truncf %100 : vector<16x256xf32> to vector<16x256xbf16>
    %c256 = arith.constant 256 : index
    %c0_49 = arith.constant 0 : index
    %102 = vector.load %arg13[%c256, %c0_49] : memref<720x256xbf16, #tpu.memory_space<vmem>>, vector<16x256xbf16>
    tpu.vector_store %arg13[%c256, %c0_49], %101 {strides = array<i32>} : memref<720x256xbf16, #tpu.memory_space<vmem>>, vector<16x256xbf16>,
    %c240_i32_50 = arith.constant 240 : i32
    %103 = tpu.dynamic_rotate %81 by %c240_i32_50 dim 1 : vector<16x256xf32>, i32 -> vector<16x256xf32>
    %104 = arith.truncf %103 : vector<16x256xf32> to vector<16x256xbf16>
    %c272 = arith.constant 272 : index
    %c0_51 = arith.constant 0 : index
    %105 = vector.load %arg13[%c272, %c0_51] : memref<720x256xbf16, #tpu.memory_space<vmem>>, vector<16x256xbf16>
    tpu.vector_store %arg13[%c272, %c0_51], %104 {strides = array<i32>} : memref<720x256xbf16, #tpu.memory_space<vmem>>, vector<16x256xbf16>,
    %c0_52 = arith.constant 0 : index
    %c0_53 = arith.constant 0 : index
    %106 = vector.load %arg4[%c0_52, %c0_53] : memref<16x288xbf16, #tpu.memory_space<vmem>>, vector<16x288xbf16>
    %c0_54 = arith.constant 0 : index
    %c0_55 = arith.constant 0 : index
    %107 = vector.load %arg13[%c0_54, %c0_55] : memref<720x256xbf16, #tpu.memory_space<vmem>>, vector<288x256xbf16>
    %cst_56 = arith.constant dense<0.000000e+00> : vector<16x256xf32>
    %108 = tpu.matmul %106, %107, %cst_56 {dimension_numbers = #tpu.dot_dimension_numbers<[1], [0], [0], [1], [0, 0, 1, 1], [], []>} : vector<16x288xbf16>, vector<288x256xbf16>, vector<16x256xf32> -> vector<16x256xf32>
    %c0_57 = arith.constant 0 : index
    %c0_58 = arith.constant 0 : index
    %109 = vector.load %arg5[%c0_57, %c0_58] : memref<16x1xf32, #tpu.memory_space<vmem>>, vector<16x1xf32>
    %110 = vector.broadcast %109 : vector<16x1xf32> to vector<16x256xf32>
    %111 = arith.addf %108, %110 : vector<16x256xf32>
    %cst_59 = arith.constant 0.000000e+00 : f32
    %112 = vector.broadcast %cst_59 : f32 to vector<16x256xf32>
    %113 = arith.cmpf ogt, %111, %112 : vector<16x256xf32>
    %cst_60 = arith.constant 2.000000e-01 : f32
    %114 = vector.broadcast %cst_60 : f32 to vector<16x256xf32>
    %115 = arith.mulf %114, %111 : vector<16x256xf32>
    %116 = arith.select %113, %111, %115 : vector<16x256xi1>, vector<16x256xf32>
    %c1_i32_61 = arith.constant 1 : i32
    %117 = tpu.dynamic_rotate %116 by %c1_i32_61 dim 1 : vector<16x256xf32>, i32 -> vector<16x256xf32>
    %c241_i32_62 = arith.constant 241 : i32
    %118 = tpu.dynamic_rotate %116 by %c241_i32_62 dim 1 : vector<16x256xf32>, i32 -> vector<16x256xf32>
    %c0_i32_63 = arith.constant 0 : i32
    %119 = vector.broadcast %c0_i32_63 : i32 to vector<1x256xi32>
    %120 = arith.cmpi ne, %16, %119 : vector<1x256xi32>
    %121 = vector.shape_cast %120 : vector<1x256xi1> to vector<1x256xi1>
    %122 = vector.broadcast %121 : vector<1x256xi1> to vector<16x256xi1>
    %123 = arith.select %122, %117, %118 : vector<16x256xi1>, vector<16x256xf32>
    %c255_i32_64 = arith.constant 255 : i32
    %124 = tpu.dynamic_rotate %116 by %c255_i32_64 dim 1 : vector<16x256xf32>, i32 -> vector<16x256xf32>
    %c15_i32_65 = arith.constant 15 : i32
    %125 = tpu.dynamic_rotate %116 by %c15_i32_65 dim 1 : vector<16x256xf32>, i32 -> vector<16x256xf32>
    %c15_i32_66 = arith.constant 15 : i32
    %126 = vector.broadcast %c15_i32_66 : i32 to vector<1x256xi32>
    %127 = arith.cmpi ne, %16, %126 : vector<1x256xi32>
    %128 = vector.shape_cast %127 : vector<1x256xi1> to vector<1x256xi1>
    %129 = vector.broadcast %128 : vector<1x256xi1> to vector<16x256xi1>
    %130 = arith.select %129, %124, %125 : vector<16x256xi1>, vector<16x256xf32>
    %c16_i32_67 = arith.constant 16 : i32
    %131 = tpu.dynamic_rotate %123 by %c16_i32_67 dim 1 : vector<16x256xf32>, i32 -> vector<16x256xf32>
    %132 = arith.truncf %131 : vector<16x256xf32> to vector<16x256xbf16>
    %c288 = arith.constant 288 : index
    %c0_68 = arith.constant 0 : index
    %133 = vector.load %arg13[%c288, %c0_68] : memref<720x256xbf16, #tpu.memory_space<vmem>>, vector<16x256xbf16>
    tpu.vector_store %arg13[%c288, %c0_68], %132 {strides = array<i32>} : memref<720x256xbf16, #tpu.memory_space<vmem>>, vector<16x256xbf16>,
    %c16_i32_69 = arith.constant 16 : i32
    %134 = tpu.dynamic_rotate %116 by %c16_i32_69 dim 1 : vector<16x256xf32>, i32 -> vector<16x256xf32>
    %135 = arith.truncf %134 : vector<16x256xf32> to vector<16x256xbf16>
    %c304 = arith.constant 304 : index
    %c0_70 = arith.constant 0 : index
    %136 = vector.load %arg13[%c304, %c0_70] : memref<720x256xbf16, #tpu.memory_space<vmem>>, vector<16x256xbf16>
    tpu.vector_store %arg13[%c304, %c0_70], %135 {strides = array<i32>} : memref<720x256xbf16, #tpu.memory_space<vmem>>, vector<16x256xbf16>,
    %c16_i32_71 = arith.constant 16 : i32
    %137 = tpu.dynamic_rotate %130 by %c16_i32_71 dim 1 : vector<16x256xf32>, i32 -> vector<16x256xf32>
    %138 = arith.truncf %137 : vector<16x256xf32> to vector<16x256xbf16>
    %c320 = arith.constant 320 : index
    %c0_72 = arith.constant 0 : index
    %139 = vector.load %arg13[%c320, %c0_72] : memref<720x256xbf16, #tpu.memory_space<vmem>>, vector<16x256xbf16>
    tpu.vector_store %arg13[%c320, %c0_72], %138 {strides = array<i32>} : memref<720x256xbf16, #tpu.memory_space<vmem>>, vector<16x256xbf16>,
    %140 = arith.truncf %123 : vector<16x256xf32> to vector<16x256xbf16>
    %c336 = arith.constant 336 : index
    %c0_73 = arith.constant 0 : index
    %141 = vector.load %arg13[%c336, %c0_73] : memref<720x256xbf16, #tpu.memory_space<vmem>>, vector<16x256xbf16>
    tpu.vector_store %arg13[%c336, %c0_73], %140 {strides = array<i32>} : memref<720x256xbf16, #tpu.memory_space<vmem>>, vector<16x256xbf16>,
    %142 = arith.truncf %116 : vector<16x256xf32> to vector<16x256xbf16>
    %c352 = arith.constant 352 : index
    %c0_74 = arith.constant 0 : index
    %143 = vector.load %arg13[%c352, %c0_74] : memref<720x256xbf16, #tpu.memory_space<vmem>>, vector<16x256xbf16>
    tpu.vector_store %arg13[%c352, %c0_74], %142 {strides = array<i32>} : memref<720x256xbf16, #tpu.memory_space<vmem>>, vector<16x256xbf16>,
    %144 = arith.truncf %130 : vector<16x256xf32> to vector<16x256xbf16>
    %c368 = arith.constant 368 : index
    %c0_75 = arith.constant 0 : index
    %145 = vector.load %arg13[%c368, %c0_75] : memref<720x256xbf16, #tpu.memory_space<vmem>>, vector<16x256xbf16>
    tpu.vector_store %arg13[%c368, %c0_75], %144 {strides = array<i32>} : memref<720x256xbf16, #tpu.memory_space<vmem>>, vector<16x256xbf16>,
    %c240_i32_76 = arith.constant 240 : i32
    %146 = tpu.dynamic_rotate %123 by %c240_i32_76 dim 1 : vector<16x256xf32>, i32 -> vector<16x256xf32>
    %147 = arith.truncf %146 : vector<16x256xf32> to vector<16x256xbf16>
    %c384 = arith.constant 384 : index
    %c0_77 = arith.constant 0 : index
    %148 = vector.load %arg13[%c384, %c0_77] : memref<720x256xbf16, #tpu.memory_space<vmem>>, vector<16x256xbf16>
    tpu.vector_store %arg13[%c384, %c0_77], %147 {strides = array<i32>} : memref<720x256xbf16, #tpu.memory_space<vmem>>, vector<16x256xbf16>,
    %c240_i32_78 = arith.constant 240 : i32
    %149 = tpu.dynamic_rotate %116 by %c240_i32_78 dim 1 : vector<16x256xf32>, i32 -> vector<16x256xf32>
    %150 = arith.truncf %149 : vector<16x256xf32> to vector<16x256xbf16>
    %c400 = arith.constant 400 : index
    %c0_79 = arith.constant 0 : index
    %151 = vector.load %arg13[%c400, %c0_79] : memref<720x256xbf16, #tpu.memory_space<vmem>>, vector<16x256xbf16>
    tpu.vector_store %arg13[%c400, %c0_79], %150 {strides = array<i32>} : memref<720x256xbf16, #tpu.memory_space<vmem>>, vector<16x256xbf16>,
    %c240_i32_80 = arith.constant 240 : i32
    %152 = tpu.dynamic_rotate %130 by %c240_i32_80 dim 1 : vector<16x256xf32>, i32 -> vector<16x256xf32>
    %153 = arith.truncf %152 : vector<16x256xf32> to vector<16x256xbf16>
    %c416 = arith.constant 416 : index
    %c0_81 = arith.constant 0 : index
    %154 = vector.load %arg13[%c416, %c0_81] : memref<720x256xbf16, #tpu.memory_space<vmem>>, vector<16x256xbf16>
    tpu.vector_store %arg13[%c416, %c0_81], %153 {strides = array<i32>} : memref<720x256xbf16, #tpu.memory_space<vmem>>, vector<16x256xbf16>,
    %c0_82 = arith.constant 0 : index
    %c0_83 = arith.constant 0 : index
    %155 = vector.load %arg6[%c0_82, %c0_83] : memref<16x432xbf16, #tpu.memory_space<vmem>>, vector<16x432xbf16>
    %c0_84 = arith.constant 0 : index
    %c0_85 = arith.constant 0 : index
    %156 = vector.load %arg13[%c0_84, %c0_85] : memref<720x256xbf16, #tpu.memory_space<vmem>>, vector<432x256xbf16>
    %cst_86 = arith.constant dense<0.000000e+00> : vector<16x256xf32>
    %157 = tpu.matmul %155, %156, %cst_86 {dimension_numbers = #tpu.dot_dimension_numbers<[1], [0], [0], [1], [0, 0, 1, 1], [], []>} : vector<16x432xbf16>, vector<432x256xbf16>, vector<16x256xf32> -> vector<16x256xf32>
    %c0_87 = arith.constant 0 : index
    %c0_88 = arith.constant 0 : index
    %158 = vector.load %arg7[%c0_87, %c0_88] : memref<16x1xf32, #tpu.memory_space<vmem>>, vector<16x1xf32>
    %159 = vector.broadcast %158 : vector<16x1xf32> to vector<16x256xf32>
    %160 = arith.addf %157, %159 : vector<16x256xf32>
    %cst_89 = arith.constant 0.000000e+00 : f32
    %161 = vector.broadcast %cst_89 : f32 to vector<16x256xf32>
    %162 = arith.cmpf ogt, %160, %161 : vector<16x256xf32>
    %cst_90 = arith.constant 2.000000e-01 : f32
    %163 = vector.broadcast %cst_90 : f32 to vector<16x256xf32>
    %164 = arith.mulf %163, %160 : vector<16x256xf32>
    %165 = arith.select %162, %160, %164 : vector<16x256xi1>, vector<16x256xf32>
    %c1_i32_91 = arith.constant 1 : i32
    %166 = tpu.dynamic_rotate %165 by %c1_i32_91 dim 1 : vector<16x256xf32>, i32 -> vector<16x256xf32>
    %c241_i32_92 = arith.constant 241 : i32
    %167 = tpu.dynamic_rotate %165 by %c241_i32_92 dim 1 : vector<16x256xf32>, i32 -> vector<16x256xf32>
    %c0_i32_93 = arith.constant 0 : i32
    %168 = vector.broadcast %c0_i32_93 : i32 to vector<1x256xi32>
    %169 = arith.cmpi ne, %16, %168 : vector<1x256xi32>
    %170 = vector.shape_cast %169 : vector<1x256xi1> to vector<1x256xi1>
    %171 = vector.broadcast %170 : vector<1x256xi1> to vector<16x256xi1>
    %172 = arith.select %171, %166, %167 : vector<16x256xi1>, vector<16x256xf32>
    %c255_i32_94 = arith.constant 255 : i32
    %173 = tpu.dynamic_rotate %165 by %c255_i32_94 dim 1 : vector<16x256xf32>, i32 -> vector<16x256xf32>
    %c15_i32_95 = arith.constant 15 : i32
    %174 = tpu.dynamic_rotate %165 by %c15_i32_95 dim 1 : vector<16x256xf32>, i32 -> vector<16x256xf32>
    %c15_i32_96 = arith.constant 15 : i32
    %175 = vector.broadcast %c15_i32_96 : i32 to vector<1x256xi32>
    %176 = arith.cmpi ne, %16, %175 : vector<1x256xi32>
    %177 = vector.shape_cast %176 : vector<1x256xi1> to vector<1x256xi1>
    %178 = vector.broadcast %177 : vector<1x256xi1> to vector<16x256xi1>
    %179 = arith.select %178, %173, %174 : vector<16x256xi1>, vector<16x256xf32>
    %c16_i32_97 = arith.constant 16 : i32
    %180 = tpu.dynamic_rotate %172 by %c16_i32_97 dim 1 : vector<16x256xf32>, i32 -> vector<16x256xf32>
    %181 = arith.truncf %180 : vector<16x256xf32> to vector<16x256xbf16>
    %c432 = arith.constant 432 : index
    %c0_98 = arith.constant 0 : index
    %182 = vector.load %arg13[%c432, %c0_98] : memref<720x256xbf16, #tpu.memory_space<vmem>>, vector<16x256xbf16>
    tpu.vector_store %arg13[%c432, %c0_98], %181 {strides = array<i32>} : memref<720x256xbf16, #tpu.memory_space<vmem>>, vector<16x256xbf16>,
    %c16_i32_99 = arith.constant 16 : i32
    %183 = tpu.dynamic_rotate %165 by %c16_i32_99 dim 1 : vector<16x256xf32>, i32 -> vector<16x256xf32>
    %184 = arith.truncf %183 : vector<16x256xf32> to vector<16x256xbf16>
    %c448 = arith.constant 448 : index
    %c0_100 = arith.constant 0 : index
    %185 = vector.load %arg13[%c448, %c0_100] : memref<720x256xbf16, #tpu.memory_space<vmem>>, vector<16x256xbf16>
    tpu.vector_store %arg13[%c448, %c0_100], %184 {strides = array<i32>} : memref<720x256xbf16, #tpu.memory_space<vmem>>, vector<16x256xbf16>,
    %c16_i32_101 = arith.constant 16 : i32
    %186 = tpu.dynamic_rotate %179 by %c16_i32_101 dim 1 : vector<16x256xf32>, i32 -> vector<16x256xf32>
    %187 = arith.truncf %186 : vector<16x256xf32> to vector<16x256xbf16>
    %c464 = arith.constant 464 : index
    %c0_102 = arith.constant 0 : index
    %188 = vector.load %arg13[%c464, %c0_102] : memref<720x256xbf16, #tpu.memory_space<vmem>>, vector<16x256xbf16>
    tpu.vector_store %arg13[%c464, %c0_102], %187 {strides = array<i32>} : memref<720x256xbf16, #tpu.memory_space<vmem>>, vector<16x256xbf16>,
    %189 = arith.truncf %172 : vector<16x256xf32> to vector<16x256xbf16>
    %c480 = arith.constant 480 : index
    %c0_103 = arith.constant 0 : index
    %190 = vector.load %arg13[%c480, %c0_103] : memref<720x256xbf16, #tpu.memory_space<vmem>>, vector<16x256xbf16>
    tpu.vector_store %arg13[%c480, %c0_103], %189 {strides = array<i32>} : memref<720x256xbf16, #tpu.memory_space<vmem>>, vector<16x256xbf16>,
    %191 = arith.truncf %165 : vector<16x256xf32> to vector<16x256xbf16>
    %c496 = arith.constant 496 : index
    %c0_104 = arith.constant 0 : index
    %192 = vector.load %arg13[%c496, %c0_104] : memref<720x256xbf16, #tpu.memory_space<vmem>>, vector<16x256xbf16>
    tpu.vector_store %arg13[%c496, %c0_104], %191 {strides = array<i32>} : memref<720x256xbf16, #tpu.memory_space<vmem>>, vector<16x256xbf16>,
    %193 = arith.truncf %179 : vector<16x256xf32> to vector<16x256xbf16>
    %c512 = arith.constant 512 : index
    %c0_105 = arith.constant 0 : index
    %194 = vector.load %arg13[%c512, %c0_105] : memref<720x256xbf16, #tpu.memory_space<vmem>>, vector<16x256xbf16>
    tpu.vector_store %arg13[%c512, %c0_105], %193 {strides = array<i32>} : memref<720x256xbf16, #tpu.memory_space<vmem>>, vector<16x256xbf16>,
    %c240_i32_106 = arith.constant 240 : i32
    %195 = tpu.dynamic_rotate %172 by %c240_i32_106 dim 1 : vector<16x256xf32>, i32 -> vector<16x256xf32>
    %196 = arith.truncf %195 : vector<16x256xf32> to vector<16x256xbf16>
    %c528 = arith.constant 528 : index
    %c0_107 = arith.constant 0 : index
    %197 = vector.load %arg13[%c528, %c0_107] : memref<720x256xbf16, #tpu.memory_space<vmem>>, vector<16x256xbf16>
    tpu.vector_store %arg13[%c528, %c0_107], %196 {strides = array<i32>} : memref<720x256xbf16, #tpu.memory_space<vmem>>, vector<16x256xbf16>,
    %c240_i32_108 = arith.constant 240 : i32
    %198 = tpu.dynamic_rotate %165 by %c240_i32_108 dim 1 : vector<16x256xf32>, i32 -> vector<16x256xf32>
    %199 = arith.truncf %198 : vector<16x256xf32> to vector<16x256xbf16>
    %c544 = arith.constant 544 : index
    %c0_109 = arith.constant 0 : index
    %200 = vector.load %arg13[%c544, %c0_109] : memref<720x256xbf16, #tpu.memory_space<vmem>>, vector<16x256xbf16>
    tpu.vector_store %arg13[%c544, %c0_109], %199 {strides = array<i32>} : memref<720x256xbf16, #tpu.memory_space<vmem>>, vector<16x256xbf16>,
    %c240_i32_110 = arith.constant 240 : i32
    %201 = tpu.dynamic_rotate %179 by %c240_i32_110 dim 1 : vector<16x256xf32>, i32 -> vector<16x256xf32>
    %202 = arith.truncf %201 : vector<16x256xf32> to vector<16x256xbf16>
    %c560 = arith.constant 560 : index
    %c0_111 = arith.constant 0 : index
    %203 = vector.load %arg13[%c560, %c0_111] : memref<720x256xbf16, #tpu.memory_space<vmem>>, vector<16x256xbf16>
    tpu.vector_store %arg13[%c560, %c0_111], %202 {strides = array<i32>} : memref<720x256xbf16, #tpu.memory_space<vmem>>, vector<16x256xbf16>,
    %c0_112 = arith.constant 0 : index
    %c0_113 = arith.constant 0 : index
    %204 = vector.load %arg8[%c0_112, %c0_113] : memref<16x576xbf16, #tpu.memory_space<vmem>>, vector<16x576xbf16>
    %c0_114 = arith.constant 0 : index
    %c0_115 = arith.constant 0 : index
    %205 = vector.load %arg13[%c0_114, %c0_115] : memref<720x256xbf16, #tpu.memory_space<vmem>>, vector<576x256xbf16>
    %cst_116 = arith.constant dense<0.000000e+00> : vector<16x256xf32>
    %206 = tpu.matmul %204, %205, %cst_116 {dimension_numbers = #tpu.dot_dimension_numbers<[1], [0], [0], [1], [0, 0, 1, 1], [], []>} : vector<16x576xbf16>, vector<576x256xbf16>, vector<16x256xf32> -> vector<16x256xf32>
    %c0_117 = arith.constant 0 : index
    %c0_118 = arith.constant 0 : index
    %207 = vector.load %arg9[%c0_117, %c0_118] : memref<16x1xf32, #tpu.memory_space<vmem>>, vector<16x1xf32>
    %208 = vector.broadcast %207 : vector<16x1xf32> to vector<16x256xf32>
    %209 = arith.addf %206, %208 : vector<16x256xf32>
    %cst_119 = arith.constant 0.000000e+00 : f32
    %210 = vector.broadcast %cst_119 : f32 to vector<16x256xf32>
    %211 = arith.cmpf ogt, %209, %210 : vector<16x256xf32>
    %cst_120 = arith.constant 2.000000e-01 : f32
    %212 = vector.broadcast %cst_120 : f32 to vector<16x256xf32>
    %213 = arith.mulf %212, %209 : vector<16x256xf32>
    %214 = arith.select %211, %209, %213 : vector<16x256xi1>, vector<16x256xf32>
    %c1_i32_121 = arith.constant 1 : i32
    %215 = tpu.dynamic_rotate %214 by %c1_i32_121 dim 1 : vector<16x256xf32>, i32 -> vector<16x256xf32>
    %c241_i32_122 = arith.constant 241 : i32
    %216 = tpu.dynamic_rotate %214 by %c241_i32_122 dim 1 : vector<16x256xf32>, i32 -> vector<16x256xf32>
    %c0_i32_123 = arith.constant 0 : i32
    %217 = vector.broadcast %c0_i32_123 : i32 to vector<1x256xi32>
    %218 = arith.cmpi ne, %16, %217 : vector<1x256xi32>
    %219 = vector.shape_cast %218 : vector<1x256xi1> to vector<1x256xi1>
    %220 = vector.broadcast %219 : vector<1x256xi1> to vector<16x256xi1>
    %221 = arith.select %220, %215, %216 : vector<16x256xi1>, vector<16x256xf32>
    %c255_i32_124 = arith.constant 255 : i32
    %222 = tpu.dynamic_rotate %214 by %c255_i32_124 dim 1 : vector<16x256xf32>, i32 -> vector<16x256xf32>
    %c15_i32_125 = arith.constant 15 : i32
    %223 = tpu.dynamic_rotate %214 by %c15_i32_125 dim 1 : vector<16x256xf32>, i32 -> vector<16x256xf32>
    %c15_i32_126 = arith.constant 15 : i32
    %224 = vector.broadcast %c15_i32_126 : i32 to vector<1x256xi32>
    %225 = arith.cmpi ne, %16, %224 : vector<1x256xi32>
    %226 = vector.shape_cast %225 : vector<1x256xi1> to vector<1x256xi1>
    %227 = vector.broadcast %226 : vector<1x256xi1> to vector<16x256xi1>
    %228 = arith.select %227, %222, %223 : vector<16x256xi1>, vector<16x256xf32>
    %c16_i32_127 = arith.constant 16 : i32
    %229 = tpu.dynamic_rotate %221 by %c16_i32_127 dim 1 : vector<16x256xf32>, i32 -> vector<16x256xf32>
    %230 = arith.truncf %229 : vector<16x256xf32> to vector<16x256xbf16>
    %c576 = arith.constant 576 : index
    %c0_128 = arith.constant 0 : index
    %231 = vector.load %arg13[%c576, %c0_128] : memref<720x256xbf16, #tpu.memory_space<vmem>>, vector<16x256xbf16>
    tpu.vector_store %arg13[%c576, %c0_128], %230 {strides = array<i32>} : memref<720x256xbf16, #tpu.memory_space<vmem>>, vector<16x256xbf16>,
    %c16_i32_129 = arith.constant 16 : i32
    %232 = tpu.dynamic_rotate %214 by %c16_i32_129 dim 1 : vector<16x256xf32>, i32 -> vector<16x256xf32>
    %233 = arith.truncf %232 : vector<16x256xf32> to vector<16x256xbf16>
    %c592 = arith.constant 592 : index
    %c0_130 = arith.constant 0 : index
    %234 = vector.load %arg13[%c592, %c0_130] : memref<720x256xbf16, #tpu.memory_space<vmem>>, vector<16x256xbf16>
    tpu.vector_store %arg13[%c592, %c0_130], %233 {strides = array<i32>} : memref<720x256xbf16, #tpu.memory_space<vmem>>, vector<16x256xbf16>,
    %c16_i32_131 = arith.constant 16 : i32
    %235 = tpu.dynamic_rotate %228 by %c16_i32_131 dim 1 : vector<16x256xf32>, i32 -> vector<16x256xf32>
    %236 = arith.truncf %235 : vector<16x256xf32> to vector<16x256xbf16>
    %c608 = arith.constant 608 : index
    %c0_132 = arith.constant 0 : index
    %237 = vector.load %arg13[%c608, %c0_132] : memref<720x256xbf16, #tpu.memory_space<vmem>>, vector<16x256xbf16>
    tpu.vector_store %arg13[%c608, %c0_132], %236 {strides = array<i32>} : memref<720x256xbf16, #tpu.memory_space<vmem>>, vector<16x256xbf16>,
    %238 = arith.truncf %221 : vector<16x256xf32> to vector<16x256xbf16>
    %c624 = arith.constant 624 : index
    %c0_133 = arith.constant 0 : index
    %239 = vector.load %arg13[%c624, %c0_133] : memref<720x256xbf16, #tpu.memory_space<vmem>>, vector<16x256xbf16>
    tpu.vector_store %arg13[%c624, %c0_133], %238 {strides = array<i32>} : memref<720x256xbf16, #tpu.memory_space<vmem>>, vector<16x256xbf16>,
    %240 = arith.truncf %214 : vector<16x256xf32> to vector<16x256xbf16>
    %c640 = arith.constant 640 : index
    %c0_134 = arith.constant 0 : index
    %241 = vector.load %arg13[%c640, %c0_134] : memref<720x256xbf16, #tpu.memory_space<vmem>>, vector<16x256xbf16>
    tpu.vector_store %arg13[%c640, %c0_134], %240 {strides = array<i32>} : memref<720x256xbf16, #tpu.memory_space<vmem>>, vector<16x256xbf16>,
    %242 = arith.truncf %228 : vector<16x256xf32> to vector<16x256xbf16>
    %c656 = arith.constant 656 : index
    %c0_135 = arith.constant 0 : index
    %243 = vector.load %arg13[%c656, %c0_135] : memref<720x256xbf16, #tpu.memory_space<vmem>>, vector<16x256xbf16>
    tpu.vector_store %arg13[%c656, %c0_135], %242 {strides = array<i32>} : memref<720x256xbf16, #tpu.memory_space<vmem>>, vector<16x256xbf16>,
    %c240_i32_136 = arith.constant 240 : i32
    %244 = tpu.dynamic_rotate %221 by %c240_i32_136 dim 1 : vector<16x256xf32>, i32 -> vector<16x256xf32>
    %245 = arith.truncf %244 : vector<16x256xf32> to vector<16x256xbf16>
    %c672 = arith.constant 672 : index
    %c0_137 = arith.constant 0 : index
    %246 = vector.load %arg13[%c672, %c0_137] : memref<720x256xbf16, #tpu.memory_space<vmem>>, vector<16x256xbf16>
    tpu.vector_store %arg13[%c672, %c0_137], %245 {strides = array<i32>} : memref<720x256xbf16, #tpu.memory_space<vmem>>, vector<16x256xbf16>,
    %c240_i32_138 = arith.constant 240 : i32
    %247 = tpu.dynamic_rotate %214 by %c240_i32_138 dim 1 : vector<16x256xf32>, i32 -> vector<16x256xf32>
    %248 = arith.truncf %247 : vector<16x256xf32> to vector<16x256xbf16>
    %c688 = arith.constant 688 : index
    %c0_139 = arith.constant 0 : index
    %249 = vector.load %arg13[%c688, %c0_139] : memref<720x256xbf16, #tpu.memory_space<vmem>>, vector<16x256xbf16>
    tpu.vector_store %arg13[%c688, %c0_139], %248 {strides = array<i32>} : memref<720x256xbf16, #tpu.memory_space<vmem>>, vector<16x256xbf16>,
    %c240_i32_140 = arith.constant 240 : i32
    %250 = tpu.dynamic_rotate %228 by %c240_i32_140 dim 1 : vector<16x256xf32>, i32 -> vector<16x256xf32>
    %251 = arith.truncf %250 : vector<16x256xf32> to vector<16x256xbf16>
    %c704 = arith.constant 704 : index
    %c0_141 = arith.constant 0 : index
    %252 = vector.load %arg13[%c704, %c0_141] : memref<720x256xbf16, #tpu.memory_space<vmem>>, vector<16x256xbf16>
    tpu.vector_store %arg13[%c704, %c0_141], %251 {strides = array<i32>} : memref<720x256xbf16, #tpu.memory_space<vmem>>, vector<16x256xbf16>,
    %c0_142 = arith.constant 0 : index
    %c0_143 = arith.constant 0 : index
    %253 = vector.load %arg10[%c0_142, %c0_143] : memref<16x720xbf16, #tpu.memory_space<vmem>>, vector<16x720xbf16>
    %c0_144 = arith.constant 0 : index
    %c0_145 = arith.constant 0 : index
    %254 = vector.load %arg13[%c0_144, %c0_145] : memref<720x256xbf16, #tpu.memory_space<vmem>>, vector<720x256xbf16>
    %cst_146 = arith.constant dense<0.000000e+00> : vector<16x256xf32>
    %255 = tpu.matmul %253, %254, %cst_146 {dimension_numbers = #tpu.dot_dimension_numbers<[1], [0], [0], [1], [0, 0, 1, 1], [], []>} : vector<16x720xbf16>, vector<720x256xbf16>, vector<16x256xf32> -> vector<16x256xf32>
    %c0_147 = arith.constant 0 : index
    %c0_148 = arith.constant 0 : index
    %256 = vector.load %arg11[%c0_147, %c0_148] : memref<16x1xf32, #tpu.memory_space<vmem>>, vector<16x1xf32>
    %257 = vector.broadcast %256 : vector<16x1xf32> to vector<16x256xf32>
    %258 = arith.addf %255, %257 : vector<16x256xf32>
    %cst_149 = arith.constant 2.000000e-01 : f32
    %259 = vector.broadcast %cst_149 : f32 to vector<16x256xf32>
    %260 = arith.mulf %258, %259 : vector<16x256xf32>
    %261 = arith.addf %260, %18 : vector<16x256xf32>
    %262 = vector.shape_cast %261 : vector<16x256xf32> to vector<1x16x256xf32>
    %c0_150 = arith.constant 0 : index
    %c0_151 = arith.constant 0 : index
    %c0_152 = arith.constant 0 : index
    %263 = vector.load %arg12[%c0_150, %c0_151, %c0_152] : memref<1x16x256xf32, #tpu.memory_space<vmem>>, vector<1x16x256xf32>
    tpu.vector_store %arg12[%c0_150, %c0_151, %c0_152], %262 {strides = array<i32>} : memref<1x16x256xf32, #tpu.memory_space<vmem>>, vector<1x16x256xf32>,
    return
  }
  func.func @transform_0(%arg0: i32) -> (i32, i32, i32) {
    %c0_i32 = arith.constant 0 : i32
    %c0_i32_0 = arith.constant 0 : i32
    %c0_i32_1 = arith.constant 0 : i32
    return %arg0, %c0_i32, %c0_i32_0 : i32, i32, i32
  }
  func.func @transform_1(%arg0: i32) -> (i32, i32) {
    %c0_i32 = arith.constant 0 : i32
    %c0_i32_0 = arith.constant 0 : i32
    %c0_i32_1 = arith.constant 0 : i32
    return %c0_i32, %c0_i32_0 : i32, i32
  }
  func.func @transform_2(%arg0: i32) -> (i32, i32) {
    %c0_i32 = arith.constant 0 : i32
    %c0_i32_0 = arith.constant 0 : i32
    %c0_i32_1 = arith.constant 0 : i32
    return %c0_i32, %c0_i32_0 : i32, i32
  }
  func.func @transform_3(%arg0: i32) -> (i32, i32) {
    %c0_i32 = arith.constant 0 : i32
    %c0_i32_0 = arith.constant 0 : i32
    %c0_i32_1 = arith.constant 0 : i32
    return %c0_i32, %c0_i32_0 : i32, i32
  }
  func.func @transform_4(%arg0: i32) -> (i32, i32) {
    %c0_i32 = arith.constant 0 : i32
    %c0_i32_0 = arith.constant 0 : i32
    %c0_i32_1 = arith.constant 0 : i32
    return %c0_i32, %c0_i32_0 : i32, i32
  }
  func.func @transform_5(%arg0: i32) -> (i32, i32) {
    %c0_i32 = arith.constant 0 : i32
    %c0_i32_0 = arith.constant 0 : i32
    %c0_i32_1 = arith.constant 0 : i32
    return %c0_i32, %c0_i32_0 : i32, i32
  }
  func.func @transform_6(%arg0: i32) -> (i32, i32) {
    %c0_i32 = arith.constant 0 : i32
    %c0_i32_0 = arith.constant 0 : i32
    %c0_i32_1 = arith.constant 0 : i32
    return %c0_i32, %c0_i32_0 : i32, i32
  }
  func.func @transform_7(%arg0: i32) -> (i32, i32) {
    %c0_i32 = arith.constant 0 : i32
    %c0_i32_0 = arith.constant 0 : i32
    %c0_i32_1 = arith.constant 0 : i32
    return %c0_i32, %c0_i32_0 : i32, i32
  }
  func.func @transform_8(%arg0: i32) -> (i32, i32) {
    %c0_i32 = arith.constant 0 : i32
    %c0_i32_0 = arith.constant 0 : i32
    %c0_i32_1 = arith.constant 0 : i32
    return %c0_i32, %c0_i32_0 : i32, i32
  }
  func.func @transform_9(%arg0: i32) -> (i32, i32) {
    %c0_i32 = arith.constant 0 : i32
    %c0_i32_0 = arith.constant 0 : i32
    %c0_i32_1 = arith.constant 0 : i32
    return %c0_i32, %c0_i32_0 : i32, i32
  }
  func.func @transform_10(%arg0: i32) -> (i32, i32) {
    %c0_i32 = arith.constant 0 : i32
    %c0_i32_0 = arith.constant 0 : i32
    %c0_i32_1 = arith.constant 0 : i32
    return %c0_i32, %c0_i32_0 : i32, i32
  }
  func.func @transform_11(%arg0: i32) -> (i32, i32, i32) {
    %c0_i32 = arith.constant 0 : i32
    %c0_i32_0 = arith.constant 0 : i32
    %c0_i32_1 = arith.constant 0 : i32
    return %arg0, %c0_i32, %c0_i32_0 : i32, i32, i32
  }
}

</mosaic_0001>

<llo_original>
// kernel: residual_dense_block.1
$region0: #{residual_dense_block.1}
  #allocation0 [shape = 'u32[]', space=smem, size = 0x4, offset = 0x4, fixed_abs, tag = 'smem constant byte address 0x4 - core index']
  #allocation1 [shape = 'u32[144,128]{1,0:T(1,128)}', space=vmem, size = 0x12000, scoped, tag = 'internal scratch']
  #allocation2 [shape = 'bf16[720,256]{1,0:T(8,128)(2,1)}', space=vmem, size = 0x5a000, scoped, tag = 'scratch operand']
  %s0 = inlined_call_operand.vmem [shape: f32[2,16,256], index: 0, kind: input, shape index: {}]
  %s1 = inlined_call_operand.vmem [shape: bf16[16,144], index: 1, kind: input, shape index: {}]
  %s2 = inlined_call_operand.vmem [shape: f32[16,1], index: 2, kind: input, shape index: {}, may-alias: {2,4,6,8,10}]
  %s3 = inlined_call_operand.vmem [shape: bf16[16,288], index: 3, kind: input, shape index: {}]
  %s4 = inlined_call_operand.vmem [shape: f32[16,1], index: 4, kind: input, shape index: {}, may-alias: {2,4,6,8,10}]
  %s5 = inlined_call_operand.vmem [shape: bf16[16,432], index: 5, kind: input, shape index: {}]
  %s6 = inlined_call_operand.vmem [shape: f32[16,1], index: 6, kind: input, shape index: {}, may-alias: {2,4,6,8,10}]
  %s7 = inlined_call_operand.vmem [shape: bf16[16,576], index: 7, kind: input, shape index: {}]
  %s8 = inlined_call_operand.vmem [shape: f32[16,1], index: 8, kind: input, shape index: {}, may-alias: {2,4,6,8,10}]
  %s9 = inlined_call_operand.vmem [shape: bf16[16,720], index: 9, kind: input, shape index: {}]
  %s10 = inlined_call_operand.vmem [shape: f32[16,1], index: 10, kind: input, shape index: {}, may-alias: {2,4,6,8,10}]
  %s11 = inlined_call_operand.vmem [shape: f32[2,16,256], index: 11, kind: output, shape index: {}]
  %s12 = sld [smem:[#allocation0]]
  $region77: #{residual_dense_block.1} parent=0
    _
  %s14 = ssub.s32 1, %s12
  %s15 = scalar_select 0, %s14, %s12
  loop: start=0, step=1, limit=4
  $region2: #{residual_dense_block.1} parent=0 // loop_pre_header
    _
  $region3: #{residual_dense_block.1} parent=0 // loop_header
    %s17 = sphi 0, %s21
    %p18 = scmp.ge.s32.totalorder %s17, 4
    %s27 = sphi 0, %s29
    %s30 = sphi 0, %s27
    %s31 = sphi 0, %s30
    %s47 = sphi 0, %s31
    %s51 = sphi 0, %s51
    %s53 = sphi 0, %s51
    %s54 = sphi 0, %s53
    %s68 = sphi 0, %s54
    %s72 = sphi 0, %s72
    %s74 = sphi 0, %s72
    %s75 = sphi 0, %s74
    %s89 = sphi 0, %s75
    %s93 = sphi 0, %s93
    %s95 = sphi 0, %s93
    %s96 = sphi 0, %s95
    %s110 = sphi 0, %s96
    %s114 = sphi 0, %s114
    %s116 = sphi 0, %s114
    %s117 = sphi 0, %s116
    %s131 = sphi 0, %s117
    %s135 = sphi 0, %s135
    %s137 = sphi 0, %s135
    %s138 = sphi 0, %s137
    %s152 = sphi 0, %s138
    %s156 = sphi 0, %s156
    %s158 = sphi 0, %s156
    %s159 = sphi 0, %s158
    %s173 = sphi 0, %s159
    %s177 = sphi 0, %s177
    %s179 = sphi 0, %s177
    %s180 = sphi 0, %s179
    %s194 = sphi 0, %s180
    %s198 = sphi 0, %s198
    %s200 = sphi 0, %s198
    %s201 = sphi 0, %s200
    %s215 = sphi 0, %s201
    %s219 = sphi 0, %s219
    %s221 = sphi 0, %s219
    %s222 = sphi 0, %s221
    %s236 = sphi 0, %s222
    %s240 = sphi 0, %s240
    %s242 = sphi 0, %s240
    %s243 = sphi 0, %s242
    %s257 = sphi 0, %s243
    %s263 = sphi 0, %s265
    %s266 = sphi 0, %s263
    %s267 = sphi 0, %s266
    %s283 = sphi 0, %s267
  $region4: #{residual_dense_block.1} parent=0 // loop_header_branch
    %20 = sbr.rel (%p18) target = $region8
  $region5: #{residual_dense_block.1} parent=0 // loop_body
    %s22 = ssub.s32 %s17, 1
    %s23 = ssub.s32 %s17, 2
    %s24 = sadd.s32 %s17, 1
    %s25 = ssub.s32 %s17, %s24
    %p26 = scmp.eq.s32.totalorder %s25, 0
    %s28 = sadd.s32 %s27, 1
    %s29 = scalar_select %p26, %s27, %s28
    %p32 = pneg %p26
    %p33 = scmp.eq.s32.totalorder %s17, 1
    %p34 = por %p32, %p33
    %p35 = scmp.ne.s32.totalorder %s27, %s30
    %p36 = scmp.eq.s32.totalorder %s17, 0
    %p37 = por %p35, %p36
    %p38 = scmp.ne.s32.totalorder %s27, %s30
    %p39 = scmp.eq.s32.totalorder %s22, 1
    %p40 = por %p38, %p39
    %p41 = scmp.ne.s32.totalorder %s30, %s31
    %p42 = scmp.eq.s32.totalorder %s22, 0
    %p43 = por %p41, %p42
    %p44 = scmp.ne.s32.totalorder %s30, %s31
    %p45 = scmp.eq.s32.totalorder %s23, 1
    %p46 = por %p44, %p45
    %p48 = scmp.ne.s32.totalorder %s31, %s47
    %p49 = scmp.eq.s32.totalorder %s23, 0
    %p50 = por %p48, %p49
    %s52 = sadd.s32 %s51, 1
    %p55 = scmp.eq.s32.totalorder %s17, 1
    %p56 = scmp.ne.s32.totalorder %s51, %s53
    %p57 = scmp.eq.s32.totalorder %s17, 0
    %p58 = por %p56, %p57
    %p59 = scmp.ne.s32.totalorder %s51, %s53
    %p60 = scmp.eq.s32.totalorder %s22, 1
    %p61 = por %p59, %p60
    %p62 = scmp.ne.s32.totalorder %s53, %s54
    %p63 = scmp.eq.s32.totalorder %s22, 0
    %p64 = por %p62, %p63
    %p65 = scmp.ne.s32.totalorder %s53, %s54
    %p66 = scmp.eq.s32.totalorder %s23, 1
    %p67 = por %p65, %p66
    %p69 = scmp.ne.s32.totalorder %s54, %s68
    %p70 = scmp.eq.s32.totalorder %s23, 0
    %p71 = por %p69, %p70
    %s73 = sadd.s32 %s72, 1
    %p76 = scmp.eq.s32.totalorder %s17, 1
    %p77 = scmp.ne.s32.totalorder %s72, %s74
    %p78 = scmp.eq.s32.totalorder %s17, 0
    %p79 = por %p77, %p78
    %p80 = scmp.ne.s32.totalorder %s72, %s74
    %p81 = scmp.eq.s32.totalorder %s22, 1
    %p82 = por %p80, %p81
    %p83 = scmp.ne.s32.totalorder %s74, %s75
    %p84 = scmp.eq.s32.totalorder %s22, 0
    %p85 = por %p83, %p84
    %p86 = scmp.ne.s32.totalorder %s74, %s75
    %p87 = scmp.eq.s32.totalorder %s23, 1
    %p88 = por %p86, %p87
    %p90 = scmp.ne.s32.totalorder %s75, %s89
    %p91 = scmp.eq.s32.totalorder %s23, 0
    %p92 = por %p90, %p91
    %s94 = sadd.s32 %s93, 1
    %p97 = scmp.eq.s32.totalorder %s17, 1
    %p98 = scmp.ne.s32.totalorder %s93, %s95
    %p99 = scmp.eq.s32.totalorder %s17, 0
    %p100 = por %p98, %p99
    %p101 = scmp.ne.s32.totalorder %s93, %s95
    %p102 = scmp.eq.s32.totalorder %s22, 1
    %p103 = por %p101, %p102
    %p104 = scmp.ne.s32.totalorder %s95, %s96
    %p105 = scmp.eq.s32.totalorder %s22, 0
    %p106 = por %p104, %p105
    %p107 = scmp.ne.s32.totalorder %s95, %s96
    %p108 = scmp.eq.s32.totalorder %s23, 1
    %p109 = por %p107, %p108
    %p111 = scmp.ne.s32.totalorder %s96, %s110
    %p112 = scmp.eq.s32.totalorder %s23, 0
    %p113 = por %p111, %p112
    %s115 = sadd.s32 %s114, 1
    %p118 = scmp.eq.s32.totalorder %s17, 1
    %p119 = scmp.ne.s32.totalorder %s114, %s116
    %p120 = scmp.eq.s32.totalorder %s17, 0
    %p121 = por %p119, %p120
    %p122 = scmp.ne.s32.totalorder %s114, %s116
    %p123 = scmp.eq.s32.totalorder %s22, 1
    %p124 = por %p122, %p123
    %p125 = scmp.ne.s32.totalorder %s116, %s117
    %p126 = scmp.eq.s32.totalorder %s22, 0
    %p127 = por %p125, %p126
    %p128 = scmp.ne.s32.totalorder %s116, %s117
    %p129 = scmp.eq.s32.totalorder %s23, 1
    %p130 = por %p128, %p129
    %p132 = scmp.ne.s32.totalorder %s117, %s131
    %p133 = scmp.eq.s32.totalorder %s23, 0
    %p134 = por %p132, %p133
    %s136 = sadd.s32 %s135, 1
    %p139 = scmp.eq.s32.totalorder %s17, 1
    %p140 = scmp.ne.s32.totalorder %s135, %s137
    %p141 = scmp.eq.s32.totalorder %s17, 0
    %p142 = por %p140, %p141
    %p143 = scmp.ne.s32.totalorder %s135, %s137
    %p144 = scmp.eq.s32.totalorder %s22, 1
    %p145 = por %p143, %p144
    %p146 = scmp.ne.s32.totalorder %s137, %s138
    %p147 = scmp.eq.s32.totalorder %s22, 0
    %p148 = por %p146, %p147
    %p149 = scmp.ne.s32.totalorder %s137, %s138
    %p150 = scmp.eq.s32.totalorder %s23, 1
    %p151 = por %p149, %p150
    %p153 = scmp.ne.s32.totalorder %s138, %s152
    %p154 = scmp.eq.s32.totalorder %s23, 0
    %p155 = por %p153, %p154
    %s157 = sadd.s32 %s156, 1
    %p160 = scmp.eq.s32.totalorder %s17, 1
    %p161 = scmp.ne.s32.totalorder %s156, %s158
    %p162 = scmp.eq.s32.totalorder %s17, 0
    %p163 = por %p161, %p162
    %p164 = scmp.ne.s32.totalorder %s156, %s158
    %p165 = scmp.eq.s32.totalorder %s22, 1
    %p166 = por %p164, %p165
    %p167 = scmp.ne.s32.totalorder %s158, %s159
    %p168 = scmp.eq.s32.totalorder %s22, 0
    %p169 = por %p167, %p168
    %p170 = scmp.ne.s32.totalorder %s158, %s159
    %p171 = scmp.eq.s32.totalorder %s23, 1
    %p172 = por %p170, %p171
    %p174 = scmp.ne.s32.totalorder %s159, %s173
    %p175 = scmp.eq.s32.totalorder %s23, 0
    %p176 = por %p174, %p175
    %s178 = sadd.s32 %s177, 1
    %p181 = scmp.eq.s32.totalorder %s17, 1
    %p182 = scmp.ne.s32.totalorder %s177, %s179
    %p183 = scmp.eq.s32.totalorder %s17, 0
    %p184 = por %p182, %p183
    %p185 = scmp.ne.s32.totalorder %s177, %s179
    %p186 = scmp.eq.s32.totalorder %s22, 1
    %p187 = por %p185, %p186
    %p188 = scmp.ne.s32.totalorder %s179, %s180
    %p189 = scmp.eq.s32.totalorder %s22, 0
    %p190 = por %p188, %p189
    %p191 = scmp.ne.s32.totalorder %s179, %s180
    %p192 = scmp.eq.s32.totalorder %s23, 1
    %p193 = por %p191, %p192
    %p195 = scmp.ne.s32.totalorder %s180, %s194
    %p196 = scmp.eq.s32.totalorder %s23, 0
    %p197 = por %p195, %p196
    %s199 = sadd.s32 %s198, 1
    %p202 = scmp.eq.s32.totalorder %s17, 1
    %p203 = scmp.ne.s32.totalorder %s198, %s200
    %p204 = scmp.eq.s32.totalorder %s17, 0
    %p205 = por %p203, %p204
    %p206 = scmp.ne.s32.totalorder %s198, %s200
    %p207 = scmp.eq.s32.totalorder %s22, 1
    %p208 = por %p206, %p207
    %p209 = scmp.ne.s32.totalorder %s200, %s201
    %p210 = scmp.eq.s32.totalorder %s22, 0
    %p211 = por %p209, %p210
    %p212 = scmp.ne.s32.totalorder %s200, %s201
    %p213 = scmp.eq.s32.totalorder %s23, 1
    %p214 = por %p212, %p213
    %p216 = scmp.ne.s32.totalorder %s201, %s215
    %p217 = scmp.eq.s32.totalorder %s23, 0
    %p218 = por %p216, %p217
    %s220 = sadd.s32 %s219, 1
    %p223 = scmp.eq.s32.totalorder %s17, 1
    %p224 = scmp.ne.s32.totalorder %s219, %s221
    %p225 = scmp.eq.s32.totalorder %s17, 0
    %p226 = por %p224, %p225
    %p227 = scmp.ne.s32.totalorder %s219, %s221
    %p228 = scmp.eq.s32.totalorder %s22, 1
    %p229 = por %p227, %p228
    %p230 = scmp.ne.s32.totalorder %s221, %s222
    %p231 = scmp.eq.s32.totalorder %s22, 0
    %p232 = por %p230, %p231
    %p233 = scmp.ne.s32.totalorder %s221, %s222
    %p234 = scmp.eq.s32.totalorder %s23, 1
    %p235 = por %p233, %p234
    %p237 = scmp.ne.s32.totalorder %s222, %s236
    %p238 = scmp.eq.s32.totalorder %s23, 0
    %p239 = por %p237, %p238
    %s241 = sadd.s32 %s240, 1
    %p244 = scmp.eq.s32.totalorder %s17, 1
    %p245 = scmp.ne.s32.totalorder %s240, %s242
    %p246 = scmp.eq.s32.totalorder %s17, 0
    %p247 = por %p245, %p246
    %p248 = scmp.ne.s32.totalorder %s240, %s242
    %p249 = scmp.eq.s32.totalorder %s22, 1
    %p250 = por %p248, %p249
    %p251 = scmp.ne.s32.totalorder %s242, %s243
    %p252 = scmp.eq.s32.totalorder %s22, 0
    %p253 = por %p251, %p252
    %p254 = scmp.ne.s32.totalorder %s242, %s243
    %p255 = scmp.eq.s32.totalorder %s23, 1
    %p256 = por %p254, %p255
    %p258 = scmp.ne.s32.totalorder %s243, %s257
    %p259 = scmp.eq.s32.totalorder %s23, 0
    %p260 = por %p258, %p259
    %s261 = ssub.s32 %s17, %s24
    %p262 = scmp.eq.s32.totalorder %s261, 0
    %s264 = sadd.s32 %s263, 1
    %s265 = scalar_select %p262, %s263, %s264
    %p268 = pneg %p262
    %p269 = scmp.eq.s32.totalorder %s17, 1
    %p270 = por %p268, %p269
    %p271 = scmp.ne.s32.totalorder %s263, %s266
    %p272 = scmp.eq.s32.totalorder %s17, 0
    %p273 = por %p271, %p272
    %p274 = scmp.ne.s32.totalorder %s263, %s266
    %p275 = scmp.eq.s32.totalorder %s22, 1
    %p276 = por %p274, %p275
    %p277 = scmp.ne.s32.totalorder %s266, %s267
    %p278 = scmp.eq.s32.totalorder %s22, 0
    %p279 = por %p277, %p278
    %p280 = scmp.ne.s32.totalorder %s266, %s267
    %p281 = scmp.eq.s32.totalorder %s23, 1
    %p282 = por %p280, %p281
    %p284 = scmp.ne.s32.totalorder %s267, %s283
    %p285 = scmp.eq.s32.totalorder %s23, 0
    %p286 = por %p284, %p285
    %p287 = scmp.le.s32.totalorder 1, %s17
    %p288 = scmp.lt.s32.totalorder %s17, 3
    %p289 = pnand %p287, %p288
    %p290 = pneg %p289
    // Predicated region
    $region9: #{residual_dense_block.1} parent=5 // pred_check
      _
    $region10: #{residual_dense_block.1} parent=5 // pred_check_branch
      %292 = sbr.rel (%p289) target = $region12
    $region11: #{residual_dense_block.1} parent=5 // pred_region
      %s293 = ssub.s32 %s17, 1
      // Predicated region
      $region13: #{residual_dense_block.1} parent=11 // pred_check
        %p294 = pneg %p64
      $region14: #{residual_dense_block.1} parent=11 // pred_check_branch
        %296 = sbr.rel (%p294) target = $region16
      $region15: #{residual_dense_block.1} parent=11 // pred_region
        _
      $region16: #{residual_dense_block.1} parent=11 // pred_fallthru
        _
      // Predicated region
      $region17: #{residual_dense_block.1} parent=11 // pred_check
        %p297 = pneg %p85
      $region18: #{residual_dense_block.1} parent=11 // pred_check_branch
        %299 = sbr.rel (%p297) target = $region20
      $region19: #{residual_dense_block.1} parent=11 // pred_region
        _
      $region20: #{residual_dense_block.1} parent=11 // pred_fallthru
        _
      // Predicated region
      $region21: #{residual_dense_block.1} parent=11 // pred_check
        %p300 = pneg %p106
      $region22: #{residual_dense_block.1} parent=11 // pred_check_branch
        %302 = sbr.rel (%p300) target = $region24
      $region23: #{residual_dense_block.1} parent=11 // pred_region
        _
      $region24: #{residual_dense_block.1} parent=11 // pred_fallthru
        _
      // Predicated region
      $region25: #{residual_dense_block.1} parent=11 // pred_check
        %p303 = pneg %p127
      $region26: #{residual_dense_block.1} parent=11 // pred_check_branch
        %305 = sbr.rel (%p303) target = $region28
      $region27: #{residual_dense_block.1} parent=11 // pred_region
        _
      $region28: #{residual_dense_block.1} parent=11 // pred_fallthru
        _
      // Predicated region
      $region29: #{residual_dense_block.1} parent=11 // pred_check
        %p306 = pneg %p148
      $region30: #{residual_dense_block.1} parent=11 // pred_check_branch
        %308 = sbr.rel (%p306) target = $region32
      $region31: #{residual_dense_block.1} parent=11 // pred_region
        _
      $region32: #{residual_dense_block.1} parent=11 // pred_fallthru
        _
      // Predicated region
      $region33: #{residual_dense_block.1} parent=11 // pred_check
        %p309 = pneg %p169
      $region34: #{residual_dense_block.1} parent=11 // pred_check_branch
        %311 = sbr.rel (%p309) target = $region36
      $region35: #{residual_dense_block.1} parent=11 // pred_region
        _
      $region36: #{residual_dense_block.1} parent=11 // pred_fallthru
        _
      // Predicated region
      $region37: #{residual_dense_block.1} parent=11 // pred_check
        %p312 = pneg %p190
      $region38: #{residual_dense_block.1} parent=11 // pred_check_branch
        %314 = sbr.rel (%p312) target = $region40
      $region39: #{residual_dense_block.1} parent=11 // pred_region
        _
      $region40: #{residual_dense_block.1} parent=11 // pred_fallthru
        _
      // Predicated region
      $region41: #{residual_dense_block.1} parent=11 // pred_check
        %p315 = pneg %p211
      $region42: #{residual_dense_block.1} parent=11 // pred_check_branch
        %317 = sbr.rel (%p315) target = $region44
      $region43: #{residual_dense_block.1} parent=11 // pred_region
        _
      $region44: #{residual_dense_block.1} parent=11 // pred_fallthru
        _
      // Predicated region
      $region45: #{residual_dense_block.1} parent=11 // pred_check
        %p318 = pneg %p232
      $region46: #{residual_dense_block.1} parent=11 // pred_check_branch
        %320 = sbr.rel (%p318) target = $region48
      $region47: #{residual_dense_block.1} parent=11 // pred_region
        _
      $region48: #{residual_dense_block.1} parent=11 // pred_fallthru
        _
      // Predicated region
      $region49: #{residual_dense_block.1} parent=11 // pred_check
        %p321 = pneg %p253
      $region50: #{residual_dense_block.1} parent=11 // pred_check_branch
        %323 = sbr.rel (%p321) target = $region52
      $region51: #{residual_dense_block.1} parent=11 // pred_region
        _
      $region52: #{residual_dense_block.1} parent=11 // pred_fallthru
        _
    $region12: #{residual_dense_block.1} parent=5 // pred_fallthru
      _
    %p324 = scmp.lt.s32.totalorder %s17, 2
    // Predicated region
    $region53: #{residual_dense_block.1} parent=5 // pred_check
      %p325 = pneg %p324
    $region54: #{residual_dense_block.1} parent=5 // pred_check_branch
      %327 = sbr.rel (%p325) target = $region56
    $region55: #{residual_dense_block.1} parent=5 // pred_region
      // Predicated region
      $region57: #{residual_dense_block.1} parent=55 // pred_check
        %p328 = pneg %p37
      $region58: #{residual_dense_block.1} parent=55 // pred_check_branch
        %330 = sbr.rel (%p328) target = $region60
      $region59: #{residual_dense_block.1} parent=55 // pred_region
        %p331 = scmp.lt.s32.totalorder %s17, 1
        %s332 = scalar_select %p331, %s17, 1
        %s333 = smul.addr %s332, 4
        %s334 = smul.addr %s333, 8
        %s335 = scalar_lea.vmem %s0, %s334
      $region60: #{residual_dense_block.1} parent=55 // pred_fallthru
        _
    $region56: #{residual_dense_block.1} parent=5 // pred_fallthru
      _
    %p336 = scmp.le.s32.totalorder 1, %s17
    %p337 = scmp.lt.s32.totalorder %s17, 3
    %p338 = pnand %p336, %p337
    %p339 = pneg %p338
    // Predicated region
    $region61: #{residual_dense_block.1} parent=5 // pred_check
      _
    $region62: #{residual_dense_block.1} parent=5 // pred_check_branch
      %341 = sbr.rel (%p338) target = $region64
    $region63: #{residual_dense_block.1} parent=5 // pred_region
      %s342 = ssub.s32 %s17, 1
      %p343 = scmp.lt.s32.totalorder %s22, 1
      %s344 = scalar_select %p343, %s22, 1
      %s345 = smul.addr %s344, 4
      %s346 = smul.addr %s345, 8
      %s347 = scalar_lea.vmem %s0, %s346
      %p348 = pneg %p43
      %p349 = pneg %p40
      %p350 = pneg %p64
      %p351 = pneg %p61
      %p352 = pneg %p85
      %p353 = pneg %p82
      %p354 = pneg %p106
      %p355 = pneg %p103
      %p356 = pneg %p127
      %p357 = pneg %p124
      %p358 = pneg %p148
      %p359 = pneg %p145
      %p360 = pneg %p169
      %p361 = pneg %p166
      %p362 = pneg %p190
      %p363 = pneg %p187
      %p364 = pneg %p211
      %p365 = pneg %p208
      %p366 = pneg %p232
      %p367 = pneg %p229
      %p368 = pneg %p253
      %p369 = pneg %p250
      %p370 = pneg %p279
      %p371 = pneg %p276
      %p372 = scmp.lt.s32.totalorder %s22, 1
      %s373 = scalar_select %p372, %s22, 1
      %s374 = smul.addr %s373, 4
      %s375 = smul.addr %s374, 8
      %s376 = scalar_lea.vmem %s11, %s375
      %p377 = scmp.lt.s32.totalorder %s22, 1
      %s378 = scalar_select %p377, %s22, 1
      %s379 = smul.addr %s378, 4
      %s380 = smul.addr %s379, 8
      %s381 = scalar_lea.vmem %s0, %s380
      %p382 = scmp.lt.s32.totalorder %s22, 1
      %s383 = scalar_select %p382, %s22, 1
      %s384 = smul.addr %s383, 4
      %s385 = smul.addr %s384, 8
      %s386 = scalar_lea.vmem %s11, %s385
      %v388 = vlaneseq
      %v389 = vand.u32 %v388, 127
      %v390 = vadd.s32 %v389, 128
      %vm391 = vcmp.lt.s32.totalorder %v389, 0
      %v392 = vsub.s32 0, %v389
      %v393 = vsel %vm391, %v392, %v389
      %v394 = vshrl.u32 %v393, 4
      %v395 = vand.u32 %v393, 15
      %v396 = vsub.s32 0, %v395
      %v397 = vsel %vm391, %v396, %v395
      %vm398 = vcmp.lt.s32.totalorder %v390, 0
      %v399 = vsub.s32 0, %v390
      %v400 = vsel %vm398, %v399, %v390
      %v401 = vshrl.u32 %v400, 4
      %v402 = vand.u32 %v400, 15
      %v403 = vsub.s32 0, %v402
      %v404 = vsel %vm398, %v403, %v402
      %vm405 = vcmp.ne.s32.totalorder %v397, 0
      %vm406 = vcmp.ne.s32.totalorder %v404, 0
      %vm407 = vcmp.lt.s32.totalorder %v397, 0
      %vm408 = vcmp.lt.s32.totalorder %v404, 0
      %vm409 = vmand %vm407, %vm405
      %vm410 = vmand %vm408, %vm406
      %v411 = vadd.s32 %v397, 16
      %v412 = vadd.s32 %v404, 16
      %v413 = vsel %vm409, %v411, %v397
      %v414 = vsel %vm410, %v412, %v404
      %v415 = vld [vmem:[%s381] sm:$0xff]
      %v416 = vld [vmem:[%s381 + $0x8] sm:$0xff]
      %v417 = vld [vmem:[%s381 + $0x10] sm:$0xff]
      %v418 = vld [vmem:[%s381 + $0x18] sm:$0xff]
      %419 = vrot.lane.b32.xlu0 %v415, 1
      %v420 = vpop.permute.xlu0 %419
      %421 = vrot.lane.b32.xlu0 %v417, 1
      %v422 = vpop.permute.xlu0 %421
      %423 = vrot.lane.b32.xlu0 %v416, 1
      %v424 = vpop.permute.xlu0 %423
      %425 = vrot.lane.b32.xlu0 %v418, 1
      %v426 = vpop.permute.xlu0 %425
      %vm427 = vcmp.lt.s32.totalorder %v389, 1
      %v428 = vsel %vm427, %v420, %v424
      %v429 = vsel %vm427, %v422, %v426
      %v430 = vsel %vm427, %v424, %v420
      %v431 = vsel %vm427, %v426, %v422
      %432 = vrot.lane.b32.xlu0 %v415, 113
      %v433 = vpop.permute.xlu0 %432
      %434 = vrot.lane.b32.xlu0 %v417, 113
      %v435 = vpop.permute.xlu0 %434
      %436 = vrot.lane.b32.xlu0 %v416, 113
      %v437 = vpop.permute.xlu0 %436
      %438 = vrot.lane.b32.xlu0 %v418, 113
      %v439 = vpop.permute.xlu0 %438
      %vm440 = vcmp.lt.s32.totalorder %v389, 113
      %v441 = vsel %vm440, %v433, %v437
      %v442 = vsel %vm440, %v435, %v439
      %v443 = vsel %vm440, %v437, %v433
      %v444 = vsel %vm440, %v439, %v435
      %vm445 = vcmp.ne.s32.totalorder %v413, 0
      %vm446 = vcmp.ne.s32.totalorder %v414, 0
      %v447 = vsel %vm445, 1, 0
      %v448 = vsel %vm446, 1, 0
      %vm449 = vcmp.eq.s32.totalorder %v447, 1
      %vm450 = vcmp.eq.s32.totalorder %v448, 1
      %v451 = vsel %vm449, %v430, %v441
      %v452 = vsel %vm450, %v428, %v443
      %v453 = vsel %vm449, %v431, %v442
      %v454 = vsel %vm450, %v429, %v444
      %455 = vrot.lane.b32.xlu0 %v415, 127
      %v456 = vpop.permute.xlu0 %455
      %457 = vrot.lane.b32.xlu0 %v417, 127
      %v458 = vpop.permute.xlu0 %457
      %459 = vrot.lane.b32.xlu0 %v416, 127
      %v460 = vpop.permute.xlu0 %459
      %461 = vrot.lane.b32.xlu0 %v418, 127
      %v462 = vpop.permute.xlu0 %461
      %vm463 = vcmp.lt.s32.totalorder %v389, 127
      %v464 = vsel %vm463, %v456, %v460
      %v465 = vsel %vm463, %v458, %v462
      %v466 = vsel %vm463, %v460, %v456
      %v467 = vsel %vm463, %v462, %v458
      %468 = vrot.lane.b32.xlu0 %v415, 15
      %v469 = vpop.permute.xlu0 %468
      %470 = vrot.lane.b32.xlu0 %v417, 15
      %v471 = vpop.permute.xlu0 %470
      %472 = vrot.lane.b32.xlu0 %v416, 15
      %v473 = vpop.permute.xlu0 %472
      %474 = vrot.lane.b32.xlu0 %v418, 15
      %v475 = vpop.permute.xlu0 %474
      %vm476 = vcmp.lt.s32.totalorder %v389, 15
      %v477 = vsel %vm476, %v469, %v473
      %v478 = vsel %vm476, %v471, %v475
      %v479 = vsel %vm476, %v473, %v469
      %v480 = vsel %vm476, %v475, %v471
      %vm481 = vcmp.ne.s32.totalorder %v413, 15
      %vm482 = vcmp.ne.s32.totalorder %v414, 15
      %v483 = vsel %vm481, 1, 0
      %v484 = vsel %vm482, 1, 0
      %vm485 = vcmp.eq.s32.totalorder %v483, 1
      %vm486 = vcmp.eq.s32.totalorder %v484, 1
      %v487 = vsel %vm485, %v464, %v479
      %v488 = vsel %vm486, %v466, %v477
      %v489 = vsel %vm485, %v465, %v480
      %v490 = vsel %vm486, %v467, %v478
      %491 = vrot.lane.b32.xlu0 %v451, 16
      %v492 = vpop.permute.xlu0 %491
      %493 = vrot.lane.b32.xlu0 %v453, 16
      %v494 = vpop.permute.xlu0 %493
      %495 = vrot.lane.b32.xlu0 %v452, 16
      %v496 = vpop.permute.xlu0 %495
      %497 = vrot.lane.b32.xlu0 %v454, 16
      %v498 = vpop.permute.xlu0 %497
      %vm499 = vcmp.lt.s32.totalorder %v389, 16
      %v500 = vsel %vm499, %v492, %v496
      %v501 = vsel %vm499, %v494, %v498
      %v502 = vsel %vm499, %v496, %v492
      %v503 = vsel %vm499, %v498, %v494
      %v504 = vpack.c.bf16 %v503, %v502
      %v505 = vpack.c.bf16 %v501, %v500
      %v508 = vunpack.c.l.b16 %v504
      %v509 = vunpack.c.l.b16 %v505
      %v510 = vunpack.c.h.b16 %v504
      %v511 = vunpack.c.h.b16 %v505
      %v512 = vpack.c.b16 %v509, %v508
      %v513 = vpack.c.b16 %v511, %v510
      %516 = vst [vmem:[#allocation2] sm:$0xff] %v512
      %517 = vst [vmem:[#allocation2 + $0x8] sm:$0xff] %v513
      %518 = vrot.lane.b32.xlu0 %v415, 16
      %v519 = vpop.permute.xlu0 %518
      %520 = vrot.lane.b32.xlu0 %v417, 16
      %v521 = vpop.permute.xlu0 %520
      %522 = vrot.lane.b32.xlu0 %v416, 16
      %v523 = vpop.permute.xlu0 %522
      %524 = vrot.lane.b32.xlu0 %v418, 16
      %v525 = vpop.permute.xlu0 %524
      %v526 = vsel %vm499, %v519, %v523
      %v527 = vsel %vm499, %v521, %v525
      %v528 = vsel %vm499, %v523, %v519
      %v529 = vsel %vm499, %v525, %v521
      %v530 = vpack.c.bf16 %v529, %v528
      %v531 = vpack.c.bf16 %v527, %v526
      %v534 = vunpack.c.l.b16 %v530
      %v535 = vunpack.c.l.b16 %v531
      %v536 = vunpack.c.h.b16 %v530
      %v537 = vunpack.c.h.b16 %v531
      %v538 = vpack.c.b16 %v535, %v534
      %v539 = vpack.c.b16 %v537, %v536
      %542 = vst [vmem:[#allocation2 + $0x10] sm:$0xff] %v538
      %543 = vst [vmem:[#allocation2 + $0x18] sm:$0xff] %v539
      %544 = vrot.lane.b32.xlu0 %v487, 16
      %v545 = vpop.permute.xlu0 %544
      %546 = vrot.lane.b32.xlu0 %v489, 16
      %v547 = vpop.permute.xlu0 %546
      %548 = vrot.lane.b32.xlu0 %v488, 16
      %v549 = vpop.permute.xlu0 %548
      %550 = vrot.lane.b32.xlu0 %v490, 16
      %v551 = vpop.permute.xlu0 %550
      %v552 = vsel %vm499, %v545, %v549
      %v553 = vsel %vm499, %v547, %v551
      %v554 = vsel %vm499, %v549, %v545
      %v555 = vsel %vm499, %v551, %v547
      %v556 = vpack.c.bf16 %v555, %v554
      %v557 = vpack.c.bf16 %v553, %v552
      %v560 = vunpack.c.l.b16 %v556
      %v561 = vunpack.c.l.b16 %v557
      %v562 = vunpack.c.h.b16 %v556
      %v563 = vunpack.c.h.b16 %v557
      %v564 = vpack.c.b16 %v561, %v560
      %v565 = vpack.c.b16 %v563, %v562
      %568 = vst [vmem:[#allocation2 + $0x20] sm:$0xff] %v564
      %569 = vst [vmem:[#allocation2 + $0x28] sm:$0xff] %v565
      %v570 = vpack.c.bf16 %v453, %v451
      %v571 = vpack.c.bf16 %v454, %v452
      %v574 = vunpack.c.l.b16 %v570
      %v575 = vunpack.c.l.b16 %v571
      %v576 = vunpack.c.h.b16 %v570
      %v577 = vunpack.c.h.b16 %v571
      %v578 = vpack.c.b16 %v575, %v574
      %v579 = vpack.c.b16 %v577, %v576
      %582 = vst [vmem:[#allocation2 + $0x30] sm:$0xff] %v578
      %583 = vst [vmem:[#allocation2 + $0x38] sm:$0xff] %v579
      %v584 = vpack.c.bf16 %v417, %v415
      %v585 = vpack.c.bf16 %v418, %v416
      %v588 = vunpack.c.l.b16 %v584
      %v589 = vunpack.c.l.b16 %v585
      %v590 = vunpack.c.h.b16 %v584
      %v591 = vunpack.c.h.b16 %v585
      %v592 = vpack.c.b16 %v589, %v588
      %v593 = vpack.c.b16 %v591, %v590
      %596 = vst [vmem:[#allocation2 + $0x40] sm:$0xff] %v592
      %597 = vst [vmem:[#allocation2 + $0x48] sm:$0xff] %v593
      %v598 = vpack.c.bf16 %v489, %v487
      %v599 = vpack.c.bf16 %v490, %v488
      %v602 = vunpack.c.l.b16 %v598
      %v603 = vunpack.c.l.b16 %v599
      %v604 = vunpack.c.h.b16 %v598
      %v605 = vunpack.c.h.b16 %v599
      %v606 = vpack.c.b16 %v603, %v602
      %v607 = vpack.c.b16 %v605, %v604
      %610 = vst [vmem:[#allocation2 + $0x50] sm:$0xff] %v606
      %611 = vst [vmem:[#allocation2 + $0x58] sm:$0xff] %v607
      %612 = vrot.lane.b32.xlu0 %v451, 112
      %v613 = vpop.permute.xlu0 %612
      %614 = vrot.lane.b32.xlu0 %v453, 112
      %v615 = vpop.permute.xlu0 %614
      %616 = vrot.lane.b32.xlu0 %v452, 112
      %v617 = vpop.permute.xlu0 %616
      %618 = vrot.lane.b32.xlu0 %v454, 112
      %v619 = vpop.permute.xlu0 %618
      %vm620 = vcmp.lt.s32.totalorder %v389, 112
      %v621 = vsel %vm620, %v613, %v617
      %v622 = vsel %vm620, %v615, %v619
      %v623 = vsel %vm620, %v617, %v613
      %v624 = vsel %vm620, %v619, %v615
      %v625 = vpack.c.bf16 %v622, %v621
      %v626 = vpack.c.bf16 %v624, %v623
      %v629 = vunpack.c.l.b16 %v625
      %v630 = vunpack.c.l.b16 %v626
      %v631 = vunpack.c.h.b16 %v625
      %v632 = vunpack.c.h.b16 %v626
      %v633 = vpack.c.b16 %v630, %v629
      %v634 = vpack.c.b16 %v632, %v631
      %637 = vst [vmem:[#allocation2 + $0x60] sm:$0xff] %v633
      %638 = vst [vmem:[#allocation2 + $0x68] sm:$0xff] %v634
      %639 = vrot.lane.b32.xlu0 %v415, 112
      %v640 = vpop.permute.xlu0 %639
      %641 = vrot.lane.b32.xlu0 %v417, 112
      %v642 = vpop.permute.xlu0 %641
      %643 = vrot.lane.b32.xlu0 %v416, 112
      %v644 = vpop.permute.xlu0 %643
      %645 = vrot.lane.b32.xlu0 %v418, 112
      %v646 = vpop.permute.xlu0 %645
      %v647 = vsel %vm620, %v640, %v644
      %v648 = vsel %vm620, %v642, %v646
      %v649 = vsel %vm620, %v644, %v640
      %v650 = vsel %vm620, %v646, %v642
      %v651 = vpack.c.bf16 %v648, %v647
      %v652 = vpack.c.bf16 %v650, %v649
      %v655 = vunpack.c.l.b16 %v651
      %v656 = vunpack.c.l.b16 %v652
      %v657 = vunpack.c.h.b16 %v651
      %v658 = vunpack.c.h.b16 %v652
      %v659 = vpack.c.b16 %v656, %v655
      %v660 = vpack.c.b16 %v658, %v657
      %663 = vst [vmem:[#allocation2 + $0x70] sm:$0xff] %v659
      %664 = vst [vmem:[#allocation2 + $0x78] sm:$0xff] %v660
      %665 = vrot.lane.b32.xlu0 %v487, 112
      %v666 = vpop.permute.xlu0 %665
      %667 = vrot.lane.b32.xlu0 %v489, 112
      %v668 = vpop.permute.xlu0 %667
      %669 = vrot.lane.b32.xlu0 %v488, 112
      %v670 = vpop.permute.xlu0 %669
      %671 = vrot.lane.b32.xlu0 %v490, 112
      %v672 = vpop.permute.xlu0 %671
      %v673 = vsel %vm620, %v666, %v670
      %v674 = vsel %vm620, %v668, %v672
      %v675 = vsel %vm620, %v670, %v666
      %v676 = vsel %vm620, %v672, %v668
      %v677 = vpack.c.bf16 %v674, %v673
      %v678 = vpack.c.bf16 %v676, %v675
      %v681 = vunpack.c.l.b16 %v677
      %v682 = vunpack.c.l.b16 %v678
      %v683 = vunpack.c.h.b16 %v677
      %v684 = vunpack.c.h.b16 %v678
      %v685 = vpack.c.b16 %v682, %v681
      %v686 = vpack.c.b16 %v684, %v683
      %689 = vst [vmem:[#allocation2 + $0x80] sm:$0xff] %v685
      %690 = vst [vmem:[#allocation2 + $0x88] sm:$0xff] %v686
      %v691 = vld [vmem:[%s1] sm:$0xff]
      %v692 = vld [vmem:[%s1 + $0x8] sm:$0xff]
      %v693 = vld [vmem:[#allocation2] sm:$0xff]
      %v694 = vld [vmem:[#allocation2 + $0x8] sm:$0xff]
      %v695 = vld [vmem:[#allocation2 + $0x10] sm:$0xff]
      %v696 = vld [vmem:[#allocation2 + $0x18] sm:$0xff]
      %v697 = vld [vmem:[#allocation2 + $0x20] sm:$0xff]
      %v698 = vld [vmem:[#allocation2 + $0x28] sm:$0xff]
      %v699 = vld [vmem:[#allocation2 + $0x30] sm:$0xff]
      %v700 = vld [vmem:[#allocation2 + $0x38] sm:$0xff]
      %v701 = vld [vmem:[#allocation2 + $0x40] sm:$0xff]
      %v702 = vld [vmem:[#allocation2 + $0x48] sm:$0xff]
      %v703 = vld [vmem:[#allocation2 + $0x50] sm:$0xff]
      %v704 = vld [vmem:[#allocation2 + $0x58] sm:$0xff]
      %v705 = vld [vmem:[#allocation2 + $0x60] sm:$0xff]
      %v706 = vld [vmem:[#allocation2 + $0x68] sm:$0xff]
      %v707 = vld [vmem:[#allocation2 + $0x70] sm:$0xff]
      %v708 = vld [vmem:[#allocation2 + $0x78] sm:$0xff]
      %v709 = vld [vmem:[#allocation2 + $0x80] sm:$0xff]
      %v710 = vld [vmem:[#allocation2 + $0x88] sm:$0xff]
      %v711 = vld [vmem:[%s2] sm:$0xff]
      %v712 = vld [vmem:[%s2 + $0x8] sm:$0xff]
      %714 = vset.pattern.permute.xlu0 0
      %715 = vperm.xlu0 %714, %v711
      %v716 = vpop.permute.xlu0 %715
      %719 = vset.pattern.permute.xlu0 0
      %720 = vperm.xlu0 %719, %v712
      %v721 = vpop.permute.xlu0 %720
      %v725 = vunpack.c.l.b16 %v691
      %v726 = vunpack.c.h.b16 %v691
      %v727 = vunpack.c.l.b16 %v692
      %v728 = vunpack.c.h.b16 %v692
      %v729 = vpack.c.b16 %v727, %v725
      %v730 = vpack.c.b16 %v728, %v726
      %v750 = vunpack.c.l.b16 %v693
      %v751 = vunpack.c.h.b16 %v693
      %v752 = vunpack.c.l.b16 %v694
      %v753 = vunpack.c.h.b16 %v694
      %v754 = vunpack.c.l.b16 %v695
      %v755 = vunpack.c.h.b16 %v695
      %v756 = vunpack.c.l.b16 %v696
      %v757 = vunpack.c.h.b16 %v696
      %v758 = vunpack.c.l.b16 %v697
      %v759 = vunpack.c.h.b16 %v697
      %v760 = vunpack.c.l.b16 %v698
      %v761 = vunpack.c.h.b16 %v698
      %v762 = vunpack.c.l.b16 %v699
      %v763 = vunpack.c.h.b16 %v699
      %v764 = vunpack.c.l.b16 %v700
      %v765 = vunpack.c.h.b16 %v700
      %v766 = vunpack.c.l.b16 %v701
      %v767 = vunpack.c.h.b16 %v701
      %v768 = vunpack.c.l.b16 %v702
      %v769 = vunpack.c.h.b16 %v702
      %v770 = vunpack.c.l.b16 %v703
      %v771 = vunpack.c.h.b16 %v703
      %v772 = vunpack.c.l.b16 %v704
      %v773 = vunpack.c.h.b16 %v704
      %v774 = vunpack.c.l.b16 %v705
      %v775 = vunpack.c.h.b16 %v705
      %v776 = vunpack.c.l.b16 %v706
      %v777 = vunpack.c.h.b16 %v706
      %v778 = vunpack.c.l.b16 %v707
      %v779 = vunpack.c.h.b16 %v707
      %v780 = vunpack.c.l.b16 %v708
      %v781 = vunpack.c.h.b16 %v708
      %v782 = vunpack.c.l.b16 %v709
      %v783 = vunpack.c.h.b16 %v709
      %v784 = vunpack.c.l.b16 %v710
      %v785 = vunpack.c.h.b16 %v710
      %v786 = vpack.c.b16 %v752, %v750
      %v787 = vpack.c.b16 %v753, %v751
      %v788 = vpack.c.b16 %v756, %v754
      %v789 = vpack.c.b16 %v757, %v755
      %v790 = vpack.c.b16 %v760, %v758
      %v791 = vpack.c.b16 %v761, %v759
      %v792 = vpack.c.b16 %v764, %v762
      %v793 = vpack.c.b16 %v765, %v763
      %v794 = vpack.c.b16 %v768, %v766
      %v795 = vpack.c.b16 %v769, %v767
      %v796 = vpack.c.b16 %v772, %v770
      %v797 = vpack.c.b16 %v773, %v771
      %v798 = vpack.c.b16 %v776, %v774
      %v799 = vpack.c.b16 %v777, %v775
      %v800 = vpack.c.b16 %v780, %v778
      %v801 = vpack.c.b16 %v781, %v779
      %v802 = vpack.c.b16 %v784, %v782
      %v803 = vpack.c.b16 %v785, %v783
      %vm822 = vcmask 130048
      %v824 = vsel %vm822, %v730, 0
      %826 = vmatprep.subr.bf16.mxu0 %v801
      %827 = vmatpush1.bf16.msra.mxu0 %v800
      %828 = vmatprep.subr.bf16.mxu0 %v799
      %829 = vmatpush1.bf16.msra.mxu0 %v798
      %830 = vmatprep.subr.bf16.mxu0 %v797
      %831 = vmatpush1.bf16.msra.mxu0 %v796
      %832 = vmatprep.subr.bf16.mxu0 %v795
      %833 = vmatpush1.bf16.msra.mxu0 %v794
      %834 = vmatprep.subr.bf16.mxu0 %v793
      %835 = vmatpush1.bf16.msra.mxu0 %v792
      %836 = vmatprep.subr.bf16.mxu0 %v791
      %837 = vmatpush1.bf16.msra.mxu0 %v790
      %838 = vmatprep.subr.bf16.mxu0 %v789
      %839 = vmatpush1.bf16.msra.mxu0 %v788
      %840 = vmatprep.subr.bf16.mxu0 %v787
      %841 = vmatpush1.bf16.msra.mxu0 %v786
      %842 = vmatprep.subr.bf16.mxu0 0
      %843 = vmatpush2.bf16.msra.mxu0 0
      %844 = vmatprep.subr.bf16.mxu0 0
      %845 = vmatpush2.bf16.msra.mxu0 0
      %846 = vmatprep.subr.bf16.mxu0 0
      %847 = vmatpush2.bf16.msra.mxu0 0
      %848 = vmatprep.subr.bf16.mxu0 0
      %849 = vmatpush2.bf16.msra.mxu0 0
      %850 = vmatprep.subr.bf16.mxu0 0
      %851 = vmatpush2.bf16.msra.mxu0 0
      %852 = vmatprep.subr.bf16.mxu0 0
      %853 = vmatpush2.bf16.msra.mxu0 0
      %854 = vmatprep.subr.bf16.mxu0 0
      %855 = vmatpush2.bf16.msra.mxu0 0
      %856 = vmatprep.subr.bf16.mxu0 %v803
      %857 = vmatpush2.bf16.msra.mxu0 %v802
      %858 = vmatprep.mubr.bf16.mxu0 %v824
      %859 = vmatmul.mubr.bf16.gmra.mxu0 %v729
      %v860 = vpop.f32.mrf.mxu0
      %v861 = vadd.f32 %v716, %v860
      %v862 = vpop.f32.mrf.mxu0
      %v863 = vadd.f32 %v716, %v862
      %v864 = vpop.f32.mrf.mxu0
      %v865 = vadd.f32 %v721, %v864
      %v866 = vpop.f32.mrf.mxu0
      %v867 = vadd.f32 %v721, %v866
      %868 = vdwg.mxu0
      %vm869 = vcmp.gt.f32.partialorder %v861, 0.0
      %vm870 = vcmp.gt.f32.partialorder %v863, 0.0
      %vm871 = vcmp.gt.f32.partialorder %v865, 0.0
      %vm872 = vcmp.gt.f32.partialorder %v867, 0.0
      %v873 = vmul.f32 %v861, 0.2
      %v874 = vmul.f32 %v863, 0.2
      %v875 = vmul.f32 %v865, 0.2
      %v876 = vmul.f32 %v867, 0.2
      %v877 = vsel %vm869, %v861, %v873
      %v878 = vsel %vm870, %v863, %v874
      %v879 = vsel %vm871, %v865, %v875
      %v880 = vsel %vm872, %v867, %v876
      %881 = vrot.lane.b32.xlu0 %v877, 1
      %v882 = vpop.permute.xlu0 %881
      %883 = vrot.lane.b32.xlu0 %v879, 1
      %v884 = vpop.permute.xlu0 %883
      %885 = vrot.lane.b32.xlu0 %v878, 1
      %v886 = vpop.permute.xlu0 %885
      %887 = vrot.lane.b32.xlu0 %v880, 1
      %v888 = vpop.permute.xlu0 %887
      %v889 = vsel %vm427, %v882, %v886
      %v890 = vsel %vm427, %v884, %v888
      %v891 = vsel %vm427, %v886, %v882
      %v892 = vsel %vm427, %v888, %v884
      %893 = vrot.lane.b32.xlu0 %v877, 113
      %v894 = vpop.permute.xlu0 %893
      %895 = vrot.lane.b32.xlu0 %v879, 113
      %v896 = vpop.permute.xlu0 %895
      %897 = vrot.lane.b32.xlu0 %v878, 113
      %v898 = vpop.permute.xlu0 %897
      %899 = vrot.lane.b32.xlu0 %v880, 113
      %v900 = vpop.permute.xlu0 %899
      %v901 = vsel %vm440, %v894, %v898
      %v902 = vsel %vm440, %v896, %v900
      %v903 = vsel %vm440, %v898, %v894
      %v904 = vsel %vm440, %v900, %v896
      %v905 = vsel %vm449, %v891, %v901
      %v906 = vsel %vm450, %v889, %v903
      %v907 = vsel %vm449, %v892, %v902
      %v908 = vsel %vm450, %v890, %v904
      %909 = vrot.lane.b32.xlu0 %v877, 127
      %v910 = vpop.permute.xlu0 %909
      %911 = vrot.lane.b32.xlu0 %v879, 127
      %v912 = vpop.permute.xlu0 %911
      %913 = vrot.lane.b32.xlu0 %v878, 127
      %v914 = vpop.permute.xlu0 %913
      %915 = vrot.lane.b32.xlu0 %v880, 127
      %v916 = vpop.permute.xlu0 %915
      %v917 = vsel %vm463, %v910, %v914
      %v918 = vsel %vm463, %v912, %v916
      %v919 = vsel %vm463, %v914, %v910
      %v920 = vsel %vm463, %v916, %v912
      %921 = vrot.lane.b32.xlu0 %v877, 15
      %v922 = vpop.permute.xlu0 %921
      %923 = vrot.lane.b32.xlu0 %v879, 15
      %v924 = vpop.permute.xlu0 %923
      %925 = vrot.lane.b32.xlu0 %v878, 15
      %v926 = vpop.permute.xlu0 %925
      %927 = vrot.lane.b32.xlu0 %v880, 15
      %v928 = vpop.permute.xlu0 %927
      %v929 = vsel %vm476, %v922, %v926
      %v930 = vsel %vm476, %v924, %v928
      %v931 = vsel %vm476, %v926, %v922
      %v932 = vsel %vm476, %v928, %v924
      %v933 = vsel %vm485, %v917, %v931
      %v934 = vsel %vm486, %v919, %v929
      %v935 = vsel %vm485, %v918, %v932
      %v936 = vsel %vm486, %v920, %v930
      %937 = vrot.lane.b32.xlu0 %v905, 16
      %v938 = vpop.permute.xlu0 %937
      %939 = vrot.lane.b32.xlu0 %v907, 16
      %v940 = vpop.permute.xlu0 %939
      %941 = vrot.lane.b32.xlu0 %v906, 16
      %v942 = vpop.permute.xlu0 %941
      %943 = vrot.lane.b32.xlu0 %v908, 16
      %v944 = vpop.permute.xlu0 %943
      %v945 = vsel %vm499, %v938, %v942
      %v946 = vsel %vm499, %v940, %v944
      %v947 = vsel %vm499, %v942, %v938
      %v948 = vsel %vm499, %v944, %v940
      %v949 = vpack.c.bf16 %v948, %v947
      %v950 = vpack.c.bf16 %v946, %v945
      %v953 = vunpack.c.l.b16 %v949
      %v954 = vunpack.c.l.b16 %v950
      %v955 = vunpack.c.h.b16 %v949
      %v956 = vunpack.c.h.b16 %v950
      %v957 = vpack.c.b16 %v954, %v953
      %v958 = vpack.c.b16 %v956, %v955
      %961 = vst [vmem:[#allocation2 + $0x90] sm:$0xff] %v957
      %962 = vst [vmem:[#allocation2 + $0x98] sm:$0xff] %v958
      %963 = vrot.lane.b32.xlu0 %v877, 16
      %v964 = vpop.permute.xlu0 %963
      %965 = vrot.lane.b32.xlu0 %v879, 16
      %v966 = vpop.permute.xlu0 %965
      %967 = vrot.lane.b32.xlu0 %v878, 16
      %v968 = vpop.permute.xlu0 %967
      %969 = vrot.lane.b32.xlu0 %v880, 16
      %v970 = vpop.permute.xlu0 %969
      %v971 = vsel %vm499, %v964, %v968
      %v972 = vsel %vm499, %v966, %v970
      %v973 = vsel %vm499, %v968, %v964
      %v974 = vsel %vm499, %v970, %v966
      %v975 = vpack.c.bf16 %v974, %v973
      %v976 = vpack.c.bf16 %v972, %v971
      %v979 = vunpack.c.l.b16 %v975
      %v980 = vunpack.c.l.b16 %v976
      %v981 = vunpack.c.h.b16 %v975
      %v982 = vunpack.c.h.b16 %v976
      %v983 = vpack.c.b16 %v980, %v979
      %v984 = vpack.c.b16 %v982, %v981
      %987 = vst [vmem:[#allocation2 + $0xa0] sm:$0xff] %v983
      %988 = vst [vmem:[#allocation2 + $0xa8] sm:$0xff] %v984
      %989 = vrot.lane.b32.xlu0 %v933, 16
      %v990 = vpop.permute.xlu0 %989
      %991 = vrot.lane.b32.xlu0 %v935, 16
      %v992 = vpop.permute.xlu0 %991
      %993 = vrot.lane.b32.xlu0 %v934, 16
      %v994 = vpop.permute.xlu0 %993
      %995 = vrot.lane.b32.xlu0 %v936, 16
      %v996 = vpop.permute.xlu0 %995
      %v997 = vsel %vm499, %v990, %v994
      %v998 = vsel %vm499, %v992, %v996
      %v999 = vsel %vm499, %v994, %v990
      %v1000 = vsel %vm499, %v996, %v992
      %v1001 = vpack.c.bf16 %v1000, %v999
      %v1002 = vpack.c.bf16 %v998, %v997
      %v1005 = vunpack.c.l.b16 %v1001
      %v1006 = vunpack.c.l.b16 %v1002
      %v1007 = vunpack.c.h.b16 %v1001
      %v1008 = vunpack.c.h.b16 %v1002
      %v1009 = vpack.c.b16 %v1006, %v1005
      %v1010 = vpack.c.b16 %v1008, %v1007
      %1013 = vst [vmem:[#allocation2 + $0xb0] sm:$0xff] %v1009
      %1014 = vst [vmem:[#allocation2 + $0xb8] sm:$0xff] %v1010
      %v1015 = vpack.c.bf16 %v907, %v905
      %v1016 = vpack.c.bf16 %v908, %v906
      %v1019 = vunpack.c.l.b16 %v1015
      %v1020 = vunpack.c.l.b16 %v1016
      %v1021 = vunpack.c.h.b16 %v1015
      %v1022 = vunpack.c.h.b16 %v1016
      %v1023 = vpack.c.b16 %v1020, %v1019
      %v1024 = vpack.c.b16 %v1022, %v1021
      %1027 = vst [vmem:[#allocation2 + $0xc0] sm:$0xff] %v1023
      %1028 = vst [vmem:[#allocation2 + $0xc8] sm:$0xff] %v1024
      %v1029 = vpack.c.bf16 %v879, %v877
      %v1030 = vpack.c.bf16 %v880, %v878
      %v1033 = vunpack.c.l.b16 %v1029
      %v1034 = vunpack.c.l.b16 %v1030
      %v1035 = vunpack.c.h.b16 %v1029
      %v1036 = vunpack.c.h.b16 %v1030
      %v1037 = vpack.c.b16 %v1034, %v1033
      %v1038 = vpack.c.b16 %v1036, %v1035
      %1041 = vst [vmem:[#allocation2 + $0xd0] sm:$0xff] %v1037
      %1042 = vst [vmem:[#allocation2 + $0xd8] sm:$0xff] %v1038
      %v1043 = vpack.c.bf16 %v935, %v933
      %v1044 = vpack.c.bf16 %v936, %v934
      %v1047 = vunpack.c.l.b16 %v1043
      %v1048 = vunpack.c.l.b16 %v1044
      %v1049 = vunpack.c.h.b16 %v1043
      %v1050 = vunpack.c.h.b16 %v1044
      %v1051 = vpack.c.b16 %v1048, %v1047
      %v1052 = vpack.c.b16 %v1050, %v1049
      %1055 = vst [vmem:[#allocation2 + $0xe0] sm:$0xff] %v1051
      %1056 = vst [vmem:[#allocation2 + $0xe8] sm:$0xff] %v1052
      %1057 = vrot.lane.b32.xlu0 %v905, 112
      %v1058 = vpop.permute.xlu0 %1057
      %1059 = vrot.lane.b32.xlu0 %v907, 112
      %v1060 = vpop.permute.xlu0 %1059
      %1061 = vrot.lane.b32.xlu0 %v906, 112
      %v1062 = vpop.permute.xlu0 %1061
      %1063 = vrot.lane.b32.xlu0 %v908, 112
      %v1064 = vpop.permute.xlu0 %1063
      %v1065 = vsel %vm620, %v1058, %v1062
      %v1066 = vsel %vm620, %v1060, %v1064
      %v1067 = vsel %vm620, %v1062, %v1058
      %v1068 = vsel %vm620, %v1064, %v1060
      %v1069 = vpack.c.bf16 %v1066, %v1065
      %v1070 = vpack.c.bf16 %v1068, %v1067
      %v1073 = vunpack.c.l.b16 %v1069
      %v1074 = vunpack.c.l.b16 %v1070
      %v1075 = vunpack.c.h.b16 %v1069
      %v1076 = vunpack.c.h.b16 %v1070
      %v1077 = vpack.c.b16 %v1074, %v1073
      %v1078 = vpack.c.b16 %v1076, %v1075
      %1081 = vst [vmem:[#allocation2 + $0xf0] sm:$0xff] %v1077
      %1082 = vst [vmem:[#allocation2 + $0xf8] sm:$0xff] %v1078
      %1083 = vrot.lane.b32.xlu0 %v877, 112
      %v1084 = vpop.permute.xlu0 %1083
      %1085 = vrot.lane.b32.xlu0 %v879, 112
      %v1086 = vpop.permute.xlu0 %1085
      %1087 = vrot.lane.b32.xlu0 %v878, 112
      %v1088 = vpop.permute.xlu0 %1087
      %1089 = vrot.lane.b32.xlu0 %v880, 112
      %v1090 = vpop.permute.xlu0 %1089
      %v1091 = vsel %vm620, %v1084, %v1088
      %v1092 = vsel %vm620, %v1086, %v1090
      %v1093 = vsel %vm620, %v1088, %v1084
      %v1094 = vsel %vm620, %v1090, %v1086
      %v1095 = vpack.c.bf16 %v1092, %v1091
      %v1096 = vpack.c.bf16 %v1094, %v1093
      %v1099 = vunpack.c.l.b16 %v1095
      %v1100 = vunpack.c.l.b16 %v1096
      %v1101 = vunpack.c.h.b16 %v1095
      %v1102 = vunpack.c.h.b16 %v1096
      %v1103 = vpack.c.b16 %v1100, %v1099
      %v1104 = vpack.c.b16 %v1102, %v1101
      %1107 = vst [vmem:[#allocation2 + $0x100] sm:$0xff] %v1103
      %1108 = vst [vmem:[#allocation2 + $0x108] sm:$0xff] %v1104
      %1109 = vrot.lane.b32.xlu0 %v933, 112
      %v1110 = vpop.permute.xlu0 %1109
      %1111 = vrot.lane.b32.xlu0 %v935, 112
      %v1112 = vpop.permute.xlu0 %1111
      %1113 = vrot.lane.b32.xlu0 %v934, 112
      %v1114 = vpop.permute.xlu0 %1113
      %1115 = vrot.lane.b32.xlu0 %v936, 112
      %v1116 = vpop.permute.xlu0 %1115
      %v1117 = vsel %vm620, %v1110, %v1114
      %v1118 = vsel %vm620, %v1112, %v1116
      %v1119 = vsel %vm620, %v1114, %v1110
      %v1120 = vsel %vm620, %v1116, %v1112
      %v1121 = vpack.c.bf16 %v1118, %v1117
      %v1122 = vpack.c.bf16 %v1120, %v1119
      %v1125 = vunpack.c.l.b16 %v1121
      %v1126 = vunpack.c.l.b16 %v1122
      %v1127 = vunpack.c.h.b16 %v1121
      %v1128 = vunpack.c.h.b16 %v1122
      %v1129 = vpack.c.b16 %v1126, %v1125
      %v1130 = vpack.c.b16 %v1128, %v1127
      %1133 = vst [vmem:[#allocation2 + $0x110] sm:$0xff] %v1129
      %1134 = vst [vmem:[#allocation2 + $0x118] sm:$0xff] %v1130
      %v1135 = vld [vmem:[%s3] sm:$0xff]
      %v1136 = vld [vmem:[%s3 + $0x8] sm:$0xf]
      %v1137 = vld [vmem:[%s3 + $0xc] sm:$0xff]
      %v1138 = vld [vmem:[%s3 + $0x14] sm:$0xf]
      %v1139 = vld [vmem:[#allocation2] sm:$0xff]
      %v1140 = vld [vmem:[#allocation2 + $0x8] sm:$0xff]
      %v1141 = vld [vmem:[#allocation2 + $0x10] sm:$0xff]
      %v1142 = vld [vmem:[#allocation2 + $0x18] sm:$0xff]
      %v1143 = vld [vmem:[#allocation2 + $0x20] sm:$0xff]
      %v1144 = vld [vmem:[#allocation2 + $0x28] sm:$0xff]
      %v1145 = vld [vmem:[#allocation2 + $0x30] sm:$0xff]
      %v1146 = vld [vmem:[#allocation2 + $0x38] sm:$0xff]
      %v1147 = vld [vmem:[#allocation2 + $0x40] sm:$0xff]
      %v1148 = vld [vmem:[#allocation2 + $0x48] sm:$0xff]
      %v1149 = vld [vmem:[#allocation2 + $0x50] sm:$0xff]
      %v1150 = vld [vmem:[#allocation2 + $0x58] sm:$0xff]
      %v1151 = vld [vmem:[#allocation2 + $0x60] sm:$0xff]
      %v1152 = vld [vmem:[#allocation2 + $0x68] sm:$0xff]
      %v1153 = vld [vmem:[#allocation2 + $0x70] sm:$0xff]
      %v1154 = vld [vmem:[#allocation2 + $0x78] sm:$0xff]
      %v1155 = vld [vmem:[#allocation2 + $0x80] sm:$0xff]
      %v1156 = vld [vmem:[#allocation2 + $0x88] sm:$0xff]
      %v1157 = vld [vmem:[#allocation2 + $0x90] sm:$0xff]
      %v1158 = vld [vmem:[#allocation2 + $0x98] sm:$0xff]
      %v1159 = vld [vmem:[#allocation2 + $0xa0] sm:$0xff]
      %v1160 = vld [vmem:[#allocation2 + $0xa8] sm:$0xff]
      %v1161 = vld [vmem:[#allocation2 + $0xb0] sm:$0xff]
      %v1162 = vld [vmem:[#allocation2 + $0xb8] sm:$0xff]
      %v1163 = vld [vmem:[#allocation2 + $0xc0] sm:$0xff]
      %v1164 = vld [vmem:[#allocation2 + $0xc8] sm:$0xff]
      %v1165 = vld [vmem:[#allocation2 + $0xd0] sm:$0xff]
      %v1166 = vld [vmem:[#allocation2 + $0xd8] sm:$0xff]
      %v1167 = vld [vmem:[#allocation2 + $0xe0] sm:$0xff]
      %v1168 = vld [vmem:[#allocation2 + $0xe8] sm:$0xff]
      %v1169 = vld [vmem:[#allocation2 + $0xf0] sm:$0xff]
      %v1170 = vld [vmem:[#allocation2 + $0xf8] sm:$0xff]
      %v1171 = vld [vmem:[#allocation2 + $0x100] sm:$0xff]
      %v1172 = vld [vmem:[#allocation2 + $0x108] sm:$0xff]
      %v1173 = vld [vmem:[#allocation2 + $0x110] sm:$0xff]
      %v1174 = vld [vmem:[#allocation2 + $0x118] sm:$0xff]
      %v1175 = vld [vmem:[%s4] sm:$0xff]
      %v1176 = vld [vmem:[%s4 + $0x8] sm:$0xff]
      %1178 = vset.pattern.permute.xlu0 0
      %1179 = vperm.xlu0 %1178, %v1175
      %v1180 = vpop.permute.xlu0 %1179
      %1183 = vset.pattern.permute.xlu0 0
      %1184 = vperm.xlu0 %1183, %v1176
      %v1185 = vpop.permute.xlu0 %1184
      %v1191 = vunpack.c.l.b16 %v1135
      %v1192 = vunpack.c.h.b16 %v1135
      %v1193 = vunpack.c.l.b16 %v1136
      %v1194 = vunpack.c.l.b16 %v1137
      %v1195 = vunpack.c.h.b16 %v1137
      %v1196 = vunpack.c.l.b16 %v1138
      %v1197 = vpack.c.b16 %v1194, %v1191
      %v1198 = vpack.c.b16 %v1195, %v1192
      %v1199 = vpack.c.b16 %v1196, %v1193
      %v1238 = vunpack.c.l.b16 %v1139
      %v1239 = vunpack.c.h.b16 %v1139
      %v1240 = vunpack.c.l.b16 %v1140
      %v1241 = vunpack.c.h.b16 %v1140
      %v1242 = vunpack.c.l.b16 %v1141
      %v1243 = vunpack.c.h.b16 %v1141
      %v1244 = vunpack.c.l.b16 %v1142
      %v1245 = vunpack.c.h.b16 %v1142
      %v1246 = vunpack.c.l.b16 %v1143
      %v1247 = vunpack.c.h.b16 %v1143
      %v1248 = vunpack.c.l.b16 %v1144
      %v1249 = vunpack.c.h.b16 %v1144
      %v1250 = vunpack.c.l.b16 %v1145
      %v1251 = vunpack.c.h.b16 %v1145
      %v1252 = vunpack.c.l.b16 %v1146
      %v1253 = vunpack.c.h.b16 %v1146
      %v1254 = vunpack.c.l.b16 %v1147
      %v1255 = vunpack.c.h.b16 %v1147
      %v1256 = vunpack.c.l.b16 %v1148
      %v1257 = vunpack.c.h.b16 %v1148
      %v1258 = vunpack.c.l.b16 %v1149
      %v1259 = vunpack.c.h.b16 %v1149
      %v1260 = vunpack.c.l.b16 %v1150
      %v1261 = vunpack.c.h.b16 %v1150
      %v1262 = vunpack.c.l.b16 %v1151
      %v1263 = vunpack.c.h.b16 %v1151
      %v1264 = vunpack.c.l.b16 %v1152
      %v1265 = vunpack.c.h.b16 %v1152
      %v1266 = vunpack.c.l.b16 %v1153
      %v1267 = vunpack.c.h.b16 %v1153
      %v1268 = vunpack.c.l.b16 %v1154
      %v1269 = vunpack.c.h.b16 %v1154
      %v1270 = vunpack.c.l.b16 %v1155
      %v1271 = vunpack.c.h.b16 %v1155
      %v1272 = vunpack.c.l.b16 %v1156
      %v1273 = vunpack.c.h.b16 %v1156
      %v1274 = vunpack.c.l.b16 %v1157
      %v1275 = vunpack.c.h.b16 %v1157
      %v1276 = vunpack.c.l.b16 %v1158
      %v1277 = vunpack.c.h.b16 %v1158
      %v1278 = vunpack.c.l.b16 %v1159
      %v1279 = vunpack.c.h.b16 %v1159
      %v1280 = vunpack.c.l.b16 %v1160
      %v1281 = vunpack.c.h.b16 %v1160
      %v1282 = vunpack.c.l.b16 %v1161
      %v1283 = vunpack.c.h.b16 %v1161
      %v1284 = vunpack.c.l.b16 %v1162
      %v1285 = vunpack.c.h.b16 %v1162
      %v1286 = vunpack.c.l.b16 %v1163
      %v1287 = vunpack.c.h.b16 %v1163
      %v1288 = vunpack.c.l.b16 %v1164
      %v1289 = vunpack.c.h.b16 %v1164
      %v1290 = vunpack.c.l.b16 %v1165
      %v1291 = vunpack.c.h.b16 %v1165
      %v1292 = vunpack.c.l.b16 %v1166
      %v1293 = vunpack.c.h.b16 %v1166
      %v1294 = vunpack.c.l.b16 %v1167
      %v1295 = vunpack.c.h.b16 %v1167
      %v1296 = vunpack.c.l.b16 %v1168
      %v1297 = vunpack.c.h.b16 %v1168
      %v1298 = vunpack.c.l.b16 %v1169
      %v1299 = vunpack.c.h.b16 %v1169
      %v1300 = vunpack.c.l.b16 %v1170
      %v1301 = vunpack.c.h.b16 %v1170
      %v1302 = vunpack.c.l.b16 %v1171
      %v1303 = vunpack.c.h.b16 %v1171
      %v1304 = vunpack.c.l.b16 %v1172
      %v1305 = vunpack.c.h.b16 %v1172
      %v1306 = vunpack.c.l.b16 %v1173
      %v1307 = vunpack.c.h.b16 %v1173
      %v1308 = vunpack.c.l.b16 %v1174
      %v1309 = vunpack.c.h.b16 %v1174
      %v1310 = vpack.c.b16 %v1240, %v1238
      %v1311 = vpack.c.b16 %v1241, %v1239
      %v1312 = vpack.c.b16 %v1244, %v1242
      %v1313 = vpack.c.b16 %v1245, %v1243
      %v1314 = vpack.c.b16 %v1248, %v1246
      %v1315 = vpack.c.b16 %v1249, %v1247
      %v1316 = vpack.c.b16 %v1252, %v1250
      %v1317 = vpack.c.b16 %v1253, %v1251
      %v1318 = vpack.c.b16 %v1256, %v1254
      %v1319 = vpack.c.b16 %v1257, %v1255
      %v1320 = vpack.c.b16 %v1260, %v1258
      %v1321 = vpack.c.b16 %v1261, %v1259
      %v1322 = vpack.c.b16 %v1264, %v1262
      %v1323 = vpack.c.b16 %v1265, %v1263
      %v1324 = vpack.c.b16 %v1268, %v1266
      %v1325 = vpack.c.b16 %v1269, %v1267
      %v1326 = vpack.c.b16 %v1272, %v1270
      %v1327 = vpack.c.b16 %v1273, %v1271
      %v1328 = vpack.c.b16 %v1276, %v1274
      %v1329 = vpack.c.b16 %v1277, %v1275
      %v1330 = vpack.c.b16 %v1280, %v1278
      %v1331 = vpack.c.b16 %v1281, %v1279
      %v1332 = vpack.c.b16 %v1284, %v1282
      %v1333 = vpack.c.b16 %v1285, %v1283
      %v1334 = vpack.c.b16 %v1288, %v1286
      %v1335 = vpack.c.b16 %v1289, %v1287
      %v1336 = vpack.c.b16 %v1292, %v1290
      %v1337 = vpack.c.b16 %v1293, %v1291
      %v1338 = vpack.c.b16 %v1296, %v1294
      %v1339 = vpack.c.b16 %v1297, %v1295
      %v1340 = vpack.c.b16 %v1300, %v1298
      %v1341 = vpack.c.b16 %v1301, %v1299
      %v1342 = vpack.c.b16 %v1304, %v1302
      %v1343 = vpack.c.b16 %v1305, %v1303
      %v1344 = vpack.c.b16 %v1308, %v1306
      %v1345 = vpack.c.b16 %v1309, %v1307
      %vm1382 = vcmask 261120
      %v1384 = vsel %vm1382, %v1199, 0
      %1386 = vmatprep.subr.bf16.mxu0 %v1325
      %1387 = vmatpush1.bf16.msra.mxu0 %v1324
      %1388 = vmatprep.subr.bf16.mxu0 %v1323
      %1389 = vmatpush1.bf16.msra.mxu0 %v1322
      %1390 = vmatprep.subr.bf16.mxu0 %v1321
      %1391 = vmatpush1.bf16.msra.mxu0 %v1320
      %1392 = vmatprep.subr.bf16.mxu0 %v1319
      %1393 = vmatpush1.bf16.msra.mxu0 %v1318
      %1394 = vmatprep.subr.bf16.mxu0 %v1317
      %1395 = vmatpush1.bf16.msra.mxu0 %v1316
      %1396 = vmatprep.subr.bf16.mxu0 %v1315
      %1397 = vmatpush1.bf16.msra.mxu0 %v1314
      %1398 = vmatprep.subr.bf16.mxu0 %v1313
      %1399 = vmatpush1.bf16.msra.mxu0 %v1312
      %1400 = vmatprep.subr.bf16.mxu0 %v1311
      %1401 = vmatpush1.bf16.msra.mxu0 %v1310
      %1402 = vmatprep.subr.bf16.mxu0 %v1341
      %1403 = vmatpush2.bf16.msra.mxu0 %v1340
      %1404 = vmatprep.subr.bf16.mxu0 %v1339
      %1405 = vmatpush2.bf16.msra.mxu0 %v1338
      %1406 = vmatprep.subr.bf16.mxu0 %v1337
      %1407 = vmatpush2.bf16.msra.mxu0 %v1336
      %1408 = vmatprep.subr.bf16.mxu0 %v1335
      %1409 = vmatpush2.bf16.msra.mxu0 %v1334
      %1410 = vmatprep.subr.bf16.mxu0 %v1333
      %1411 = vmatpush2.bf16.msra.mxu0 %v1332
      %1412 = vmatprep.subr.bf16.mxu0 %v1331
      %1413 = vmatpush2.bf16.msra.mxu0 %v1330
      %1414 = vmatprep.subr.bf16.mxu0 %v1329
      %1415 = vmatpush2.bf16.msra.mxu0 %v1328
      %1416 = vmatprep.subr.bf16.mxu0 %v1327
      %1417 = vmatpush2.bf16.msra.mxu0 %v1326
      %1418 = vmatprep.mubr.bf16.mxu0 %v1198
      %1419 = vmatmul.mubr.bf16.gmra.mxu0 %v1197
      %v1420 = vpop.f32.mrf.mxu0
      %v1421 = vadd.f32 %v1180, %v1420
      %v1422 = vpop.f32.mrf.mxu0
      %v1423 = vadd.f32 %v1180, %v1422
      %v1424 = vpop.f32.mrf.mxu0
      %v1425 = vadd.f32 %v1185, %v1424
      %v1426 = vpop.f32.mrf.mxu0
      %v1427 = vadd.f32 %v1185, %v1426
      %1428 = vdwg.mxu0
      %1429 = vmatprep.subr.bf16.mxu0 0
      %1430 = vmatpush1.bf16.msra.mxu0 0
      %1431 = vmatprep.subr.bf16.mxu0 0
      %1432 = vmatpush1.bf16.msra.mxu0 0
      %1433 = vmatprep.subr.bf16.mxu0 0
      %1434 = vmatpush1.bf16.msra.mxu0 0
      %1435 = vmatprep.subr.bf16.mxu0 0
      %1436 = vmatpush1.bf16.msra.mxu0 0
      %1437 = vmatprep.subr.bf16.mxu0 0
      %1438 = vmatpush1.bf16.msra.mxu0 0
      %1439 = vmatprep.subr.bf16.mxu0 0
      %1440 = vmatpush1.bf16.msra.mxu0 0
      %1441 = vmatprep.subr.bf16.mxu0 %v1345
      %1442 = vmatpush1.bf16.msra.mxu0 %v1344
      %1443 = vmatprep.subr.bf16.mxu0 %v1343
      %1444 = vmatpush1.bf16.msra.mxu0 %v1342
      %1445 = vmatprep.subr.bf16.mxu0 0
      %1446 = vmatpush2.bf16.msra.mxu0 0
      %1447 = vmatprep.subr.bf16.mxu0 0
      %1448 = vmatpush2.bf16.msra.mxu0 0
      %1449 = vmatprep.subr.bf16.mxu0 0
      %1450 = vmatpush2.bf16.msra.mxu0 0
      %1451 = vmatprep.subr.bf16.mxu0 0
      %1452 = vmatpush2.bf16.msra.mxu0 0
      %1453 = vmatprep.subr.bf16.mxu0 0
      %1454 = vmatpush2.bf16.msra.mxu0 0
      %1455 = vmatprep.subr.bf16.mxu0 0
      %1456 = vmatpush2.bf16.msra.mxu0 0
      %1457 = vmatprep.subr.bf16.mxu0 0
      %1458 = vmatpush2.bf16.msra.mxu0 0
      %1459 = vmatprep.subr.bf16.mxu0 0
      %1460 = vmatpush2.bf16.msra.mxu0 0
      %1461 = vmatprep.mubr.bf16.mxu0 0
      %1462 = vmatmul.mubr.bf16.gmra.mxu0 %v1384
      %v1463 = vpop.f32.mrf.mxu0
      %v1464 = vadd.f32 %v1421, %v1463
      %v1465 = vpop.f32.mrf.mxu0
      %v1466 = vadd.f32 %v1423, %v1465
      %v1467 = vpop.f32.mrf.mxu0
      %v1468 = vadd.f32 %v1425, %v1467
      %v1469 = vpop.f32.mrf.mxu0
      %v1470 = vadd.f32 %v1427, %v1469
      %1471 = vdwg.mxu0
      %vm1472 = vcmp.gt.f32.partialorder %v1464, 0.0
      %vm1473 = vcmp.gt.f32.partialorder %v1466, 0.0
      %vm1474 = vcmp.gt.f32.partialorder %v1468, 0.0
      %vm1475 = vcmp.gt.f32.partialorder %v1470, 0.0
      %v1476 = vmul.f32 %v1464, 0.2
      %v1477 = vmul.f32 %v1466, 0.2
      %v1478 = vmul.f32 %v1468, 0.2
      %v1479 = vmul.f32 %v1470, 0.2
      %v1480 = vsel %vm1472, %v1464, %v1476
      %v1481 = vsel %vm1473, %v1466, %v1477
      %v1482 = vsel %vm1474, %v1468, %v1478
      %v1483 = vsel %vm1475, %v1470, %v1479
      %1484 = vrot.lane.b32.xlu0 %v1480, 1
      %v1485 = vpop.permute.xlu0 %1484
      %1486 = vrot.lane.b32.xlu0 %v1482, 1
      %v1487 = vpop.permute.xlu0 %1486
      %1488 = vrot.lane.b32.xlu0 %v1481, 1
      %v1489 = vpop.permute.xlu0 %1488
      %1490 = vrot.lane.b32.xlu0 %v1483, 1
      %v1491 = vpop.permute.xlu0 %1490
      %v1492 = vsel %vm427, %v1485, %v1489
      %v1493 = vsel %vm427, %v1487, %v1491
      %v1494 = vsel %vm427, %v1489, %v1485
      %v1495 = vsel %vm427, %v1491, %v1487
      %1496 = vrot.lane.b32.xlu0 %v1480, 113
      %v1497 = vpop.permute.xlu0 %1496
      %1498 = vrot.lane.b32.xlu0 %v1482, 113
      %v1499 = vpop.permute.xlu0 %1498
      %1500 = vrot.lane.b32.xlu0 %v1481, 113
      %v1501 = vpop.permute.xlu0 %1500
      %1502 = vrot.lane.b32.xlu0 %v1483, 113
      %v1503 = vpop.permute.xlu0 %1502
      %v1504 = vsel %vm440, %v1497, %v1501
      %v1505 = vsel %vm440, %v1499, %v1503
      %v1506 = vsel %vm440, %v1501, %v1497
      %v1507 = vsel %vm440, %v1503, %v1499
      %v1508 = vsel %vm449, %v1494, %v1504
      %v1509 = vsel %vm450, %v1492, %v1506
      %v1510 = vsel %vm449, %v1495, %v1505
      %v1511 = vsel %vm450, %v1493, %v1507
      %1512 = vrot.lane.b32.xlu0 %v1480, 127
      %v1513 = vpop.permute.xlu0 %1512
      %1514 = vrot.lane.b32.xlu0 %v1482, 127
      %v1515 = vpop.permute.xlu0 %1514
      %1516 = vrot.lane.b32.xlu0 %v1481, 127
      %v1517 = vpop.permute.xlu0 %1516
      %1518 = vrot.lane.b32.xlu0 %v1483, 127
      %v1519 = vpop.permute.xlu0 %1518
      %v1520 = vsel %vm463, %v1513, %v1517
      %v1521 = vsel %vm463, %v1515, %v1519
      %v1522 = vsel %vm463, %v1517, %v1513
      %v1523 = vsel %vm463, %v1519, %v1515
      %1524 = vrot.lane.b32.xlu0 %v1480, 15
      %v1525 = vpop.permute.xlu0 %1524
      %1526 = vrot.lane.b32.xlu0 %v1482, 15
      %v1527 = vpop.permute.xlu0 %1526
      %1528 = vrot.lane.b32.xlu0 %v1481, 15
      %v1529 = vpop.permute.xlu0 %1528
      %1530 = vrot.lane.b32.xlu0 %v1483, 15
      %v1531 = vpop.permute.xlu0 %1530
      %v1532 = vsel %vm476, %v1525, %v1529
      %v1533 = vsel %vm476, %v1527, %v1531
      %v1534 = vsel %vm476, %v1529, %v1525
      %v1535 = vsel %vm476, %v1531, %v1527
      %v1536 = vsel %vm485, %v1520, %v1534
      %v1537 = vsel %vm486, %v1522, %v1532
      %v1538 = vsel %vm485, %v1521, %v1535
      %v1539 = vsel %vm486, %v1523, %v1533
      %1540 = vrot.lane.b32.xlu0 %v1508, 16
      %v1541 = vpop.permute.xlu0 %1540
      %1542 = vrot.lane.b32.xlu0 %v1510, 16
      %v1543 = vpop.permute.xlu0 %1542
      %1544 = vrot.lane.b32.xlu0 %v1509, 16
      %v1545 = vpop.permute.xlu0 %1544
      %1546 = vrot.lane.b32.xlu0 %v1511, 16
      %v1547 = vpop.permute.xlu0 %1546
      %v1548 = vsel %vm499, %v1541, %v1545
      %v1549 = vsel %vm499, %v1543, %v1547
      %v1550 = vsel %vm499, %v1545, %v1541
      %v1551 = vsel %vm499, %v1547, %v1543
      %v1552 = vpack.c.bf16 %v1551, %v1550
      %v1553 = vpack.c.bf16 %v1549, %v1548
      %v1556 = vunpack.c.l.b16 %v1552
      %v1557 = vunpack.c.l.b16 %v1553
      %v1558 = vunpack.c.h.b16 %v1552
      %v1559 = vunpack.c.h.b16 %v1553
      %v1560 = vpack.c.b16 %v1557, %v1556
      %v1561 = vpack.c.b16 %v1559, %v1558
      %1564 = vst [vmem:[#allocation2 + $0x120] sm:$0xff] %v1560
      %1565 = vst [vmem:[#allocation2 + $0x128] sm:$0xff] %v1561
      %1566 = vrot.lane.b32.xlu0 %v1480, 16
      %v1567 = vpop.permute.xlu0 %1566
      %1568 = vrot.lane.b32.xlu0 %v1482, 16
      %v1569 = vpop.permute.xlu0 %1568
      %1570 = vrot.lane.b32.xlu0 %v1481, 16
      %v1571 = vpop.permute.xlu0 %1570
      %1572 = vrot.lane.b32.xlu0 %v1483, 16
      %v1573 = vpop.permute.xlu0 %1572
      %v1574 = vsel %vm499, %v1567, %v1571
      %v1575 = vsel %vm499, %v1569, %v1573
      %v1576 = vsel %vm499, %v1571, %v1567
      %v1577 = vsel %vm499, %v1573, %v1569
      %v1578 = vpack.c.bf16 %v1577, %v1576
      %v1579 = vpack.c.bf16 %v1575, %v1574
      %v1582 = vunpack.c.l.b16 %v1578
      %v1583 = vunpack.c.l.b16 %v1579
      %v1584 = vunpack.c.h.b16 %v1578
      %v1585 = vunpack.c.h.b16 %v1579
      %v1586 = vpack.c.b16 %v1583, %v1582
      %v1587 = vpack.c.b16 %v1585, %v1584
      %1590 = vst [vmem:[#allocation2 + $0x130] sm:$0xff] %v1586
      %1591 = vst [vmem:[#allocation2 + $0x138] sm:$0xff] %v1587
      %1592 = vrot.lane.b32.xlu0 %v1536, 16
      %v1593 = vpop.permute.xlu0 %1592
      %1594 = vrot.lane.b32.xlu0 %v1538, 16
      %v1595 = vpop.permute.xlu0 %1594
      %1596 = vrot.lane.b32.xlu0 %v1537, 16
      %v1597 = vpop.permute.xlu0 %1596
      %1598 = vrot.lane.b32.xlu0 %v1539, 16
      %v1599 = vpop.permute.xlu0 %1598
      %v1600 = vsel %vm499, %v1593, %v1597
      %v1601 = vsel %vm499, %v1595, %v1599
      %v1602 = vsel %vm499, %v1597, %v1593
      %v1603 = vsel %vm499, %v1599, %v1595
      %v1604 = vpack.c.bf16 %v1603, %v1602
      %v1605 = vpack.c.bf16 %v1601, %v1600
      %v1608 = vunpack.c.l.b16 %v1604
      %v1609 = vunpack.c.l.b16 %v1605
      %v1610 = vunpack.c.h.b16 %v1604
      %v1611 = vunpack.c.h.b16 %v1605
      %v1612 = vpack.c.b16 %v1609, %v1608
      %v1613 = vpack.c.b16 %v1611, %v1610
      %1616 = vst [vmem:[#allocation2 + $0x140] sm:$0xff] %v1612
      %1617 = vst [vmem:[#allocation2 + $0x148] sm:$0xff] %v1613
      %v1618 = vpack.c.bf16 %v1510, %v1508
      %v1619 = vpack.c.bf16 %v1511, %v1509
      %v1622 = vunpack.c.l.b16 %v1618
      %v1623 = vunpack.c.l.b16 %v1619
      %v1624 = vunpack.c.h.b16 %v1618
      %v1625 = vunpack.c.h.b16 %v1619
      %v1626 = vpack.c.b16 %v1623, %v1622
      %v1627 = vpack.c.b16 %v1625, %v1624
      %1630 = vst [vmem:[#allocation2 + $0x150] sm:$0xff] %v1626
      %1631 = vst [vmem:[#allocation2 + $0x158] sm:$0xff] %v1627
      %v1632 = vpack.c.bf16 %v1482, %v1480
      %v1633 = vpack.c.bf16 %v1483, %v1481
      %v1636 = vunpack.c.l.b16 %v1632
      %v1637 = vunpack.c.l.b16 %v1633
      %v1638 = vunpack.c.h.b16 %v1632
      %v1639 = vunpack.c.h.b16 %v1633
      %v1640 = vpack.c.b16 %v1637, %v1636
      %v1641 = vpack.c.b16 %v1639, %v1638
      %1644 = vst [vmem:[#allocation2 + $0x160] sm:$0xff] %v1640
      %1645 = vst [vmem:[#allocation2 + $0x168] sm:$0xff] %v1641
      %v1646 = vpack.c.bf16 %v1538, %v1536
      %v1647 = vpack.c.bf16 %v1539, %v1537
      %v1650 = vunpack.c.l.b16 %v1646
      %v1651 = vunpack.c.l.b16 %v1647
      %v1652 = vunpack.c.h.b16 %v1646
      %v1653 = vunpack.c.h.b16 %v1647
      %v1654 = vpack.c.b16 %v1651, %v1650
      %v1655 = vpack.c.b16 %v1653, %v1652
      %1658 = vst [vmem:[#allocation2 + $0x170] sm:$0xff] %v1654
      %1659 = vst [vmem:[#allocation2 + $0x178] sm:$0xff] %v1655
      %1660 = vrot.lane.b32.xlu0 %v1508, 112
      %v1661 = vpop.permute.xlu0 %1660
      %1662 = vrot.lane.b32.xlu0 %v1510, 112
      %v1663 = vpop.permute.xlu0 %1662
      %1664 = vrot.lane.b32.xlu0 %v1509, 112
      %v1665 = vpop.permute.xlu0 %1664
      %1666 = vrot.lane.b32.xlu0 %v1511, 112
      %v1667 = vpop.permute.xlu0 %1666
      %v1668 = vsel %vm620, %v1661, %v1665
      %v1669 = vsel %vm620, %v1663, %v1667
      %v1670 = vsel %vm620, %v1665, %v1661
      %v1671 = vsel %vm620, %v1667, %v1663
      %v1672 = vpack.c.bf16 %v1669, %v1668
      %v1673 = vpack.c.bf16 %v1671, %v1670
      %v1676 = vunpack.c.l.b16 %v1672
      %v1677 = vunpack.c.l.b16 %v1673
      %v1678 = vunpack.c.h.b16 %v1672
      %v1679 = vunpack.c.h.b16 %v1673
      %v1680 = vpack.c.b16 %v1677, %v1676
      %v1681 = vpack.c.b16 %v1679, %v1678
      %1684 = vst [vmem:[#allocation2 + $0x180] sm:$0xff] %v1680
      %1685 = vst [vmem:[#allocation2 + $0x188] sm:$0xff] %v1681
      %1686 = vrot.lane.b32.xlu0 %v1480, 112
      %v1687 = vpop.permute.xlu0 %1686
      %1688 = vrot.lane.b32.xlu0 %v1482, 112
      %v1689 = vpop.permute.xlu0 %1688
      %1690 = vrot.lane.b32.xlu0 %v1481, 112
      %v1691 = vpop.permute.xlu0 %1690
      %1692 = vrot.lane.b32.xlu0 %v1483, 112
      %v1693 = vpop.permute.xlu0 %1692
      %v1694 = vsel %vm620, %v1687, %v1691
      %v1695 = vsel %vm620, %v1689, %v1693
      %v1696 = vsel %vm620, %v1691, %v1687
      %v1697 = vsel %vm620, %v1693, %v1689
      %v1698 = vpack.c.bf16 %v1695, %v1694
      %v1699 = vpack.c.bf16 %v1697, %v1696
      %v1702 = vunpack.c.l.b16 %v1698
      %v1703 = vunpack.c.l.b16 %v1699
      %v1704 = vunpack.c.h.b16 %v1698
      %v1705 = vunpack.c.h.b16 %v1699
      %v1706 = vpack.c.b16 %v1703, %v1702
      %v1707 = vpack.c.b16 %v1705, %v1704
      %1710 = vst [vmem:[#allocation2 + $0x190] sm:$0xff] %v1706
      %1711 = vst [vmem:[#allocation2 + $0x198] sm:$0xff] %v1707
      %1712 = vrot.lane.b32.xlu0 %v1536, 112
      %v1713 = vpop.permute.xlu0 %1712
      %1714 = vrot.lane.b32.xlu0 %v1538, 112
      %v1715 = vpop.permute.xlu0 %1714
      %1716 = vrot.lane.b32.xlu0 %v1537, 112
      %v1717 = vpop.permute.xlu0 %1716
      %1718 = vrot.lane.b32.xlu0 %v1539, 112
      %v1719 = vpop.permute.xlu0 %1718
      %v1720 = vsel %vm620, %v1713, %v1717
      %v1721 = vsel %vm620, %v1715, %v1719
      %v1722 = vsel %vm620, %v1717, %v1713
      %v1723 = vsel %vm620, %v1719, %v1715
      %v1724 = vpack.c.bf16 %v1721, %v1720
      %v1725 = vpack.c.bf16 %v1723, %v1722
      %v1728 = vunpack.c.l.b16 %v1724
      %v1729 = vunpack.c.l.b16 %v1725
      %v1730 = vunpack.c.h.b16 %v1724
      %v1731 = vunpack.c.h.b16 %v1725
      %v1732 = vpack.c.b16 %v1729, %v1728
      %v1733 = vpack.c.b16 %v1731, %v1730
      %1736 = vst [vmem:[#allocation2 + $0x1a0] sm:$0xff] %v1732
      %1737 = vst [vmem:[#allocation2 + $0x1a8] sm:$0xff] %v1733
      %v1738 = vld [vmem:[%s5] sm:$0xff]
      %v1739 = vld [vmem:[%s5 + $0x8] sm:$0xff]
      %v1740 = vld [vmem:[%s5 + $0x10] sm:$0xff]
      %v1741 = vld [vmem:[%s5 + $0x18] sm:$0xff]
      %v1742 = vld [vmem:[#allocation2] sm:$0xff]
      %v1743 = vld [vmem:[#allocation2 + $0x8] sm:$0xff]
      %v1744 = vld [vmem:[#allocation2 + $0x10] sm:$0xff]
      %v1745 = vld [vmem:[#allocation2 + $0x18] sm:$0xff]
      %v1746 = vld [vmem:[#allocation2 + $0x20] sm:$0xff]
      %v1747 = vld [vmem:[#allocation2 + $0x28] sm:$0xff]
      %v1748 = vld [vmem:[#allocation2 + $0x30] sm:$0xff]
      %v1749 = vld [vmem:[#allocation2 + $0x38] sm:$0xff]
      %v1750 = vld [vmem:[#allocation2 + $0x40] sm:$0xff]
      %v1751 = vld [vmem:[#allocation2 + $0x48] sm:$0xff]
      %v1752 = vld [vmem:[#allocation2 + $0x50] sm:$0xff]
      %v1753 = vld [vmem:[#allocation2 + $0x58] sm:$0xff]
      %v1754 = vld [vmem:[#allocation2 + $0x60] sm:$0xff]
      %v1755 = vld [vmem:[#allocation2 + $0x68] sm:$0xff]
      %v1756 = vld [vmem:[#allocation2 + $0x70] sm:$0xff]
      %v1757 = vld [vmem:[#allocation2 + $0x78] sm:$0xff]
      %v1758 = vld [vmem:[#allocation2 + $0x80] sm:$0xff]
      %v1759 = vld [vmem:[#allocation2 + $0x88] sm:$0xff]
      %v1760 = vld [vmem:[#allocation2 + $0x90] sm:$0xff]
      %v1761 = vld [vmem:[#allocation2 + $0x98] sm:$0xff]
      %v1762 = vld [vmem:[#allocation2 + $0xa0] sm:$0xff]
      %v1763 = vld [vmem:[#allocation2 + $0xa8] sm:$0xff]
      %v1764 = vld [vmem:[#allocation2 + $0xb0] sm:$0xff]
      %v1765 = vld [vmem:[#allocation2 + $0xb8] sm:$0xff]
      %v1766 = vld [vmem:[#allocation2 + $0xc0] sm:$0xff]
      %v1767 = vld [vmem:[#allocation2 + $0xc8] sm:$0xff]
      %v1768 = vld [vmem:[#allocation2 + $0xd0] sm:$0xff]
      %v1769 = vld [vmem:[#allocation2 + $0xd8] sm:$0xff]
      %v1770 = vld [vmem:[#allocation2 + $0xe0] sm:$0xff]
      %v1771 = vld [vmem:[#allocation2 + $0xe8] sm:$0xff]
      %v1772 = vld [vmem:[#allocation2 + $0xf0] sm:$0xff]
      %v1773 = vld [vmem:[#allocation2 + $0xf8] sm:$0xff]
      %v1774 = vld [vmem:[#allocation2 + $0x100] sm:$0xff]
      %v1775 = vld [vmem:[#allocation2 + $0x108] sm:$0xff]
      %v1776 = vld [vmem:[#allocation2 + $0x110] sm:$0xff]
      %v1777 = vld [vmem:[#allocation2 + $0x118] sm:$0xff]
      %v1778 = vld [vmem:[#allocation2 + $0x120] sm:$0xff]
      %v1779 = vld [vmem:[#allocation2 + $0x128] sm:$0xff]
      %v1780 = vld [vmem:[#allocation2 + $0x130] sm:$0xff]
      %v1781 = vld [vmem:[#allocation2 + $0x138] sm:$0xff]
      %v1782 = vld [vmem:[#allocation2 + $0x140] sm:$0xff]
      %v1783 = vld [vmem:[#allocation2 + $0x148] sm:$0xff]
      %v1784 = vld [vmem:[#allocation2 + $0x150] sm:$0xff]
      %v1785 = vld [vmem:[#allocation2 + $0x158] sm:$0xff]
      %v1786 = vld [vmem:[#allocation2 + $0x160] sm:$0xff]
      %v1787 = vld [vmem:[#allocation2 + $0x168] sm:$0xff]
      %v1788 = vld [vmem:[#allocation2 + $0x170] sm:$0xff]
      %v1789 = vld [vmem:[#allocation2 + $0x178] sm:$0xff]
      %v1790 = vld [vmem:[#allocation2 + $0x180] sm:$0xff]
      %v1791 = vld [vmem:[#allocation2 + $0x188] sm:$0xff]
      %v1792 = vld [vmem:[#allocation2 + $0x190] sm:$0xff]
      %v1793 = vld [vmem:[#allocation2 + $0x198] sm:$0xff]
      %v1794 = vld [vmem:[#allocation2 + $0x1a0] sm:$0xff]
      %v1795 = vld [vmem:[#allocation2 + $0x1a8] sm:$0xff]
      %v1796 = vld [vmem:[%s6] sm:$0xff]
      %v1797 = vld [vmem:[%s6 + $0x8] sm:$0xff]
      %1799 = vset.pattern.permute.xlu0 0
      %1800 = vperm.xlu0 %1799, %v1796
      %v1801 = vpop.permute.xlu0 %1800
      %1804 = vset.pattern.permute.xlu0 0
      %1805 = vperm.xlu0 %1804, %v1797
      %v1806 = vpop.permute.xlu0 %1805
      %v1812 = vunpack.c.l.b16 %v1738
      %v1813 = vunpack.c.h.b16 %v1738
      %v1814 = vunpack.c.l.b16 %v1739
      %v1815 = vunpack.c.h.b16 %v1739
      %v1816 = vunpack.c.l.b16 %v1740
      %v1817 = vunpack.c.h.b16 %v1740
      %v1818 = vunpack.c.l.b16 %v1741
      %v1819 = vunpack.c.h.b16 %v1741
      %v1820 = vpack.c.b16 %v1816, %v1812
      %v1821 = vpack.c.b16 %v1817, %v1813
      %v1822 = vpack.c.b16 %v1818, %v1814
      %v1823 = vpack.c.b16 %v1819, %v1815
      %v1881 = vunpack.c.l.b16 %v1742
      %v1882 = vunpack.c.h.b16 %v1742
      %v1883 = vunpack.c.l.b16 %v1743
      %v1884 = vunpack.c.h.b16 %v1743
      %v1885 = vunpack.c.l.b16 %v1744
      %v1886 = vunpack.c.h.b16 %v1744
      %v1887 = vunpack.c.l.b16 %v1745
      %v1888 = vunpack.c.h.b16 %v1745
      %v1889 = vunpack.c.l.b16 %v1746
      %v1890 = vunpack.c.h.b16 %v1746
      %v1891 = vunpack.c.l.b16 %v1747
      %v1892 = vunpack.c.h.b16 %v1747
      %v1893 = vunpack.c.l.b16 %v1748
      %v1894 = vunpack.c.h.b16 %v1748
      %v1895 = vunpack.c.l.b16 %v1749
      %v1896 = vunpack.c.h.b16 %v1749
      %v1897 = vunpack.c.l.b16 %v1750
      %v1898 = vunpack.c.h.b16 %v1750
      %v1899 = vunpack.c.l.b16 %v1751
      %v1900 = vunpack.c.h.b16 %v1751
      %v1901 = vunpack.c.l.b16 %v1752
      %v1902 = vunpack.c.h.b16 %v1752
      %v1903 = vunpack.c.l.b16 %v1753
      %v1904 = vunpack.c.h.b16 %v1753
      %v1905 = vunpack.c.l.b16 %v1754
      %v1906 = vunpack.c.h.b16 %v1754
      %v1907 = vunpack.c.l.b16 %v1755
      %v1908 = vunpack.c.h.b16 %v1755
      %v1909 = vunpack.c.l.b16 %v1756
      %v1910 = vunpack.c.h.b16 %v1756
      %v1911 = vunpack.c.l.b16 %v1757
      %v1912 = vunpack.c.h.b16 %v1757
      %v1913 = vunpack.c.l.b16 %v1758
      %v1914 = vunpack.c.h.b16 %v1758
      %v1915 = vunpack.c.l.b16 %v1759
      %v1916 = vunpack.c.h.b16 %v1759
      %v1917 = vunpack.c.l.b16 %v1760
      %v1918 = vunpack.c.h.b16 %v1760
      %v1919 = vunpack.c.l.b16 %v1761
      %v1920 = vunpack.c.h.b16 %v1761
      %v1921 = vunpack.c.l.b16 %v1762
      %v1922 = vunpack.c.h.b16 %v1762
      %v1923 = vunpack.c.l.b16 %v1763
      %v1924 = vunpack.c.h.b16 %v1763
      %v1925 = vunpack.c.l.b16 %v1764
      %v1926 = vunpack.c.h.b16 %v1764
      %v1927 = vunpack.c.l.b16 %v1765
      %v1928 = vunpack.c.h.b16 %v1765
      %v1929 = vunpack.c.l.b16 %v1766
      %v1930 = vunpack.c.h.b16 %v1766
      %v1931 = vunpack.c.l.b16 %v1767
      %v1932 = vunpack.c.h.b16 %v1767
      %v1933 = vunpack.c.l.b16 %v1768
      %v1934 = vunpack.c.h.b16 %v1768
      %v1935 = vunpack.c.l.b16 %v1769
      %v1936 = vunpack.c.h.b16 %v1769
      %v1937 = vunpack.c.l.b16 %v1770
      %v1938 = vunpack.c.h.b16 %v1770
      %v1939 = vunpack.c.l.b16 %v1771
      %v1940 = vunpack.c.h.b16 %v1771
      %v1941 = vunpack.c.l.b16 %v1772
      %v1942 = vunpack.c.h.b16 %v1772
      %v1943 = vunpack.c.l.b16 %v1773
      %v1944 = vunpack.c.h.b16 %v1773
      %v1945 = vunpack.c.l.b16 %v1774
      %v1946 = vunpack.c.h.b16 %v1774
      %v1947 = vunpack.c.l.b16 %v1775
      %v1948 = vunpack.c.h.b16 %v1775
      %v1949 = vunpack.c.l.b16 %v1776
      %v1950 = vunpack.c.h.b16 %v1776
      %v1951 = vunpack.c.l.b16 %v1777
      %v1952 = vunpack.c.h.b16 %v1777
      %v1953 = vunpack.c.l.b16 %v1778
      %v1954 = vunpack.c.h.b16 %v1778
      %v1955 = vunpack.c.l.b16 %v1779
      %v1956 = vunpack.c.h.b16 %v1779
      %v1957 = vunpack.c.l.b16 %v1780
      %v1958 = vunpack.c.h.b16 %v1780
      %v1959 = vunpack.c.l.b16 %v1781
      %v1960 = vunpack.c.h.b16 %v1781
      %v1961 = vunpack.c.l.b16 %v1782
      %v1962 = vunpack.c.h.b16 %v1782
      %v1963 = vunpack.c.l.b16 %v1783
      %v1964 = vunpack.c.h.b16 %v1783
      %v1965 = vunpack.c.l.b16 %v1784
      %v1966 = vunpack.c.h.b16 %v1784
      %v1967 = vunpack.c.l.b16 %v1785
      %v1968 = vunpack.c.h.b16 %v1785
      %v1969 = vunpack.c.l.b16 %v1786
      %v1970 = vunpack.c.h.b16 %v1786
      %v1971 = vunpack.c.l.b16 %v1787
      %v1972 = vunpack.c.h.b16 %v1787
      %v1973 = vunpack.c.l.b16 %v1788
      %v1974 = vunpack.c.h.b16 %v1788
      %v1975 = vunpack.c.l.b16 %v1789
      %v1976 = vunpack.c.h.b16 %v1789
      %v1977 = vunpack.c.l.b16 %v1790
      %v1978 = vunpack.c.h.b16 %v1790
      %v1979 = vunpack.c.l.b16 %v1791
      %v1980 = vunpack.c.h.b16 %v1791
      %v1981 = vunpack.c.l.b16 %v1792
      %v1982 = vunpack.c.h.b16 %v1792
      %v1983 = vunpack.c.l.b16 %v1793
      %v1984 = vunpack.c.h.b16 %v1793
      %v1985 = vunpack.c.l.b16 %v1794
      %v1986 = vunpack.c.h.b16 %v1794
      %v1987 = vunpack.c.l.b16 %v1795
      %v1988 = vunpack.c.h.b16 %v1795
      %v1989 = vpack.c.b16 %v1883, %v1881
      %v1990 = vpack.c.b16 %v1884, %v1882
      %v1991 = vpack.c.b16 %v1887, %v1885
      %v1992 = vpack.c.b16 %v1888, %v1886
      %v1993 = vpack.c.b16 %v1891, %v1889
      %v1994 = vpack.c.b16 %v1892, %v1890
      %v1995 = vpack.c.b16 %v1895, %v1893
      %v1996 = vpack.c.b16 %v1896, %v1894
      %v1997 = vpack.c.b16 %v1899, %v1897
      %v1998 = vpack.c.b16 %v1900, %v1898
      %v1999 = vpack.c.b16 %v1903, %v1901
      %v2000 = vpack.c.b16 %v1904, %v1902
      %v2001 = vpack.c.b16 %v1907, %v1905
      %v2002 = vpack.c.b16 %v1908, %v1906
      %v2003 = vpack.c.b16 %v1911, %v1909
      %v2004 = vpack.c.b16 %v1912, %v1910
      %v2005 = vpack.c.b16 %v1915, %v1913
      %v2006 = vpack.c.b16 %v1916, %v1914
      %v2007 = vpack.c.b16 %v1919, %v1917
      %v2008 = vpack.c.b16 %v1920, %v1918
      %v2009 = vpack.c.b16 %v1923, %v1921
      %v2010 = vpack.c.b16 %v1924, %v1922
      %v2011 = vpack.c.b16 %v1927, %v1925
      %v2012 = vpack.c.b16 %v1928, %v1926
      %v2013 = vpack.c.b16 %v1931, %v1929
      %v2014 = vpack.c.b16 %v1932, %v1930
      %v2015 = vpack.c.b16 %v1935, %v1933
      %v2016 = vpack.c.b16 %v1936, %v1934
      %v2017 = vpack.c.b16 %v1939, %v1937
      %v2018 = vpack.c.b16 %v1940, %v1938
      %v2019 = vpack.c.b16 %v1943, %v1941
      %v2020 = vpack.c.b16 %v1944, %v1942
      %v2021 = vpack.c.b16 %v1947, %v1945
      %v2022 = vpack.c.b16 %v1948, %v1946
      %v2023 = vpack.c.b16 %v1951, %v1949
      %v2024 = vpack.c.b16 %v1952, %v1950
      %v2025 = vpack.c.b16 %v1955, %v1953
      %v2026 = vpack.c.b16 %v1956, %v1954
      %v2027 = vpack.c.b16 %v1959, %v1957
      %v2028 = vpack.c.b16 %v1960, %v1958
      %v2029 = vpack.c.b16 %v1963, %v1961
      %v2030 = vpack.c.b16 %v1964, %v1962
      %v2031 = vpack.c.b16 %v1967, %v1965
      %v2032 = vpack.c.b16 %v1968, %v1966
      %v2033 = vpack.c.b16 %v1971, %v1969
      %v2034 = vpack.c.b16 %v1972, %v1970
      %v2035 = vpack.c.b16 %v1975, %v1973
      %v2036 = vpack.c.b16 %v1976, %v1974
      %v2037 = vpack.c.b16 %v1979, %v1977
      %v2038 = vpack.c.b16 %v1980, %v1978
      %v2039 = vpack.c.b16 %v1983, %v1981
      %v2040 = vpack.c.b16 %v1984, %v1982
      %v2041 = vpack.c.b16 %v1987, %v1985
      %v2042 = vpack.c.b16 %v1988, %v1986
      %vm2097 = vcmask 392192
      %v2099 = vsel %vm2097, %v1823, 0
      %2101 = vmatprep.subr.bf16.mxu0 %v2004
      %2102 = vmatpush1.bf16.msra.mxu0 %v2003
      %2103 = vmatprep.subr.bf16.mxu0 %v2002
      %2104 = vmatpush1.bf16.msra.mxu0 %v2001
      %2105 = vmatprep.subr.bf16.mxu0 %v2000
      %2106 = vmatpush1.bf16.msra.mxu0 %v1999
      %2107 = vmatprep.subr.bf16.mxu0 %v1998
      %2108 = vmatpush1.bf16.msra.mxu0 %v1997
      %2109 = vmatprep.subr.bf16.mxu0 %v1996
      %2110 = vmatpush1.bf16.msra.mxu0 %v1995
      %2111 = vmatprep.subr.bf16.mxu0 %v1994
      %2112 = vmatpush1.bf16.msra.mxu0 %v1993
      %2113 = vmatprep.subr.bf16.mxu0 %v1992
      %2114 = vmatpush1.bf16.msra.mxu0 %v1991
      %2115 = vmatprep.subr.bf16.mxu0 %v1990
      %2116 = vmatpush1.bf16.msra.mxu0 %v1989
      %2117 = vmatprep.subr.bf16.mxu0 %v2020
      %2118 = vmatpush2.bf16.msra.mxu0 %v2019
      %2119 = vmatprep.subr.bf16.mxu0 %v2018
      %2120 = vmatpush2.bf16.msra.mxu0 %v2017
      %2121 = vmatprep.subr.bf16.mxu0 %v2016
      %2122 = vmatpush2.bf16.msra.mxu0 %v2015
      %2123 = vmatprep.subr.bf16.mxu0 %v2014
      %2124 = vmatpush2.bf16.msra.mxu0 %v2013
      %2125 = vmatprep.subr.bf16.mxu0 %v2012
      %2126 = vmatpush2.bf16.msra.mxu0 %v2011
      %2127 = vmatprep.subr.bf16.mxu0 %v2010
      %2128 = vmatpush2.bf16.msra.mxu0 %v2009
      %2129 = vmatprep.subr.bf16.mxu0 %v2008
      %2130 = vmatpush2.bf16.msra.mxu0 %v2007
      %2131 = vmatprep.subr.bf16.mxu0 %v2006
      %2132 = vmatpush2.bf16.msra.mxu0 %v2005
      %2133 = vmatprep.mubr.bf16.mxu0 %v1821
      %2134 = vmatmul.mubr.bf16.gmra.mxu0 %v1820
      %v2135 = vpop.f32.mrf.mxu0
      %v2136 = vadd.f32 %v1801, %v2135
      %v2137 = vpop.f32.mrf.mxu0
      %v2138 = vadd.f32 %v1801, %v2137
      %v2139 = vpop.f32.mrf.mxu0
      %v2140 = vadd.f32 %v1806, %v2139
      %v2141 = vpop.f32.mrf.mxu0
      %v2142 = vadd.f32 %v1806, %v2141
      %2143 = vdwg.mxu0
      %2144 = vmatprep.subr.bf16.mxu0 %v2036
      %2145 = vmatpush1.bf16.msra.mxu0 %v2035
      %2146 = vmatprep.subr.bf16.mxu0 %v2034
      %2147 = vmatpush1.bf16.msra.mxu0 %v2033
      %2148 = vmatprep.subr.bf16.mxu0 %v2032
      %2149 = vmatpush1.bf16.msra.mxu0 %v2031
      %2150 = vmatprep.subr.bf16.mxu0 %v2030
      %2151 = vmatpush1.bf16.msra.mxu0 %v2029
      %2152 = vmatprep.subr.bf16.mxu0 %v2028
      %2153 = vmatpush1.bf16.msra.mxu0 %v2027
      %2154 = vmatprep.subr.bf16.mxu0 %v2026
      %2155 = vmatpush1.bf16.msra.mxu0 %v2025
      %2156 = vmatprep.subr.bf16.mxu0 %v2024
      %2157 = vmatpush1.bf16.msra.mxu0 %v2023
      %2158 = vmatprep.subr.bf16.mxu0 %v2022
      %2159 = vmatpush1.bf16.msra.mxu0 %v2021
      %2160 = vmatprep.subr.bf16.mxu0 0
      %2161 = vmatpush2.bf16.msra.mxu0 0
      %2162 = vmatprep.subr.bf16.mxu0 0
      %2163 = vmatpush2.bf16.msra.mxu0 0
      %2164 = vmatprep.subr.bf16.mxu0 0
      %2165 = vmatpush2.bf16.msra.mxu0 0
      %2166 = vmatprep.subr.bf16.mxu0 0
      %2167 = vmatpush2.bf16.msra.mxu0 0
      %2168 = vmatprep.subr.bf16.mxu0 0
      %2169 = vmatpush2.bf16.msra.mxu0 0
      %2170 = vmatprep.subr.bf16.mxu0 %v2042
      %2171 = vmatpush2.bf16.msra.mxu0 %v2041
      %2172 = vmatprep.subr.bf16.mxu0 %v2040
      %2173 = vmatpush2.bf16.msra.mxu0 %v2039
      %2174 = vmatprep.subr.bf16.mxu0 %v2038
      %2175 = vmatpush2.bf16.msra.mxu0 %v2037
      %2176 = vmatprep.mubr.bf16.mxu0 %v2099
      %2177 = vmatmul.mubr.bf16.gmra.mxu0 %v1822
      %v2178 = vpop.f32.mrf.mxu0
      %v2179 = vadd.f32 %v2136, %v2178
      %v2180 = vpop.f32.mrf.mxu0
      %v2181 = vadd.f32 %v2138, %v2180
      %v2182 = vpop.f32.mrf.mxu0
      %v2183 = vadd.f32 %v2140, %v2182
      %v2184 = vpop.f32.mrf.mxu0
      %v2185 = vadd.f32 %v2142, %v2184
      %2186 = vdwg.mxu0
      %vm2187 = vcmp.gt.f32.partialorder %v2179, 0.0
      %vm2188 = vcmp.gt.f32.partialorder %v2181, 0.0
      %vm2189 = vcmp.gt.f32.partialorder %v2183, 0.0
      %vm2190 = vcmp.gt.f32.partialorder %v2185, 0.0
      %v2191 = vmul.f32 %v2179, 0.2
      %v2192 = vmul.f32 %v2181, 0.2
      %v2193 = vmul.f32 %v2183, 0.2
      %v2194 = vmul.f32 %v2185, 0.2
      %v2195 = vsel %vm2187, %v2179, %v2191
      %v2196 = vsel %vm2188, %v2181, %v2192
      %v2197 = vsel %vm2189, %v2183, %v2193
      %v2198 = vsel %vm2190, %v2185, %v2194
      %2199 = vrot.lane.b32.xlu0 %v2195, 1
      %v2200 = vpop.permute.xlu0 %2199
      %2201 = vrot.lane.b32.xlu0 %v2197, 1
      %v2202 = vpop.permute.xlu0 %2201
      %2203 = vrot.lane.b32.xlu0 %v2196, 1
      %v2204 = vpop.permute.xlu0 %2203
      %2205 = vrot.lane.b32.xlu0 %v2198, 1
      %v2206 = vpop.permute.xlu0 %2205
      %v2207 = vsel %vm427, %v2200, %v2204
      %v2208 = vsel %vm427, %v2202, %v2206
      %v2209 = vsel %vm427, %v2204, %v2200
      %v2210 = vsel %vm427, %v2206, %v2202
      %2211 = vrot.lane.b32.xlu0 %v2195, 113
      %v2212 = vpop.permute.xlu0 %2211
      %2213 = vrot.lane.b32.xlu0 %v2197, 113
      %v2214 = vpop.permute.xlu0 %2213
      %2215 = vrot.lane.b32.xlu0 %v2196, 113
      %v2216 = vpop.permute.xlu0 %2215
      %2217 = vrot.lane.b32.xlu0 %v2198, 113
      %v2218 = vpop.permute.xlu0 %2217
      %v2219 = vsel %vm440, %v2212, %v2216
      %v2220 = vsel %vm440, %v2214, %v2218
      %v2221 = vsel %vm440, %v2216, %v2212
      %v2222 = vsel %vm440, %v2218, %v2214
      %v2223 = vsel %vm449, %v2209, %v2219
      %v2224 = vsel %vm450, %v2207, %v2221
      %v2225 = vsel %vm449, %v2210, %v2220
      %v2226 = vsel %vm450, %v2208, %v2222
      %2227 = vrot.lane.b32.xlu0 %v2195, 127
      %v2228 = vpop.permute.xlu0 %2227
      %2229 = vrot.lane.b32.xlu0 %v2197, 127
      %v2230 = vpop.permute.xlu0 %2229
      %2231 = vrot.lane.b32.xlu0 %v2196, 127
      %v2232 = vpop.permute.xlu0 %2231
      %2233 = vrot.lane.b32.xlu0 %v2198, 127
      %v2234 = vpop.permute.xlu0 %2233
      %v2235 = vsel %vm463, %v2228, %v2232
      %v2236 = vsel %vm463, %v2230, %v2234
      %v2237 = vsel %vm463, %v2232, %v2228
      %v2238 = vsel %vm463, %v2234, %v2230
      %2239 = vrot.lane.b32.xlu0 %v2195, 15
      %v2240 = vpop.permute.xlu0 %2239
      %2241 = vrot.lane.b32.xlu0 %v2197, 15
      %v2242 = vpop.permute.xlu0 %2241
      %2243 = vrot.lane.b32.xlu0 %v2196, 15
      %v2244 = vpop.permute.xlu0 %2243
      %2245 = vrot.lane.b32.xlu0 %v2198, 15
      %v2246 = vpop.permute.xlu0 %2245
      %v2247 = vsel %vm476, %v2240, %v2244
      %v2248 = vsel %vm476, %v2242, %v2246
      %v2249 = vsel %vm476, %v2244, %v2240
      %v2250 = vsel %vm476, %v2246, %v2242
      %v2251 = vsel %vm485, %v2235, %v2249
      %v2252 = vsel %vm486, %v2237, %v2247
      %v2253 = vsel %vm485, %v2236, %v2250
      %v2254 = vsel %vm486, %v2238, %v2248
      %2255 = vrot.lane.b32.xlu0 %v2223, 16
      %v2256 = vpop.permute.xlu0 %2255
      %2257 = vrot.lane.b32.xlu0 %v2225, 16
      %v2258 = vpop.permute.xlu0 %2257
      %2259 = vrot.lane.b32.xlu0 %v2224, 16
      %v2260 = vpop.permute.xlu0 %2259
      %2261 = vrot.lane.b32.xlu0 %v2226, 16
      %v2262 = vpop.permute.xlu0 %2261
      %v2263 = vsel %vm499, %v2256, %v2260
      %v2264 = vsel %vm499, %v2258, %v2262
      %v2265 = vsel %vm499, %v2260, %v2256
      %v2266 = vsel %vm499, %v2262, %v2258
      %v2267 = vpack.c.bf16 %v2266, %v2265
      %v2268 = vpack.c.bf16 %v2264, %v2263
      %v2271 = vunpack.c.l.b16 %v2267
      %v2272 = vunpack.c.l.b16 %v2268
      %v2273 = vunpack.c.h.b16 %v2267
      %v2274 = vunpack.c.h.b16 %v2268
      %v2275 = vpack.c.b16 %v2272, %v2271
      %v2276 = vpack.c.b16 %v2274, %v2273
      %2279 = vst [vmem:[#allocation2 + $0x1b0] sm:$0xff] %v2275
      %2280 = vst [vmem:[#allocation2 + $0x1b8] sm:$0xff] %v2276
      %2281 = vrot.lane.b32.xlu0 %v2195, 16
      %v2282 = vpop.permute.xlu0 %2281
      %2283 = vrot.lane.b32.xlu0 %v2197, 16
      %v2284 = vpop.permute.xlu0 %2283
      %2285 = vrot.lane.b32.xlu0 %v2196, 16
      %v2286 = vpop.permute.xlu0 %2285
      %2287 = vrot.lane.b32.xlu0 %v2198, 16
      %v2288 = vpop.permute.xlu0 %2287
      %v2289 = vsel %vm499, %v2282, %v2286
      %v2290 = vsel %vm499, %v2284, %v2288
      %v2291 = vsel %vm499, %v2286, %v2282
      %v2292 = vsel %vm499, %v2288, %v2284
      %v2293 = vpack.c.bf16 %v2292, %v2291
      %v2294 = vpack.c.bf16 %v2290, %v2289
      %v2297 = vunpack.c.l.b16 %v2293
      %v2298 = vunpack.c.l.b16 %v2294
      %v2299 = vunpack.c.h.b16 %v2293
      %v2300 = vunpack.c.h.b16 %v2294
      %v2301 = vpack.c.b16 %v2298, %v2297
      %v2302 = vpack.c.b16 %v2300, %v2299
      %2305 = vst [vmem:[#allocation2 + $0x1c0] sm:$0xff] %v2301
      %2306 = vst [vmem:[#allocation2 + $0x1c8] sm:$0xff] %v2302
      %2307 = vrot.lane.b32.xlu0 %v2251, 16
      %v2308 = vpop.permute.xlu0 %2307
      %2309 = vrot.lane.b32.xlu0 %v2253, 16
      %v2310 = vpop.permute.xlu0 %2309
      %2311 = vrot.lane.b32.xlu0 %v2252, 16
      %v2312 = vpop.permute.xlu0 %2311
      %2313 = vrot.lane.b32.xlu0 %v2254, 16
      %v2314 = vpop.permute.xlu0 %2313
      %v2315 = vsel %vm499, %v2308, %v2312
      %v2316 = vsel %vm499, %v2310, %v2314
      %v2317 = vsel %vm499, %v2312, %v2308
      %v2318 = vsel %vm499, %v2314, %v2310
      %v2319 = vpack.c.bf16 %v2318, %v2317
      %v2320 = vpack.c.bf16 %v2316, %v2315
      %v2323 = vunpack.c.l.b16 %v2319
      %v2324 = vunpack.c.l.b16 %v2320
      %v2325 = vunpack.c.h.b16 %v2319
      %v2326 = vunpack.c.h.b16 %v2320
      %v2327 = vpack.c.b16 %v2324, %v2323
      %v2328 = vpack.c.b16 %v2326, %v2325
      %2331 = vst [vmem:[#allocation2 + $0x1d0] sm:$0xff] %v2327
      %2332 = vst [vmem:[#allocation2 + $0x1d8] sm:$0xff] %v2328
      %v2333 = vpack.c.bf16 %v2225, %v2223
      %v2334 = vpack.c.bf16 %v2226, %v2224
      %v2337 = vunpack.c.l.b16 %v2333
      %v2338 = vunpack.c.l.b16 %v2334
      %v2339 = vunpack.c.h.b16 %v2333
      %v2340 = vunpack.c.h.b16 %v2334
      %v2341 = vpack.c.b16 %v2338, %v2337
      %v2342 = vpack.c.b16 %v2340, %v2339
      %2345 = vst [vmem:[#allocation2 + $0x1e0] sm:$0xff] %v2341
      %2346 = vst [vmem:[#allocation2 + $0x1e8] sm:$0xff] %v2342
      %v2347 = vpack.c.bf16 %v2197, %v2195
      %v2348 = vpack.c.bf16 %v2198, %v2196
      %v2351 = vunpack.c.l.b16 %v2347
      %v2352 = vunpack.c.l.b16 %v2348
      %v2353 = vunpack.c.h.b16 %v2347
      %v2354 = vunpack.c.h.b16 %v2348
      %v2355 = vpack.c.b16 %v2352, %v2351
      %v2356 = vpack.c.b16 %v2354, %v2353
      %2359 = vst [vmem:[#allocation2 + $0x1f0] sm:$0xff] %v2355
      %2360 = vst [vmem:[#allocation2 + $0x1f8] sm:$0xff] %v2356
      %v2361 = vpack.c.bf16 %v2253, %v2251
      %v2362 = vpack.c.bf16 %v2254, %v2252
      %v2365 = vunpack.c.l.b16 %v2361
      %v2366 = vunpack.c.l.b16 %v2362
      %v2367 = vunpack.c.h.b16 %v2361
      %v2368 = vunpack.c.h.b16 %v2362
      %v2369 = vpack.c.b16 %v2366, %v2365
      %v2370 = vpack.c.b16 %v2368, %v2367
      %2373 = vst [vmem:[#allocation2 + $0x200] sm:$0xff] %v2369
      %2374 = vst [vmem:[#allocation2 + $0x208] sm:$0xff] %v2370
      %2375 = vrot.lane.b32.xlu0 %v2223, 112
      %v2376 = vpop.permute.xlu0 %2375
      %2377 = vrot.lane.b32.xlu0 %v2225, 112
      %v2378 = vpop.permute.xlu0 %2377
      %2379 = vrot.lane.b32.xlu0 %v2224, 112
      %v2380 = vpop.permute.xlu0 %2379
      %2381 = vrot.lane.b32.xlu0 %v2226, 112
      %v2382 = vpop.permute.xlu0 %2381
      %v2383 = vsel %vm620, %v2376, %v2380
      %v2384 = vsel %vm620, %v2378, %v2382
      %v2385 = vsel %vm620, %v2380, %v2376
      %v2386 = vsel %vm620, %v2382, %v2378
      %v2387 = vpack.c.bf16 %v2384, %v2383
      %v2388 = vpack.c.bf16 %v2386, %v2385
      %v2391 = vunpack.c.l.b16 %v2387
      %v2392 = vunpack.c.l.b16 %v2388
      %v2393 = vunpack.c.h.b16 %v2387
      %v2394 = vunpack.c.h.b16 %v2388
      %v2395 = vpack.c.b16 %v2392, %v2391
      %v2396 = vpack.c.b16 %v2394, %v2393
      %2399 = vst [vmem:[#allocation2 + $0x210] sm:$0xff] %v2395
      %2400 = vst [vmem:[#allocation2 + $0x218] sm:$0xff] %v2396
      %2401 = vrot.lane.b32.xlu0 %v2195, 112
      %v2402 = vpop.permute.xlu0 %2401
      %2403 = vrot.lane.b32.xlu0 %v2197, 112
      %v2404 = vpop.permute.xlu0 %2403
      %2405 = vrot.lane.b32.xlu0 %v2196, 112
      %v2406 = vpop.permute.xlu0 %2405
      %2407 = vrot.lane.b32.xlu0 %v2198, 112
      %v2408 = vpop.permute.xlu0 %2407
      %v2409 = vsel %vm620, %v2402, %v2406
      %v2410 = vsel %vm620, %v2404, %v2408
      %v2411 = vsel %vm620, %v2406, %v2402
      %v2412 = vsel %vm620, %v2408, %v2404
      %v2413 = vpack.c.bf16 %v2410, %v2409
      %v2414 = vpack.c.bf16 %v2412, %v2411
      %v2417 = vunpack.c.l.b16 %v2413
      %v2418 = vunpack.c.l.b16 %v2414
      %v2419 = vunpack.c.h.b16 %v2413
      %v2420 = vunpack.c.h.b16 %v2414
      %v2421 = vpack.c.b16 %v2418, %v2417
      %v2422 = vpack.c.b16 %v2420, %v2419
      %2425 = vst [vmem:[#allocation2 + $0x220] sm:$0xff] %v2421
      %2426 = vst [vmem:[#allocation2 + $0x228] sm:$0xff] %v2422
      %2427 = vrot.lane.b32.xlu0 %v2251, 112
      %v2428 = vpop.permute.xlu0 %2427
      %2429 = vrot.lane.b32.xlu0 %v2253, 112
      %v2430 = vpop.permute.xlu0 %2429
      %2431 = vrot.lane.b32.xlu0 %v2252, 112
      %v2432 = vpop.permute.xlu0 %2431
      %2433 = vrot.lane.b32.xlu0 %v2254, 112
      %v2434 = vpop.permute.xlu0 %2433
      %v2435 = vsel %vm620, %v2428, %v2432
      %v2436 = vsel %vm620, %v2430, %v2434
      %v2437 = vsel %vm620, %v2432, %v2428
      %v2438 = vsel %vm620, %v2434, %v2430
      %v2439 = vpack.c.bf16 %v2436, %v2435
      %v2440 = vpack.c.bf16 %v2438, %v2437
      %v2443 = vunpack.c.l.b16 %v2439
      %v2444 = vunpack.c.l.b16 %v2440
      %v2445 = vunpack.c.h.b16 %v2439
      %v2446 = vunpack.c.h.b16 %v2440
      %v2447 = vpack.c.b16 %v2444, %v2443
      %v2448 = vpack.c.b16 %v2446, %v2445
      %2451 = vst [vmem:[#allocation2 + $0x230] sm:$0xff] %v2447
      %2452 = vst [vmem:[#allocation2 + $0x238] sm:$0xff] %v2448
      %v2453 = vld [vmem:[%s7] sm:$0xff]
      %v2454 = vld [vmem:[%s7 + $0x8] sm:$0xff]
      %v2455 = vld [vmem:[%s7 + $0x10] sm:$0xf]
      %v2456 = vld [vmem:[%s7 + $0x14] sm:$0xff]
      %v2457 = vld [vmem:[%s7 + $0x1c] sm:$0xff]
      %v2458 = vld [vmem:[%s7 + $0x24] sm:$0xf]
      %v2459 = vld [vmem:[#allocation2] sm:$0xff]
      %v2460 = vld [vmem:[#allocation2 + $0x8] sm:$0xff]
      %v2461 = vld [vmem:[#allocation2 + $0x10] sm:$0xff]
      %v2462 = vld [vmem:[#allocation2 + $0x18] sm:$0xff]
      %v2463 = vld [vmem:[#allocation2 + $0x20] sm:$0xff]
      %v2464 = vld [vmem:[#allocation2 + $0x28] sm:$0xff]
      %v2465 = vld [vmem:[#allocation2 + $0x30] sm:$0xff]
      %v2466 = vld [vmem:[#allocation2 + $0x38] sm:$0xff]
      %v2467 = vld [vmem:[#allocation2 + $0x40] sm:$0xff]
      %v2468 = vld [vmem:[#allocation2 + $0x48] sm:$0xff]
      %v2469 = vld [vmem:[#allocation2 + $0x50] sm:$0xff]
      %v2470 = vld [vmem:[#allocation2 + $0x58] sm:$0xff]
      %v2471 = vld [vmem:[#allocation2 + $0x60] sm:$0xff]
      %v2472 = vld [vmem:[#allocation2 + $0x68] sm:$0xff]
      %v2473 = vld [vmem:[#allocation2 + $0x70] sm:$0xff]
      %v2474 = vld [vmem:[#allocation2 + $0x78] sm:$0xff]
      %v2475 = vld [vmem:[#allocation2 + $0x80] sm:$0xff]
      %v2476 = vld [vmem:[#allocation2 + $0x88] sm:$0xff]
      %v2477 = vld [vmem:[#allocation2 + $0x90] sm:$0xff]
      %v2478 = vld [vmem:[#allocation2 + $0x98] sm:$0xff]
      %v2479 = vld [vmem:[#allocation2 + $0xa0] sm:$0xff]
      %v2480 = vld [vmem:[#allocation2 + $0xa8] sm:$0xff]
      %v2481 = vld [vmem:[#allocation2 + $0xb0] sm:$0xff]
      %v2482 = vld [vmem:[#allocation2 + $0xb8] sm:$0xff]
      %v2483 = vld [vmem:[#allocation2 + $0xc0] sm:$0xff]
      %v2484 = vld [vmem:[#allocation2 + $0xc8] sm:$0xff]
      %v2485 = vld [vmem:[#allocation2 + $0xd0] sm:$0xff]
      %v2486 = vld [vmem:[#allocation2 + $0xd8] sm:$0xff]
      %v2487 = vld [vmem:[#allocation2 + $0xe0] sm:$0xff]
      %v2488 = vld [vmem:[#allocation2 + $0xe8] sm:$0xff]
      %v2489 = vld [vmem:[#allocation2 + $0xf0] sm:$0xff]
      %v2490 = vld [vmem:[#allocation2 + $0xf8] sm:$0xff]
      %v2491 = vld [vmem:[#allocation2 + $0x100] sm:$0xff]
      %v2492 = vld [vmem:[#allocation2 + $0x108] sm:$0xff]
      %v2493 = vld [vmem:[#allocation2 + $0x110] sm:$0xff]
      %v2494 = vld [vmem:[#allocation2 + $0x118] sm:$0xff]
      %v2495 = vld [vmem:[#allocation2 + $0x120] sm:$0xff]
      %v2496 = vld [vmem:[#allocation2 + $0x128] sm:$0xff]
      %v2497 = vld [vmem:[#allocation2 + $0x130] sm:$0xff]
      %v2498 = vld [vmem:[#allocation2 + $0x138] sm:$0xff]
      %v2499 = vld [vmem:[#allocation2 + $0x140] sm:$0xff]
      %v2500 = vld [vmem:[#allocation2 + $0x148] sm:$0xff]
      %v2501 = vld [vmem:[#allocation2 + $0x150] sm:$0xff]
      %v2502 = vld [vmem:[#allocation2 + $0x158] sm:$0xff]
      %v2503 = vld [vmem:[#allocation2 + $0x160] sm:$0xff]
      %v2504 = vld [vmem:[#allocation2 + $0x168] sm:$0xff]
      %v2505 = vld [vmem:[#allocation2 + $0x170] sm:$0xff]
      %v2506 = vld [vmem:[#allocation2 + $0x178] sm:$0xff]
      %v2507 = vld [vmem:[#allocation2 + $0x180] sm:$0xff]
      %v2508 = vld [vmem:[#allocation2 + $0x188] sm:$0xff]
      %v2509 = vld [vmem:[#allocation2 + $0x190] sm:$0xff]
      %v2510 = vld [vmem:[#allocation2 + $0x198] sm:$0xff]
      %v2511 = vld [vmem:[#allocation2 + $0x1a0] sm:$0xff]
      %v2512 = vld [vmem:[#allocation2 + $0x1a8] sm:$0xff]
      %v2513 = vld [vmem:[#allocation2 + $0x1b0] sm:$0xff]
      %v2514 = vld [vmem:[#allocation2 + $0x1b8] sm:$0xff]
      %v2515 = vld [vmem:[#allocation2 + $0x1c0] sm:$0xff]
      %v2516 = vld [vmem:[#allocation2 + $0x1c8] sm:$0xff]
      %v2517 = vld [vmem:[#allocation2 + $0x1d0] sm:$0xff]
      %v2518 = vld [vmem:[#allocation2 + $0x1d8] sm:$0xff]
      %v2519 = vld [vmem:[#allocation2 + $0x1e0] sm:$0xff]
      %v2520 = vld [vmem:[#allocation2 + $0x1e8] sm:$0xff]
      %v2521 = vld [vmem:[#allocation2 + $0x1f0] sm:$0xff]
      %v2522 = vld [vmem:[#allocation2 + $0x1f8] sm:$0xff]
      %v2523 = vld [vmem:[#allocation2 + $0x200] sm:$0xff]
      %v2524 = vld [vmem:[#allocation2 + $0x208] sm:$0xff]
      %v2525 = vld [vmem:[#allocation2 + $0x210] sm:$0xff]
      %v2526 = vld [vmem:[#allocation2 + $0x218] sm:$0xff]
      %v2527 = vld [vmem:[#allocation2 + $0x220] sm:$0xff]
      %v2528 = vld [vmem:[#allocation2 + $0x228] sm:$0xff]
      %v2529 = vld [vmem:[#allocation2 + $0x230] sm:$0xff]
      %v2530 = vld [vmem:[#allocation2 + $0x238] sm:$0xff]
      %v2531 = vld [vmem:[%s8] sm:$0xff]
      %v2532 = vld [vmem:[%s8 + $0x8] sm:$0xff]
      %2534 = vset.pattern.permute.xlu0 0
      %2535 = vperm.xlu0 %2534, %v2531
      %v2536 = vpop.permute.xlu0 %2535
      %2539 = vset.pattern.permute.xlu0 0
      %2540 = vperm.xlu0 %2539, %v2532
      %v2541 = vpop.permute.xlu0 %2540
      %v2549 = vunpack.c.l.b16 %v2453
      %v2550 = vunpack.c.h.b16 %v2453
      %v2551 = vunpack.c.l.b16 %v2454
      %v2552 = vunpack.c.h.b16 %v2454
      %v2553 = vunpack.c.l.b16 %v2455
      %v2554 = vunpack.c.l.b16 %v2456
      %v2555 = vunpack.c.h.b16 %v2456
      %v2556 = vunpack.c.l.b16 %v2457
      %v2557 = vunpack.c.h.b16 %v2457
      %v2558 = vunpack.c.l.b16 %v2458
      %v2559 = vpack.c.b16 %v2554, %v2549
      %v2560 = vpack.c.b16 %v2555, %v2550
      %v2561 = vpack.c.b16 %v2556, %v2551
      %v2562 = vpack.c.b16 %v2557, %v2552
      %v2563 = vpack.c.b16 %v2558, %v2553
      %v2640 = vunpack.c.l.b16 %v2459
      %v2641 = vunpack.c.h.b16 %v2459
      %v2642 = vunpack.c.l.b16 %v2460
      %v2643 = vunpack.c.h.b16 %v2460
      %v2644 = vunpack.c.l.b16 %v2461
      %v2645 = vunpack.c.h.b16 %v2461
      %v2646 = vunpack.c.l.b16 %v2462
      %v2647 = vunpack.c.h.b16 %v2462
      %v2648 = vunpack.c.l.b16 %v2463
      %v2649 = vunpack.c.h.b16 %v2463
      %v2650 = vunpack.c.l.b16 %v2464
      %v2651 = vunpack.c.h.b16 %v2464
      %v2652 = vunpack.c.l.b16 %v2465
      %v2653 = vunpack.c.h.b16 %v2465
      %v2654 = vunpack.c.l.b16 %v2466
      %v2655 = vunpack.c.h.b16 %v2466
      %v2656 = vunpack.c.l.b16 %v2467
      %v2657 = vunpack.c.h.b16 %v2467
      %v2658 = vunpack.c.l.b16 %v2468
      %v2659 = vunpack.c.h.b16 %v2468
      %v2660 = vunpack.c.l.b16 %v2469
      %v2661 = vunpack.c.h.b16 %v2469
      %v2662 = vunpack.c.l.b16 %v2470
      %v2663 = vunpack.c.h.b16 %v2470
      %v2664 = vunpack.c.l.b16 %v2471
      %v2665 = vunpack.c.h.b16 %v2471
      %v2666 = vunpack.c.l.b16 %v2472
      %v2667 = vunpack.c.h.b16 %v2472
      %v2668 = vunpack.c.l.b16 %v2473
      %v2669 = vunpack.c.h.b16 %v2473
      %v2670 = vunpack.c.l.b16 %v2474
      %v2671 = vunpack.c.h.b16 %v2474
      %v2672 = vunpack.c.l.b16 %v2475
      %v2673 = vunpack.c.h.b16 %v2475
      %v2674 = vunpack.c.l.b16 %v2476
      %v2675 = vunpack.c.h.b16 %v2476
      %v2676 = vunpack.c.l.b16 %v2477
      %v2677 = vunpack.c.h.b16 %v2477
      %v2678 = vunpack.c.l.b16 %v2478
      %v2679 = vunpack.c.h.b16 %v2478
      %v2680 = vunpack.c.l.b16 %v2479
      %v2681 = vunpack.c.h.b16 %v2479
      %v2682 = vunpack.c.l.b16 %v2480
      %v2683 = vunpack.c.h.b16 %v2480
      %v2684 = vunpack.c.l.b16 %v2481
      %v2685 = vunpack.c.h.b16 %v2481
      %v2686 = vunpack.c.l.b16 %v2482
      %v2687 = vunpack.c.h.b16 %v2482
      %v2688 = vunpack.c.l.b16 %v2483
      %v2689 = vunpack.c.h.b16 %v2483
      %v2690 = vunpack.c.l.b16 %v2484
      %v2691 = vunpack.c.h.b16 %v2484
      %v2692 = vunpack.c.l.b16 %v2485
      %v2693 = vunpack.c.h.b16 %v2485
      %v2694 = vunpack.c.l.b16 %v2486
      %v2695 = vunpack.c.h.b16 %v2486
      %v2696 = vunpack.c.l.b16 %v2487
      %v2697 = vunpack.c.h.b16 %v2487
      %v2698 = vunpack.c.l.b16 %v2488
      %v2699 = vunpack.c.h.b16 %v2488
      %v2700 = vunpack.c.l.b16 %v2489
      %v2701 = vunpack.c.h.b16 %v2489
      %v2702 = vunpack.c.l.b16 %v2490
      %v2703 = vunpack.c.h.b16 %v2490
      %v2704 = vunpack.c.l.b16 %v2491
      %v2705 = vunpack.c.h.b16 %v2491
      %v2706 = vunpack.c.l.b16 %v2492
      %v2707 = vunpack.c.h.b16 %v2492
      %v2708 = vunpack.c.l.b16 %v2493
      %v2709 = vunpack.c.h.b16 %v2493
      %v2710 = vunpack.c.l.b16 %v2494
      %v2711 = vunpack.c.h.b16 %v2494
      %v2712 = vunpack.c.l.b16 %v2495
      %v2713 = vunpack.c.h.b16 %v2495
      %v2714 = vunpack.c.l.b16 %v2496
      %v2715 = vunpack.c.h.b16 %v2496
      %v2716 = vunpack.c.l.b16 %v2497
      %v2717 = vunpack.c.h.b16 %v2497
      %v2718 = vunpack.c.l.b16 %v2498
      %v2719 = vunpack.c.h.b16 %v2498
      %v2720 = vunpack.c.l.b16 %v2499
      %v2721 = vunpack.c.h.b16 %v2499
      %v2722 = vunpack.c.l.b16 %v2500
      %v2723 = vunpack.c.h.b16 %v2500
      %v2724 = vunpack.c.l.b16 %v2501
      %v2725 = vunpack.c.h.b16 %v2501
      %v2726 = vunpack.c.l.b16 %v2502
      %v2727 = vunpack.c.h.b16 %v2502
      %v2728 = vunpack.c.l.b16 %v2503
      %v2729 = vunpack.c.h.b16 %v2503
      %v2730 = vunpack.c.l.b16 %v2504
      %v2731 = vunpack.c.h.b16 %v2504
      %v2732 = vunpack.c.l.b16 %v2505
      %v2733 = vunpack.c.h.b16 %v2505
      %v2734 = vunpack.c.l.b16 %v2506
      %v2735 = vunpack.c.h.b16 %v2506
      %v2736 = vunpack.c.l.b16 %v2507
      %v2737 = vunpack.c.h.b16 %v2507
      %v2738 = vunpack.c.l.b16 %v2508
      %v2739 = vunpack.c.h.b16 %v2508
      %v2740 = vunpack.c.l.b16 %v2509
      %v2741 = vunpack.c.h.b16 %v2509
      %v2742 = vunpack.c.l.b16 %v2510
      %v2743 = vunpack.c.h.b16 %v2510
      %v2744 = vunpack.c.l.b16 %v2511
      %v2745 = vunpack.c.h.b16 %v2511
      %v2746 = vunpack.c.l.b16 %v2512
      %v2747 = vunpack.c.h.b16 %v2512
      %v2748 = vunpack.c.l.b16 %v2513
      %v2749 = vunpack.c.h.b16 %v2513
      %v2750 = vunpack.c.l.b16 %v2514
      %v2751 = vunpack.c.h.b16 %v2514
      %v2752 = vunpack.c.l.b16 %v2515
      %v2753 = vunpack.c.h.b16 %v2515
      %v2754 = vunpack.c.l.b16 %v2516
      %v2755 = vunpack.c.h.b16 %v2516
      %v2756 = vunpack.c.l.b16 %v2517
      %v2757 = vunpack.c.h.b16 %v2517
      %v2758 = vunpack.c.l.b16 %v2518
      %v2759 = vunpack.c.h.b16 %v2518
      %v2760 = vunpack.c.l.b16 %v2519
      %v2761 = vunpack.c.h.b16 %v2519
      %v2762 = vunpack.c.l.b16 %v2520
      %v2763 = vunpack.c.h.b16 %v2520
      %v2764 = vunpack.c.l.b16 %v2521
      %v2765 = vunpack.c.h.b16 %v2521
      %v2766 = vunpack.c.l.b16 %v2522
      %v2767 = vunpack.c.h.b16 %v2522
      %v2768 = vunpack.c.l.b16 %v2523
      %v2769 = vunpack.c.h.b16 %v2523
      %v2770 = vunpack.c.l.b16 %v2524
      %v2771 = vunpack.c.h.b16 %v2524
      %v2772 = vunpack.c.l.b16 %v2525
      %v2773 = vunpack.c.h.b16 %v2525
      %v2774 = vunpack.c.l.b16 %v2526
      %v2775 = vunpack.c.h.b16 %v2526
      %v2776 = vunpack.c.l.b16 %v2527
      %v2777 = vunpack.c.h.b16 %v2527
      %v2778 = vunpack.c.l.b16 %v2528
      %v2779 = vunpack.c.h.b16 %v2528
      %v2780 = vunpack.c.l.b16 %v2529
      %v2781 = vunpack.c.h.b16 %v2529
      %v2782 = vunpack.c.l.b16 %v2530
      %v2783 = vunpack.c.h.b16 %v2530
      %v2784 = vpack.c.b16 %v2642, %v2640
      %v2785 = vpack.c.b16 %v2643, %v2641
      %v2786 = vpack.c.b16 %v2646, %v2644
      %v2787 = vpack.c.b16 %v2647, %v2645
      %v2788 = vpack.c.b16 %v2650, %v2648
      %v2789 = vpack.c.b16 %v2651, %v2649
      %v2790 = vpack.c.b16 %v2654, %v2652
      %v2791 = vpack.c.b16 %v2655, %v2653
      %v2792 = vpack.c.b16 %v2658, %v2656
      %v2793 = vpack.c.b16 %v2659, %v2657
      %v2794 = vpack.c.b16 %v2662, %v2660
      %v2795 = vpack.c.b16 %v2663, %v2661
      %v2796 = vpack.c.b16 %v2666, %v2664
      %v2797 = vpack.c.b16 %v2667, %v2665
      %v2798 = vpack.c.b16 %v2670, %v2668
      %v2799 = vpack.c.b16 %v2671, %v2669
      %v2800 = vpack.c.b16 %v2674, %v2672
      %v2801 = vpack.c.b16 %v2675, %v2673
      %v2802 = vpack.c.b16 %v2678, %v2676
      %v2803 = vpack.c.b16 %v2679, %v2677
      %v2804 = vpack.c.b16 %v2682, %v2680
      %v2805 = vpack.c.b16 %v2683, %v2681
      %v2806 = vpack.c.b16 %v2686, %v2684
      %v2807 = vpack.c.b16 %v2687, %v2685
      %v2808 = vpack.c.b16 %v2690, %v2688
      %v2809 = vpack.c.b16 %v2691, %v2689
      %v2810 = vpack.c.b16 %v2694, %v2692
      %v2811 = vpack.c.b16 %v2695, %v2693
      %v2812 = vpack.c.b16 %v2698, %v2696
      %v2813 = vpack.c.b16 %v2699, %v2697
      %v2814 = vpack.c.b16 %v2702, %v2700
      %v2815 = vpack.c.b16 %v2703, %v2701
      %v2816 = vpack.c.b16 %v2706, %v2704
      %v2817 = vpack.c.b16 %v2707, %v2705
      %v2818 = vpack.c.b16 %v2710, %v2708
      %v2819 = vpack.c.b16 %v2711, %v2709
      %v2820 = vpack.c.b16 %v2714, %v2712
      %v2821 = vpack.c.b16 %v2715, %v2713
      %v2822 = vpack.c.b16 %v2718, %v2716
      %v2823 = vpack.c.b16 %v2719, %v2717
      %v2824 = vpack.c.b16 %v2722, %v2720
      %v2825 = vpack.c.b16 %v2723, %v2721
      %v2826 = vpack.c.b16 %v2726, %v2724
      %v2827 = vpack.c.b16 %v2727, %v2725
      %v2828 = vpack.c.b16 %v2730, %v2728
      %v2829 = vpack.c.b16 %v2731, %v2729
      %v2830 = vpack.c.b16 %v2734, %v2732
      %v2831 = vpack.c.b16 %v2735, %v2733
      %v2832 = vpack.c.b16 %v2738, %v2736
      %v2833 = vpack.c.b16 %v2739, %v2737
      %v2834 = vpack.c.b16 %v2742, %v2740
      %v2835 = vpack.c.b16 %v2743, %v2741
      %v2836 = vpack.c.b16 %v2746, %v2744
      %v2837 = vpack.c.b16 %v2747, %v2745
      %v2838 = vpack.c.b16 %v2750, %v2748
      %v2839 = vpack.c.b16 %v2751, %v2749
      %v2840 = vpack.c.b16 %v2754, %v2752
      %v2841 = vpack.c.b16 %v2755, %v2753
      %v2842 = vpack.c.b16 %v2758, %v2756
      %v2843 = vpack.c.b16 %v2759, %v2757
      %v2844 = vpack.c.b16 %v2762, %v2760
      %v2845 = vpack.c.b16 %v2763, %v2761
      %v2846 = vpack.c.b16 %v2766, %v2764
      %v2847 = vpack.c.b16 %v2767, %v2765
      %v2848 = vpack.c.b16 %v2770, %v2768
      %v2849 = vpack.c.b16 %v2771, %v2769
      %v2850 = vpack.c.b16 %v2774, %v2772
      %v2851 = vpack.c.b16 %v2775, %v2773
      %v2852 = vpack.c.b16 %v2778, %v2776
      %v2853 = vpack.c.b16 %v2779, %v2777
      %v2854 = vpack.c.b16 %v2782, %v2780
      %v2855 = vpack.c.b16 %v2783, %v2781
      %vm2928 = vcmask 523264
      %v2930 = vsel %vm2928, %v2563, 0
      %2932 = vmatprep.subr.bf16.mxu0 %v2799
      %2933 = vmatpush1.bf16.msra.mxu0 %v2798
      %2934 = vmatprep.subr.bf16.mxu0 %v2797
      %2935 = vmatpush1.bf16.msra.mxu0 %v2796
      %2936 = vmatprep.subr.bf16.mxu0 %v2795
      %2937 = vmatpush1.bf16.msra.mxu0 %v2794
      %2938 = vmatprep.subr.bf16.mxu0 %v2793
      %2939 = vmatpush1.bf16.msra.mxu0 %v2792
      %2940 = vmatprep.subr.bf16.mxu0 %v2791
      %2941 = vmatpush1.bf16.msra.mxu0 %v2790
      %2942 = vmatprep.subr.bf16.mxu0 %v2789
      %2943 = vmatpush1.bf16.msra.mxu0 %v2788
      %2944 = vmatprep.subr.bf16.mxu0 %v2787
      %2945 = vmatpush1.bf16.msra.mxu0 %v2786
      %2946 = vmatprep.subr.bf16.mxu0 %v2785
      %2947 = vmatpush1.bf16.msra.mxu0 %v2784
      %2948 = vmatprep.subr.bf16.mxu0 %v2815
      %2949 = vmatpush2.bf16.msra.mxu0 %v2814
      %2950 = vmatprep.subr.bf16.mxu0 %v2813
      %2951 = vmatpush2.bf16.msra.mxu0 %v2812
      %2952 = vmatprep.subr.bf16.mxu0 %v2811
      %2953 = vmatpush2.bf16.msra.mxu0 %v2810
      %2954 = vmatprep.subr.bf16.mxu0 %v2809
      %2955 = vmatpush2.bf16.msra.mxu0 %v2808
      %2956 = vmatprep.subr.bf16.mxu0 %v2807
      %2957 = vmatpush2.bf16.msra.mxu0 %v2806
      %2958 = vmatprep.subr.bf16.mxu0 %v2805
      %2959 = vmatpush2.bf16.msra.mxu0 %v2804
      %2960 = vmatprep.subr.bf16.mxu0 %v2803
      %2961 = vmatpush2.bf16.msra.mxu0 %v2802
      %2962 = vmatprep.subr.bf16.mxu0 %v2801
      %2963 = vmatpush2.bf16.msra.mxu0 %v2800
      %2964 = vmatprep.mubr.bf16.mxu0 %v2560
      %2965 = vmatmul.mubr.bf16.gmra.mxu0 %v2559
      %v2966 = vpop.f32.mrf.mxu0
      %v2967 = vadd.f32 %v2536, %v2966
      %v2968 = vpop.f32.mrf.mxu0
      %v2969 = vadd.f32 %v2536, %v2968
      %v2970 = vpop.f32.mrf.mxu0
      %v2971 = vadd.f32 %v2541, %v2970
      %v2972 = vpop.f32.mrf.mxu0
      %v2973 = vadd.f32 %v2541, %v2972
      %2974 = vdwg.mxu0
      %2975 = vmatprep.subr.bf16.mxu0 %v2831
      %2976 = vmatpush1.bf16.msra.mxu0 %v2830
      %2977 = vmatprep.subr.bf16.mxu0 %v2829
      %2978 = vmatpush1.bf16.msra.mxu0 %v2828
      %2979 = vmatprep.subr.bf16.mxu0 %v2827
      %2980 = vmatpush1.bf16.msra.mxu0 %v2826
      %2981 = vmatprep.subr.bf16.mxu0 %v2825
      %2982 = vmatpush1.bf16.msra.mxu0 %v2824
      %2983 = vmatprep.subr.bf16.mxu0 %v2823
      %2984 = vmatpush1.bf16.msra.mxu0 %v2822
      %2985 = vmatprep.subr.bf16.mxu0 %v2821
      %2986 = vmatpush1.bf16.msra.mxu0 %v2820
      %2987 = vmatprep.subr.bf16.mxu0 %v2819
      %2988 = vmatpush1.bf16.msra.mxu0 %v2818
      %2989 = vmatprep.subr.bf16.mxu0 %v2817
      %2990 = vmatpush1.bf16.msra.mxu0 %v2816
      %2991 = vmatprep.subr.bf16.mxu0 %v2847
      %2992 = vmatpush2.bf16.msra.mxu0 %v2846
      %2993 = vmatprep.subr.bf16.mxu0 %v2845
      %2994 = vmatpush2.bf16.msra.mxu0 %v2844
      %2995 = vmatprep.subr.bf16.mxu0 %v2843
      %2996 = vmatpush2.bf16.msra.mxu0 %v2842
      %2997 = vmatprep.subr.bf16.mxu0 %v2841
      %2998 = vmatpush2.bf16.msra.mxu0 %v2840
      %2999 = vmatprep.subr.bf16.mxu0 %v2839
      %3000 = vmatpush2.bf16.msra.mxu0 %v2838
      %3001 = vmatprep.subr.bf16.mxu0 %v2837
      %3002 = vmatpush2.bf16.msra.mxu0 %v2836
      %3003 = vmatprep.subr.bf16.mxu0 %v2835
      %3004 = vmatpush2.bf16.msra.mxu0 %v2834
      %3005 = vmatprep.subr.bf16.mxu0 %v2833
      %3006 = vmatpush2.bf16.msra.mxu0 %v2832
      %3007 = vmatprep.mubr.bf16.mxu0 %v2562
      %3008 = vmatmul.mubr.bf16.gmra.mxu0 %v2561
      %v3009 = vpop.f32.mrf.mxu0
      %v3010 = vadd.f32 %v2967, %v3009
      %v3011 = vpop.f32.mrf.mxu0
      %v3012 = vadd.f32 %v2969, %v3011
      %v3013 = vpop.f32.mrf.mxu0
      %v3014 = vadd.f32 %v2971, %v3013
      %v3015 = vpop.f32.mrf.mxu0
      %v3016 = vadd.f32 %v2973, %v3015
      %3017 = vdwg.mxu0
      %3018 = vmatprep.subr.bf16.mxu0 0
      %3019 = vmatpush1.bf16.msra.mxu0 0
      %3020 = vmatprep.subr.bf16.mxu0 0
      %3021 = vmatpush1.bf16.msra.mxu0 0
      %3022 = vmatprep.subr.bf16.mxu0 0
      %3023 = vmatpush1.bf16.msra.mxu0 0
      %3024 = vmatprep.subr.bf16.mxu0 0
      %3025 = vmatpush1.bf16.msra.mxu0 0
      %3026 = vmatprep.subr.bf16.mxu0 %v2855
      %3027 = vmatpush1.bf16.msra.mxu0 %v2854
      %3028 = vmatprep.subr.bf16.mxu0 %v2853
      %3029 = vmatpush1.bf16.msra.mxu0 %v2852
      %3030 = vmatprep.subr.bf16.mxu0 %v2851
      %3031 = vmatpush1.bf16.msra.mxu0 %v2850
      %3032 = vmatprep.subr.bf16.mxu0 %v2849
      %3033 = vmatpush1.bf16.msra.mxu0 %v2848
      %3034 = vmatprep.subr.bf16.mxu0 0
      %3035 = vmatpush2.bf16.msra.mxu0 0
      %3036 = vmatprep.subr.bf16.mxu0 0
      %3037 = vmatpush2.bf16.msra.mxu0 0
      %3038 = vmatprep.subr.bf16.mxu0 0
      %3039 = vmatpush2.bf16.msra.mxu0 0
      %3040 = vmatprep.subr.bf16.mxu0 0
      %3041 = vmatpush2.bf16.msra.mxu0 0
      %3042 = vmatprep.subr.bf16.mxu0 0
      %3043 = vmatpush2.bf16.msra.mxu0 0
      %3044 = vmatprep.subr.bf16.mxu0 0
      %3045 = vmatpush2.bf16.msra.mxu0 0
      %3046 = vmatprep.subr.bf16.mxu0 0
      %3047 = vmatpush2.bf16.msra.mxu0 0
      %3048 = vmatprep.subr.bf16.mxu0 0
      %3049 = vmatpush2.bf16.msra.mxu0 0
      %3050 = vmatprep.mubr.bf16.mxu0 0
      %3051 = vmatmul.mubr.bf16.gmra.mxu0 %v2930
      %v3052 = vpop.f32.mrf.mxu0
      %v3053 = vadd.f32 %v3010, %v3052
      %v3054 = vpop.f32.mrf.mxu0
      %v3055 = vadd.f32 %v3012, %v3054
      %v3056 = vpop.f32.mrf.mxu0
      %v3057 = vadd.f32 %v3014, %v3056
      %v3058 = vpop.f32.mrf.mxu0
      %v3059 = vadd.f32 %v3016, %v3058
      %3060 = vdwg.mxu0
      %vm3061 = vcmp.gt.f32.partialorder %v3053, 0.0
      %vm3062 = vcmp.gt.f32.partialorder %v3055, 0.0
      %vm3063 = vcmp.gt.f32.partialorder %v3057, 0.0
      %vm3064 = vcmp.gt.f32.partialorder %v3059, 0.0
      %v3065 = vmul.f32 %v3053, 0.2
      %v3066 = vmul.f32 %v3055, 0.2
      %v3067 = vmul.f32 %v3057, 0.2
      %v3068 = vmul.f32 %v3059, 0.2
      %v3069 = vsel %vm3061, %v3053, %v3065
      %v3070 = vsel %vm3062, %v3055, %v3066
      %v3071 = vsel %vm3063, %v3057, %v3067
      %v3072 = vsel %vm3064, %v3059, %v3068
      %3073 = vrot.lane.b32.xlu0 %v3069, 1
      %v3074 = vpop.permute.xlu0 %3073
      %3075 = vrot.lane.b32.xlu0 %v3071, 1
      %v3076 = vpop.permute.xlu0 %3075
      %3077 = vrot.lane.b32.xlu0 %v3070, 1
      %v3078 = vpop.permute.xlu0 %3077
      %3079 = vrot.lane.b32.xlu0 %v3072, 1
      %v3080 = vpop.permute.xlu0 %3079
      %v3081 = vsel %vm427, %v3074, %v3078
      %v3082 = vsel %vm427, %v3076, %v3080
      %v3083 = vsel %vm427, %v3078, %v3074
      %v3084 = vsel %vm427, %v3080, %v3076
      %3085 = vrot.lane.b32.xlu0 %v3069, 113
      %v3086 = vpop.permute.xlu0 %3085
      %3087 = vrot.lane.b32.xlu0 %v3071, 113
      %v3088 = vpop.permute.xlu0 %3087
      %3089 = vrot.lane.b32.xlu0 %v3070, 113
      %v3090 = vpop.permute.xlu0 %3089
      %3091 = vrot.lane.b32.xlu0 %v3072, 113
      %v3092 = vpop.permute.xlu0 %3091
      %v3093 = vsel %vm440, %v3086, %v3090
      %v3094 = vsel %vm440, %v3088, %v3092
      %v3095 = vsel %vm440, %v3090, %v3086
      %v3096 = vsel %vm440, %v3092, %v3088
      %v3097 = vsel %vm449, %v3083, %v3093
      %v3098 = vsel %vm450, %v3081, %v3095
      %v3099 = vsel %vm449, %v3084, %v3094
      %v3100 = vsel %vm450, %v3082, %v3096
      %3101 = vrot.lane.b32.xlu0 %v3069, 127
      %v3102 = vpop.permute.xlu0 %3101
      %3103 = vrot.lane.b32.xlu0 %v3071, 127
      %v3104 = vpop.permute.xlu0 %3103
      %3105 = vrot.lane.b32.xlu0 %v3070, 127
      %v3106 = vpop.permute.xlu0 %3105
      %3107 = vrot.lane.b32.xlu0 %v3072, 127
      %v3108 = vpop.permute.xlu0 %3107
      %v3109 = vsel %vm463, %v3102, %v3106
      %v3110 = vsel %vm463, %v3104, %v3108
      %v3111 = vsel %vm463, %v3106, %v3102
      %v3112 = vsel %vm463, %v3108, %v3104
      %3113 = vrot.lane.b32.xlu0 %v3069, 15
      %v3114 = vpop.permute.xlu0 %3113
      %3115 = vrot.lane.b32.xlu0 %v3071, 15
      %v3116 = vpop.permute.xlu0 %3115
      %3117 = vrot.lane.b32.xlu0 %v3070, 15
      %v3118 = vpop.permute.xlu0 %3117
      %3119 = vrot.lane.b32.xlu0 %v3072, 15
      %v3120 = vpop.permute.xlu0 %3119
      %v3121 = vsel %vm476, %v3114, %v3118
      %v3122 = vsel %vm476, %v3116, %v3120
      %v3123 = vsel %vm476, %v3118, %v3114
      %v3124 = vsel %vm476, %v3120, %v3116
      %v3125 = vsel %vm485, %v3109, %v3123
      %v3126 = vsel %vm486, %v3111, %v3121
      %v3127 = vsel %vm485, %v3110, %v3124
      %v3128 = vsel %vm486, %v3112, %v3122
      %3129 = vrot.lane.b32.xlu0 %v3097, 16
      %v3130 = vpop.permute.xlu0 %3129
      %3131 = vrot.lane.b32.xlu0 %v3099, 16
      %v3132 = vpop.permute.xlu0 %3131
      %3133 = vrot.lane.b32.xlu0 %v3098, 16
      %v3134 = vpop.permute.xlu0 %3133
      %3135 = vrot.lane.b32.xlu0 %v3100, 16
      %v3136 = vpop.permute.xlu0 %3135
      %v3137 = vsel %vm499, %v3130, %v3134
      %v3138 = vsel %vm499, %v3132, %v3136
      %v3139 = vsel %vm499, %v3134, %v3130
      %v3140 = vsel %vm499, %v3136, %v3132
      %v3141 = vpack.c.bf16 %v3140, %v3139
      %v3142 = vpack.c.bf16 %v3138, %v3137
      %v3145 = vunpack.c.l.b16 %v3141
      %v3146 = vunpack.c.l.b16 %v3142
      %v3147 = vunpack.c.h.b16 %v3141
      %v3148 = vunpack.c.h.b16 %v3142
      %v3149 = vpack.c.b16 %v3146, %v3145
      %v3150 = vpack.c.b16 %v3148, %v3147
      %3153 = vst [vmem:[#allocation2 + $0x240] sm:$0xff] %v3149
      %3154 = vst [vmem:[#allocation2 + $0x248] sm:$0xff] %v3150
      %3155 = vrot.lane.b32.xlu0 %v3069, 16
      %v3156 = vpop.permute.xlu0 %3155
      %3157 = vrot.lane.b32.xlu0 %v3071, 16
      %v3158 = vpop.permute.xlu0 %3157
      %3159 = vrot.lane.b32.xlu0 %v3070, 16
      %v3160 = vpop.permute.xlu0 %3159
      %3161 = vrot.lane.b32.xlu0 %v3072, 16
      %v3162 = vpop.permute.xlu0 %3161
      %v3163 = vsel %vm499, %v3156, %v3160
      %v3164 = vsel %vm499, %v3158, %v3162
      %v3165 = vsel %vm499, %v3160, %v3156
      %v3166 = vsel %vm499, %v3162, %v3158
      %v3167 = vpack.c.bf16 %v3166, %v3165
      %v3168 = vpack.c.bf16 %v3164, %v3163
      %v3171 = vunpack.c.l.b16 %v3167
      %v3172 = vunpack.c.l.b16 %v3168
      %v3173 = vunpack.c.h.b16 %v3167
      %v3174 = vunpack.c.h.b16 %v3168
      %v3175 = vpack.c.b16 %v3172, %v3171
      %v3176 = vpack.c.b16 %v3174, %v3173
      %3179 = vst [vmem:[#allocation2 + $0x250] sm:$0xff] %v3175
      %3180 = vst [vmem:[#allocation2 + $0x258] sm:$0xff] %v3176
      %3181 = vrot.lane.b32.xlu0 %v3125, 16
      %v3182 = vpop.permute.xlu0 %3181
      %3183 = vrot.lane.b32.xlu0 %v3127, 16
      %v3184 = vpop.permute.xlu0 %3183
      %3185 = vrot.lane.b32.xlu0 %v3126, 16
      %v3186 = vpop.permute.xlu0 %3185
      %3187 = vrot.lane.b32.xlu0 %v3128, 16
      %v3188 = vpop.permute.xlu0 %3187
      %v3189 = vsel %vm499, %v3182, %v3186
      %v3190 = vsel %vm499, %v3184, %v3188
      %v3191 = vsel %vm499, %v3186, %v3182
      %v3192 = vsel %vm499, %v3188, %v3184
      %v3193 = vpack.c.bf16 %v3192, %v3191
      %v3194 = vpack.c.bf16 %v3190, %v3189
      %v3197 = vunpack.c.l.b16 %v3193
      %v3198 = vunpack.c.l.b16 %v3194
      %v3199 = vunpack.c.h.b16 %v3193
      %v3200 = vunpack.c.h.b16 %v3194
      %v3201 = vpack.c.b16 %v3198, %v3197
      %v3202 = vpack.c.b16 %v3200, %v3199
      %3205 = vst [vmem:[#allocation2 + $0x260] sm:$0xff] %v3201
      %3206 = vst [vmem:[#allocation2 + $0x268] sm:$0xff] %v3202
      %v3207 = vpack.c.bf16 %v3099, %v3097
      %v3208 = vpack.c.bf16 %v3100, %v3098
      %v3211 = vunpack.c.l.b16 %v3207
      %v3212 = vunpack.c.l.b16 %v3208
      %v3213 = vunpack.c.h.b16 %v3207
      %v3214 = vunpack.c.h.b16 %v3208
      %v3215 = vpack.c.b16 %v3212, %v3211
      %v3216 = vpack.c.b16 %v3214, %v3213
      %3219 = vst [vmem:[#allocation2 + $0x270] sm:$0xff] %v3215
      %3220 = vst [vmem:[#allocation2 + $0x278] sm:$0xff] %v3216
      %v3221 = vpack.c.bf16 %v3071, %v3069
      %v3222 = vpack.c.bf16 %v3072, %v3070
      %v3225 = vunpack.c.l.b16 %v3221
      %v3226 = vunpack.c.l.b16 %v3222
      %v3227 = vunpack.c.h.b16 %v3221
      %v3228 = vunpack.c.h.b16 %v3222
      %v3229 = vpack.c.b16 %v3226, %v3225
      %v3230 = vpack.c.b16 %v3228, %v3227
      %3233 = vst [vmem:[#allocation2 + $0x280] sm:$0xff] %v3229
      %3234 = vst [vmem:[#allocation2 + $0x288] sm:$0xff] %v3230
      %v3235 = vpack.c.bf16 %v3127, %v3125
      %v3236 = vpack.c.bf16 %v3128, %v3126
      %v3239 = vunpack.c.l.b16 %v3235
      %v3240 = vunpack.c.l.b16 %v3236
      %v3241 = vunpack.c.h.b16 %v3235
      %v3242 = vunpack.c.h.b16 %v3236
      %v3243 = vpack.c.b16 %v3240, %v3239
      %v3244 = vpack.c.b16 %v3242, %v3241
      %3247 = vst [vmem:[#allocation2 + $0x290] sm:$0xff] %v3243
      %3248 = vst [vmem:[#allocation2 + $0x298] sm:$0xff] %v3244
      %3249 = vrot.lane.b32.xlu0 %v3097, 112
      %v3250 = vpop.permute.xlu0 %3249
      %3251 = vrot.lane.b32.xlu0 %v3099, 112
      %v3252 = vpop.permute.xlu0 %3251
      %3253 = vrot.lane.b32.xlu0 %v3098, 112
      %v3254 = vpop.permute.xlu0 %3253
      %3255 = vrot.lane.b32.xlu0 %v3100, 112
      %v3256 = vpop.permute.xlu0 %3255
      %v3257 = vsel %vm620, %v3250, %v3254
      %v3258 = vsel %vm620, %v3252, %v3256
      %v3259 = vsel %vm620, %v3254, %v3250
      %v3260 = vsel %vm620, %v3256, %v3252
      %v3261 = vpack.c.bf16 %v3258, %v3257
      %v3262 = vpack.c.bf16 %v3260, %v3259
      %v3265 = vunpack.c.l.b16 %v3261
      %v3266 = vunpack.c.l.b16 %v3262
      %v3267 = vunpack.c.h.b16 %v3261
      %v3268 = vunpack.c.h.b16 %v3262
      %v3269 = vpack.c.b16 %v3266, %v3265
      %v3270 = vpack.c.b16 %v3268, %v3267
      %3273 = vst [vmem:[#allocation2 + $0x2a0] sm:$0xff] %v3269
      %3274 = vst [vmem:[#allocation2 + $0x2a8] sm:$0xff] %v3270
      %3275 = vrot.lane.b32.xlu0 %v3069, 112
      %v3276 = vpop.permute.xlu0 %3275
      %3277 = vrot.lane.b32.xlu0 %v3071, 112
      %v3278 = vpop.permute.xlu0 %3277
      %3279 = vrot.lane.b32.xlu0 %v3070, 112
      %v3280 = vpop.permute.xlu0 %3279
      %3281 = vrot.lane.b32.xlu0 %v3072, 112
      %v3282 = vpop.permute.xlu0 %3281
      %v3283 = vsel %vm620, %v3276, %v3280
      %v3284 = vsel %vm620, %v3278, %v3282
      %v3285 = vsel %vm620, %v3280, %v3276
      %v3286 = vsel %vm620, %v3282, %v3278
      %v3287 = vpack.c.bf16 %v3284, %v3283
      %v3288 = vpack.c.bf16 %v3286, %v3285
      %v3291 = vunpack.c.l.b16 %v3287
      %v3292 = vunpack.c.l.b16 %v3288
      %v3293 = vunpack.c.h.b16 %v3287
      %v3294 = vunpack.c.h.b16 %v3288
      %v3295 = vpack.c.b16 %v3292, %v3291
      %v3296 = vpack.c.b16 %v3294, %v3293
      %3299 = vst [vmem:[#allocation2 + $0x2b0] sm:$0xff] %v3295
      %3300 = vst [vmem:[#allocation2 + $0x2b8] sm:$0xff] %v3296
      %3301 = vrot.lane.b32.xlu0 %v3125, 112
      %v3302 = vpop.permute.xlu0 %3301
      %3303 = vrot.lane.b32.xlu0 %v3127, 112
      %v3304 = vpop.permute.xlu0 %3303
      %3305 = vrot.lane.b32.xlu0 %v3126, 112
      %v3306 = vpop.permute.xlu0 %3305
      %3307 = vrot.lane.b32.xlu0 %v3128, 112
      %v3308 = vpop.permute.xlu0 %3307
      %v3309 = vsel %vm620, %v3302, %v3306
      %v3310 = vsel %vm620, %v3304, %v3308
      %v3311 = vsel %vm620, %v3306, %v3302
      %v3312 = vsel %vm620, %v3308, %v3304
      %v3313 = vpack.c.bf16 %v3310, %v3309
      %v3314 = vpack.c.bf16 %v3312, %v3311
      %v3317 = vunpack.c.l.b16 %v3313
      %v3318 = vunpack.c.l.b16 %v3314
      %v3319 = vunpack.c.h.b16 %v3313
      %v3320 = vunpack.c.h.b16 %v3314
      %v3321 = vpack.c.b16 %v3318, %v3317
      %v3322 = vpack.c.b16 %v3320, %v3319
      %3325 = vst [vmem:[#allocation2 + $0x2c0] sm:$0xff] %v3321
      %3326 = vst [vmem:[#allocation2 + $0x2c8] sm:$0xff] %v3322
      %v3327 = vld [vmem:[%s9] sm:$0xff]
      %v3328 = vld [vmem:[%s9 + $0x8] sm:$0xff]
      %v3329 = vld [vmem:[%s9 + $0x10] sm:$0xff]
      %v3330 = vld [vmem:[%s9 + $0x18] sm:$0xff]
      %v3331 = vld [vmem:[%s9 + $0x20] sm:$0xff]
      %v3332 = vld [vmem:[%s9 + $0x28] sm:$0xff]
      %v3333 = vld [vmem:[#allocation2] sm:$0xff]
      %v3334 = vld [vmem:[#allocation2 + $0x8] sm:$0xff]
      %v3335 = vld [vmem:[#allocation2 + $0x10] sm:$0xff]
      %v3336 = vld [vmem:[#allocation2 + $0x18] sm:$0xff]
      %v3337 = vld [vmem:[#allocation2 + $0x20] sm:$0xff]
      %v3338 = vld [vmem:[#allocation2 + $0x28] sm:$0xff]
      %v3339 = vld [vmem:[#allocation2 + $0x30] sm:$0xff]
      %v3340 = vld [vmem:[#allocation2 + $0x38] sm:$0xff]
      %v3341 = vld [vmem:[#allocation2 + $0x40] sm:$0xff]
      %v3342 = vld [vmem:[#allocation2 + $0x48] sm:$0xff]
      %v3343 = vld [vmem:[#allocation2 + $0x50] sm:$0xff]
      %v3344 = vld [vmem:[#allocation2 + $0x58] sm:$0xff]
      %v3345 = vld [vmem:[#allocation2 + $0x60] sm:$0xff]
      %v3346 = vld [vmem:[#allocation2 + $0x68] sm:$0xff]
      %v3347 = vld [vmem:[#allocation2 + $0x70] sm:$0xff]
      %v3348 = vld [vmem:[#allocation2 + $0x78] sm:$0xff]
      %v3349 = vld [vmem:[#allocation2 + $0x80] sm:$0xff]
      %v3350 = vld [vmem:[#allocation2 + $0x88] sm:$0xff]
      %v3351 = vld [vmem:[#allocation2 + $0x90] sm:$0xff]
      %v3352 = vld [vmem:[#allocation2 + $0x98] sm:$0xff]
      %v3353 = vld [vmem:[#allocation2 + $0xa0] sm:$0xff]
      %v3354 = vld [vmem:[#allocation2 + $0xa8] sm:$0xff]
      %v3355 = vld [vmem:[#allocation2 + $0xb0] sm:$0xff]
      %v3356 = vld [vmem:[#allocation2 + $0xb8] sm:$0xff]
      %v3357 = vld [vmem:[#allocation2 + $0xc0] sm:$0xff]
      %v3358 = vld [vmem:[#allocation2 + $0xc8] sm:$0xff]
      %v3359 = vld [vmem:[#allocation2 + $0xd0] sm:$0xff]
      %v3360 = vld [vmem:[#allocation2 + $0xd8] sm:$0xff]
      %v3361 = vld [vmem:[#allocation2 + $0xe0] sm:$0xff]
      %v3362 = vld [vmem:[#allocation2 + $0xe8] sm:$0xff]
      %v3363 = vld [vmem:[#allocation2 + $0xf0] sm:$0xff]
      %v3364 = vld [vmem:[#allocation2 + $0xf8] sm:$0xff]
      %v3365 = vld [vmem:[#allocation2 + $0x100] sm:$0xff]
      %v3366 = vld [vmem:[#allocation2 + $0x108] sm:$0xff]
      %v3367 = vld [vmem:[#allocation2 + $0x110] sm:$0xff]
      %v3368 = vld [vmem:[#allocation2 + $0x118] sm:$0xff]
      %v3369 = vld [vmem:[#allocation2 + $0x120] sm:$0xff]
      %v3370 = vld [vmem:[#allocation2 + $0x128] sm:$0xff]
      %v3371 = vld [vmem:[#allocation2 + $0x130] sm:$0xff]
      %v3372 = vld [vmem:[#allocation2 + $0x138] sm:$0xff]
      %v3373 = vld [vmem:[#allocation2 + $0x140] sm:$0xff]
      %v3374 = vld [vmem:[#allocation2 + $0x148] sm:$0xff]
      %v3375 = vld [vmem:[#allocation2 + $0x150] sm:$0xff]
      %v3376 = vld [vmem:[#allocation2 + $0x158] sm:$0xff]
      %v3377 = vld [vmem:[#allocation2 + $0x160] sm:$0xff]
      %v3378 = vld [vmem:[#allocation2 + $0x168] sm:$0xff]
      %v3379 = vld [vmem:[#allocation2 + $0x170] sm:$0xff]
      %v3380 = vld [vmem:[#allocation2 + $0x178] sm:$0xff]
      %v3381 = vld [vmem:[#allocation2 + $0x180] sm:$0xff]
      %v3382 = vld [vmem:[#allocation2 + $0x188] sm:$0xff]
      %v3383 = vld [vmem:[#allocation2 + $0x190] sm:$0xff]
      %v3384 = vld [vmem:[#allocation2 + $0x198] sm:$0xff]
      %v3385 = vld [vmem:[#allocation2 + $0x1a0] sm:$0xff]
      %v3386 = vld [vmem:[#allocation2 + $0x1a8] sm:$0xff]
      %v3387 = vld [vmem:[#allocation2 + $0x1b0] sm:$0xff]
      %v3388 = vld [vmem:[#allocation2 + $0x1b8] sm:$0xff]
      %v3389 = vld [vmem:[#allocation2 + $0x1c0] sm:$0xff]
      %v3390 = vld [vmem:[#allocation2 + $0x1c8] sm:$0xff]
      %v3391 = vld [vmem:[#allocation2 + $0x1d0] sm:$0xff]
      %v3392 = vld [vmem:[#allocation2 + $0x1d8] sm:$0xff]
      %v3393 = vld [vmem:[#allocation2 + $0x1e0] sm:$0xff]
      %v3394 = vld [vmem:[#allocation2 + $0x1e8] sm:$0xff]
      %v3395 = vld [vmem:[#allocation2 + $0x1f0] sm:$0xff]
      %v3396 = vld [vmem:[#allocation2 + $0x1f8] sm:$0xff]
      %v3397 = vld [vmem:[#allocation2 + $0x200] sm:$0xff]
      %v3398 = vld [vmem:[#allocation2 + $0x208] sm:$0xff]
      %v3399 = vld [vmem:[#allocation2 + $0x210] sm:$0xff]
      %v3400 = vld [vmem:[#allocation2 + $0x218] sm:$0xff]
      %v3401 = vld [vmem:[#allocation2 + $0x220] sm:$0xff]
      %v3402 = vld [vmem:[#allocation2 + $0x228] sm:$0xff]
      %v3403 = vld [vmem:[#allocation2 + $0x230] sm:$0xff]
      %v3404 = vld [vmem:[#allocation2 + $0x238] sm:$0xff]
      %v3405 = vld [vmem:[#allocation2 + $0x240] sm:$0xff]
      %v3406 = vld [vmem:[#allocation2 + $0x248] sm:$0xff]
      %v3407 = vld [vmem:[#allocation2 + $0x250] sm:$0xff]
      %v3408 = vld [vmem:[#allocation2 + $0x258] sm:$0xff]
      %v3409 = vld [vmem:[#allocation2 + $0x260] sm:$0xff]
      %v3410 = vld [vmem:[#allocation2 + $0x268] sm:$0xff]
      %v3411 = vld [vmem:[#allocation2 + $0x270] sm:$0xff]
      %v3412 = vld [vmem:[#allocation2 + $0x278] sm:$0xff]
      %v3413 = vld [vmem:[#allocation2 + $0x280] sm:$0xff]
      %v3414 = vld [vmem:[#allocation2 + $0x288] sm:$0xff]
      %v3415 = vld [vmem:[#allocation2 + $0x290] sm:$0xff]
      %v3416 = vld [vmem:[#allocation2 + $0x298] sm:$0xff]
      %v3417 = vld [vmem:[#allocation2 + $0x2a0] sm:$0xff]
      %v3418 = vld [vmem:[#allocation2 + $0x2a8] sm:$0xff]
      %v3419 = vld [vmem:[#allocation2 + $0x2b0] sm:$0xff]
      %v3420 = vld [vmem:[#allocation2 + $0x2b8] sm:$0xff]
      %v3421 = vld [vmem:[#allocation2 + $0x2c0] sm:$0xff]
      %v3422 = vld [vmem:[#allocation2 + $0x2c8] sm:$0xff]
      %v3423 = vld [vmem:[%s10] sm:$0xff]
      %v3424 = vld [vmem:[%s10 + $0x8] sm:$0xff]
      %3426 = vset.pattern.permute.xlu0 0
      %3427 = vperm.xlu0 %3426, %v3423
      %v3428 = vpop.permute.xlu0 %3427
      %3431 = vset.pattern.permute.xlu0 0
      %3432 = vperm.xlu0 %3431, %v3424
      %v3433 = vpop.permute.xlu0 %3432
      %v3441 = vunpack.c.l.b16 %v3327
      %v3442 = vunpack.c.h.b16 %v3327
      %v3443 = vunpack.c.l.b16 %v3328
      %v3444 = vunpack.c.h.b16 %v3328
      %v3445 = vunpack.c.l.b16 %v3329
      %v3446 = vunpack.c.h.b16 %v3329
      %v3447 = vunpack.c.l.b16 %v3330
      %v3448 = vunpack.c.h.b16 %v3330
      %v3449 = vunpack.c.l.b16 %v3331
      %v3450 = vunpack.c.h.b16 %v3331
      %v3451 = vunpack.c.l.b16 %v3332
      %v3452 = vunpack.c.h.b16 %v3332
      %v3453 = vpack.c.b16 %v3447, %v3441
      %v3454 = vpack.c.b16 %v3448, %v3442
      %v3455 = vpack.c.b16 %v3449, %v3443
      %v3456 = vpack.c.b16 %v3450, %v3444
      %v3457 = vpack.c.b16 %v3451, %v3445
      %v3458 = vpack.c.b16 %v3452, %v3446
      %v3554 = vunpack.c.l.b16 %v3333
      %v3555 = vunpack.c.h.b16 %v3333
      %v3556 = vunpack.c.l.b16 %v3334
      %v3557 = vunpack.c.h.b16 %v3334
      %v3558 = vunpack.c.l.b16 %v3335
      %v3559 = vunpack.c.h.b16 %v3335
      %v3560 = vunpack.c.l.b16 %v3336
      %v3561 = vunpack.c.h.b16 %v3336
      %v3562 = vunpack.c.l.b16 %v3337
      %v3563 = vunpack.c.h.b16 %v3337
      %v3564 = vunpack.c.l.b16 %v3338
      %v3565 = vunpack.c.h.b16 %v3338
      %v3566 = vunpack.c.l.b16 %v3339
      %v3567 = vunpack.c.h.b16 %v3339
      %v3568 = vunpack.c.l.b16 %v3340
      %v3569 = vunpack.c.h.b16 %v3340
      %v3570 = vunpack.c.l.b16 %v3341
      %v3571 = vunpack.c.h.b16 %v3341
      %v3572 = vunpack.c.l.b16 %v3342
      %v3573 = vunpack.c.h.b16 %v3342
      %v3574 = vunpack.c.l.b16 %v3343
      %v3575 = vunpack.c.h.b16 %v3343
      %v3576 = vunpack.c.l.b16 %v3344
      %v3577 = vunpack.c.h.b16 %v3344
      %v3578 = vunpack.c.l.b16 %v3345
      %v3579 = vunpack.c.h.b16 %v3345
      %v3580 = vunpack.c.l.b16 %v3346
      %v3581 = vunpack.c.h.b16 %v3346
      %v3582 = vunpack.c.l.b16 %v3347
      %v3583 = vunpack.c.h.b16 %v3347
      %v3584 = vunpack.c.l.b16 %v3348
      %v3585 = vunpack.c.h.b16 %v3348
      %v3586 = vunpack.c.l.b16 %v3349
      %v3587 = vunpack.c.h.b16 %v3349
      %v3588 = vunpack.c.l.b16 %v3350
      %v3589 = vunpack.c.h.b16 %v3350
      %v3590 = vunpack.c.l.b16 %v3351
      %v3591 = vunpack.c.h.b16 %v3351
      %v3592 = vunpack.c.l.b16 %v3352
      %v3593 = vunpack.c.h.b16 %v3352
      %v3594 = vunpack.c.l.b16 %v3353
      %v3595 = vunpack.c.h.b16 %v3353
      %v3596 = vunpack.c.l.b16 %v3354
      %v3597 = vunpack.c.h.b16 %v3354
      %v3598 = vunpack.c.l.b16 %v3355
      %v3599 = vunpack.c.h.b16 %v3355
      %v3600 = vunpack.c.l.b16 %v3356
      %v3601 = vunpack.c.h.b16 %v3356
      %v3602 = vunpack.c.l.b16 %v3357
      %v3603 = vunpack.c.h.b16 %v3357
      %v3604 = vunpack.c.l.b16 %v3358
      %v3605 = vunpack.c.h.b16 %v3358
      %v3606 = vunpack.c.l.b16 %v3359
      %v3607 = vunpack.c.h.b16 %v3359
      %v3608 = vunpack.c.l.b16 %v3360
      %v3609 = vunpack.c.h.b16 %v3360
      %v3610 = vunpack.c.l.b16 %v3361
      %v3611 = vunpack.c.h.b16 %v3361
      %v3612 = vunpack.c.l.b16 %v3362
      %v3613 = vunpack.c.h.b16 %v3362
      %v3614 = vunpack.c.l.b16 %v3363
      %v3615 = vunpack.c.h.b16 %v3363
      %v3616 = vunpack.c.l.b16 %v3364
      %v3617 = vunpack.c.h.b16 %v3364
      %v3618 = vunpack.c.l.b16 %v3365
      %v3619 = vunpack.c.h.b16 %v3365
      %v3620 = vunpack.c.l.b16 %v3366
      %v3621 = vunpack.c.h.b16 %v3366
      %v3622 = vunpack.c.l.b16 %v3367
      %v3623 = vunpack.c.h.b16 %v3367
      %v3624 = vunpack.c.l.b16 %v3368
      %v3625 = vunpack.c.h.b16 %v3368
      %v3626 = vunpack.c.l.b16 %v3369
      %v3627 = vunpack.c.h.b16 %v3369
      %v3628 = vunpack.c.l.b16 %v3370
      %v3629 = vunpack.c.h.b16 %v3370
      %v3630 = vunpack.c.l.b16 %v3371
      %v3631 = vunpack.c.h.b16 %v3371
      %v3632 = vunpack.c.l.b16 %v3372
      %v3633 = vunpack.c.h.b16 %v3372
      %v3634 = vunpack.c.l.b16 %v3373
      %v3635 = vunpack.c.h.b16 %v3373
      %v3636 = vunpack.c.l.b16 %v3374
      %v3637 = vunpack.c.h.b16 %v3374
      %v3638 = vunpack.c.l.b16 %v3375
      %v3639 = vunpack.c.h.b16 %v3375
      %v3640 = vunpack.c.l.b16 %v3376
      %v3641 = vunpack.c.h.b16 %v3376
      %v3642 = vunpack.c.l.b16 %v3377
      %v3643 = vunpack.c.h.b16 %v3377
      %v3644 = vunpack.c.l.b16 %v3378
      %v3645 = vunpack.c.h.b16 %v3378
      %v3646 = vunpack.c.l.b16 %v3379
      %v3647 = vunpack.c.h.b16 %v3379
      %v3648 = vunpack.c.l.b16 %v3380
      %v3649 = vunpack.c.h.b16 %v3380
      %v3650 = vunpack.c.l.b16 %v3381
      %v3651 = vunpack.c.h.b16 %v3381
      %v3652 = vunpack.c.l.b16 %v3382
      %v3653 = vunpack.c.h.b16 %v3382
      %v3654 = vunpack.c.l.b16 %v3383
      %v3655 = vunpack.c.h.b16 %v3383
      %v3656 = vunpack.c.l.b16 %v3384
      %v3657 = vunpack.c.h.b16 %v3384
      %v3658 = vunpack.c.l.b16 %v3385
      %v3659 = vunpack.c.h.b16 %v3385
      %v3660 = vunpack.c.l.b16 %v3386
      %v3661 = vunpack.c.h.b16 %v3386
      %v3662 = vunpack.c.l.b16 %v3387
      %v3663 = vunpack.c.h.b16 %v3387
      %v3664 = vunpack.c.l.b16 %v3388
      %v3665 = vunpack.c.h.b16 %v3388
      %v3666 = vunpack.c.l.b16 %v3389
      %v3667 = vunpack.c.h.b16 %v3389
      %v3668 = vunpack.c.l.b16 %v3390
      %v3669 = vunpack.c.h.b16 %v3390
      %v3670 = vunpack.c.l.b16 %v3391
      %v3671 = vunpack.c.h.b16 %v3391
      %v3672 = vunpack.c.l.b16 %v3392
      %v3673 = vunpack.c.h.b16 %v3392
      %v3674 = vunpack.c.l.b16 %v3393
      %v3675 = vunpack.c.h.b16 %v3393
      %v3676 = vunpack.c.l.b16 %v3394
      %v3677 = vunpack.c.h.b16 %v3394
      %v3678 = vunpack.c.l.b16 %v3395
      %v3679 = vunpack.c.h.b16 %v3395
      %v3680 = vunpack.c.l.b16 %v3396
      %v3681 = vunpack.c.h.b16 %v3396
      %v3682 = vunpack.c.l.b16 %v3397
      %v3683 = vunpack.c.h.b16 %v3397
      %v3684 = vunpack.c.l.b16 %v3398
      %v3685 = vunpack.c.h.b16 %v3398
      %v3686 = vunpack.c.l.b16 %v3399
      %v3687 = vunpack.c.h.b16 %v3399
      %v3688 = vunpack.c.l.b16 %v3400
      %v3689 = vunpack.c.h.b16 %v3400
      %v3690 = vunpack.c.l.b16 %v3401
      %v3691 = vunpack.c.h.b16 %v3401
      %v3692 = vunpack.c.l.b16 %v3402
      %v3693 = vunpack.c.h.b16 %v3402
      %v3694 = vunpack.c.l.b16 %v3403
      %v3695 = vunpack.c.h.b16 %v3403
      %v3696 = vunpack.c.l.b16 %v3404
      %v3697 = vunpack.c.h.b16 %v3404
      %v3698 = vunpack.c.l.b16 %v3405
      %v3699 = vunpack.c.h.b16 %v3405
      %v3700 = vunpack.c.l.b16 %v3406
      %v3701 = vunpack.c.h.b16 %v3406
      %v3702 = vunpack.c.l.b16 %v3407
      %v3703 = vunpack.c.h.b16 %v3407
      %v3704 = vunpack.c.l.b16 %v3408
      %v3705 = vunpack.c.h.b16 %v3408
      %v3706 = vunpack.c.l.b16 %v3409
      %v3707 = vunpack.c.h.b16 %v3409
      %v3708 = vunpack.c.l.b16 %v3410
      %v3709 = vunpack.c.h.b16 %v3410
      %v3710 = vunpack.c.l.b16 %v3411
      %v3711 = vunpack.c.h.b16 %v3411
      %v3712 = vunpack.c.l.b16 %v3412
      %v3713 = vunpack.c.h.b16 %v3412
      %v3714 = vunpack.c.l.b16 %v3413
      %v3715 = vunpack.c.h.b16 %v3413
      %v3716 = vunpack.c.l.b16 %v3414
      %v3717 = vunpack.c.h.b16 %v3414
      %v3718 = vunpack.c.l.b16 %v3415
      %v3719 = vunpack.c.h.b16 %v3415
      %v3720 = vunpack.c.l.b16 %v3416
      %v3721 = vunpack.c.h.b16 %v3416
      %v3722 = vunpack.c.l.b16 %v3417
      %v3723 = vunpack.c.h.b16 %v3417
      %v3724 = vunpack.c.l.b16 %v3418
      %v3725 = vunpack.c.h.b16 %v3418
      %v3726 = vunpack.c.l.b16 %v3419
      %v3727 = vunpack.c.h.b16 %v3419
      %v3728 = vunpack.c.l.b16 %v3420
      %v3729 = vunpack.c.h.b16 %v3420
      %v3730 = vunpack.c.l.b16 %v3421
      %v3731 = vunpack.c.h.b16 %v3421
      %v3732 = vunpack.c.l.b16 %v3422
      %v3733 = vunpack.c.h.b16 %v3422
      %v3734 = vpack.c.b16 %v3556, %v3554
      %v3735 = vpack.c.b16 %v3557, %v3555
      %v3736 = vpack.c.b16 %v3560, %v3558
      %v3737 = vpack.c.b16 %v3561, %v3559
      %v3738 = vpack.c.b16 %v3564, %v3562
      %v3739 = vpack.c.b16 %v3565, %v3563
      %v3740 = vpack.c.b16 %v3568, %v3566
      %v3741 = vpack.c.b16 %v3569, %v3567
      %v3742 = vpack.c.b16 %v3572, %v3570
      %v3743 = vpack.c.b16 %v3573, %v3571
      %v3744 = vpack.c.b16 %v3576, %v3574
      %v3745 = vpack.c.b16 %v3577, %v3575
      %v3746 = vpack.c.b16 %v3580, %v3578
      %v3747 = vpack.c.b16 %v3581, %v3579
      %v3748 = vpack.c.b16 %v3584, %v3582
      %v3749 = vpack.c.b16 %v3585, %v3583
      %v3750 = vpack.c.b16 %v3588, %v3586
      %v3751 = vpack.c.b16 %v3589, %v3587
      %v3752 = vpack.c.b16 %v3592, %v3590
      %v3753 = vpack.c.b16 %v3593, %v3591
      %v3754 = vpack.c.b16 %v3596, %v3594
      %v3755 = vpack.c.b16 %v3597, %v3595
      %v3756 = vpack.c.b16 %v3600, %v3598
      %v3757 = vpack.c.b16 %v3601, %v3599
      %v3758 = vpack.c.b16 %v3604, %v3602
      %v3759 = vpack.c.b16 %v3605, %v3603
      %v3760 = vpack.c.b16 %v3608, %v3606
      %v3761 = vpack.c.b16 %v3609, %v3607
      %v3762 = vpack.c.b16 %v3612, %v3610
      %v3763 = vpack.c.b16 %v3613, %v3611
      %v3764 = vpack.c.b16 %v3616, %v3614
      %v3765 = vpack.c.b16 %v3617, %v3615
      %v3766 = vpack.c.b16 %v3620, %v3618
      %v3767 = vpack.c.b16 %v3621, %v3619
      %v3768 = vpack.c.b16 %v3624, %v3622
      %v3769 = vpack.c.b16 %v3625, %v3623
      %v3770 = vpack.c.b16 %v3628, %v3626
      %v3771 = vpack.c.b16 %v3629, %v3627
      %v3772 = vpack.c.b16 %v3632, %v3630
      %v3773 = vpack.c.b16 %v3633, %v3631
      %v3774 = vpack.c.b16 %v3636, %v3634
      %v3775 = vpack.c.b16 %v3637, %v3635
      %v3776 = vpack.c.b16 %v3640, %v3638
      %v3777 = vpack.c.b16 %v3641, %v3639
      %v3778 = vpack.c.b16 %v3644, %v3642
      %v3779 = vpack.c.b16 %v3645, %v3643
      %v3780 = vpack.c.b16 %v3648, %v3646
      %v3781 = vpack.c.b16 %v3649, %v3647
      %v3782 = vpack.c.b16 %v3652, %v3650
      %v3783 = vpack.c.b16 %v3653, %v3651
      %v3784 = vpack.c.b16 %v3656, %v3654
      %v3785 = vpack.c.b16 %v3657, %v3655
      %v3786 = vpack.c.b16 %v3660, %v3658
      %v3787 = vpack.c.b16 %v3661, %v3659
      %v3788 = vpack.c.b16 %v3664, %v3662
      %v3789 = vpack.c.b16 %v3665, %v3663
      %v3790 = vpack.c.b16 %v3668, %v3666
      %v3791 = vpack.c.b16 %v3669, %v3667
      %v3792 = vpack.c.b16 %v3672, %v3670
      %v3793 = vpack.c.b16 %v3673, %v3671
      %v3794 = vpack.c.b16 %v3676, %v3674
      %v3795 = vpack.c.b16 %v3677, %v3675
      %v3796 = vpack.c.b16 %v3680, %v3678
      %v3797 = vpack.c.b16 %v3681, %v3679
      %v3798 = vpack.c.b16 %v3684, %v3682
      %v3799 = vpack.c.b16 %v3685, %v3683
      %v3800 = vpack.c.b16 %v3688, %v3686
      %v3801 = vpack.c.b16 %v3689, %v3687
      %v3802 = vpack.c.b16 %v3692, %v3690
      %v3803 = vpack.c.b16 %v3693, %v3691
      %v3804 = vpack.c.b16 %v3696, %v3694
      %v3805 = vpack.c.b16 %v3697, %v3695
      %v3806 = vpack.c.b16 %v3700, %v3698
      %v3807 = vpack.c.b16 %v3701, %v3699
      %v3808 = vpack.c.b16 %v3704, %v3702
      %v3809 = vpack.c.b16 %v3705, %v3703
      %v3810 = vpack.c.b16 %v3708, %v3706
      %v3811 = vpack.c.b16 %v3709, %v3707
      %v3812 = vpack.c.b16 %v3712, %v3710
      %v3813 = vpack.c.b16 %v3713, %v3711
      %v3814 = vpack.c.b16 %v3716, %v3714
      %v3815 = vpack.c.b16 %v3717, %v3715
      %v3816 = vpack.c.b16 %v3720, %v3718
      %v3817 = vpack.c.b16 %v3721, %v3719
      %v3818 = vpack.c.b16 %v3724, %v3722
      %v3819 = vpack.c.b16 %v3725, %v3723
      %v3820 = vpack.c.b16 %v3728, %v3726
      %v3821 = vpack.c.b16 %v3729, %v3727
      %v3822 = vpack.c.b16 %v3732, %v3730
      %v3823 = vpack.c.b16 %v3733, %v3731
      %vm3914 = vcmask 654336
      %v3916 = vsel %vm3914, %v3458, 0
      %3918 = vmatprep.subr.bf16.mxu0 %v3749
      %3919 = vmatpush1.bf16.msra.mxu0 %v3748
      %3920 = vmatprep.subr.bf16.mxu0 %v3747
      %3921 = vmatpush1.bf16.msra.mxu0 %v3746
      %3922 = vmatprep.subr.bf16.mxu0 %v3745
      %3923 = vmatpush1.bf16.msra.mxu0 %v3744
      %3924 = vmatprep.subr.bf16.mxu0 %v3743
      %3925 = vmatpush1.bf16.msra.mxu0 %v3742
      %3926 = vmatprep.subr.bf16.mxu0 %v3741
      %3927 = vmatpush1.bf16.msra.mxu0 %v3740
      %3928 = vmatprep.subr.bf16.mxu0 %v3739
      %3929 = vmatpush1.bf16.msra.mxu0 %v3738
      %3930 = vmatprep.subr.bf16.mxu0 %v3737
      %3931 = vmatpush1.bf16.msra.mxu0 %v3736
      %3932 = vmatprep.subr.bf16.mxu0 %v3735
      %3933 = vmatpush1.bf16.msra.mxu0 %v3734
      %3934 = vmatprep.subr.bf16.mxu0 %v3765
      %3935 = vmatpush2.bf16.msra.mxu0 %v3764
      %3936 = vmatprep.subr.bf16.mxu0 %v3763
      %3937 = vmatpush2.bf16.msra.mxu0 %v3762
      %3938 = vmatprep.subr.bf16.mxu0 %v3761
      %3939 = vmatpush2.bf16.msra.mxu0 %v3760
      %3940 = vmatprep.subr.bf16.mxu0 %v3759
      %3941 = vmatpush2.bf16.msra.mxu0 %v3758
      %3942 = vmatprep.subr.bf16.mxu0 %v3757
      %3943 = vmatpush2.bf16.msra.mxu0 %v3756
      %3944 = vmatprep.subr.bf16.mxu0 %v3755
      %3945 = vmatpush2.bf16.msra.mxu0 %v3754
      %3946 = vmatprep.subr.bf16.mxu0 %v3753
      %3947 = vmatpush2.bf16.msra.mxu0 %v3752
      %3948 = vmatprep.subr.bf16.mxu0 %v3751
      %3949 = vmatpush2.bf16.msra.mxu0 %v3750
      %3950 = vmatprep.mubr.bf16.mxu0 %v3454
      %3951 = vmatmul.mubr.bf16.gmra.mxu0 %v3453
      %v3952 = vpop.f32.mrf.mxu0
      %v3953 = vadd.f32 %v3428, %v3952
      %v3954 = vpop.f32.mrf.mxu0
      %v3955 = vadd.f32 %v3428, %v3954
      %v3956 = vpop.f32.mrf.mxu0
      %v3957 = vadd.f32 %v3433, %v3956
      %v3958 = vpop.f32.mrf.mxu0
      %v3959 = vadd.f32 %v3433, %v3958
      %3960 = vdwg.mxu0
      %3961 = vmatprep.subr.bf16.mxu0 %v3781
      %3962 = vmatpush1.bf16.msra.mxu0 %v3780
      %3963 = vmatprep.subr.bf16.mxu0 %v3779
      %3964 = vmatpush1.bf16.msra.mxu0 %v3778
      %3965 = vmatprep.subr.bf16.mxu0 %v3777
      %3966 = vmatpush1.bf16.msra.mxu0 %v3776
      %3967 = vmatprep.subr.bf16.mxu0 %v3775
      %3968 = vmatpush1.bf16.msra.mxu0 %v3774
      %3969 = vmatprep.subr.bf16.mxu0 %v3773
      %3970 = vmatpush1.bf16.msra.mxu0 %v3772
      %3971 = vmatprep.subr.bf16.mxu0 %v3771
      %3972 = vmatpush1.bf16.msra.mxu0 %v3770
      %3973 = vmatprep.subr.bf16.mxu0 %v3769
      %3974 = vmatpush1.bf16.msra.mxu0 %v3768
      %3975 = vmatprep.subr.bf16.mxu0 %v3767
      %3976 = vmatpush1.bf16.msra.mxu0 %v3766
      %3977 = vmatprep.subr.bf16.mxu0 %v3797
      %3978 = vmatpush2.bf16.msra.mxu0 %v3796
      %3979 = vmatprep.subr.bf16.mxu0 %v3795
      %3980 = vmatpush2.bf16.msra.mxu0 %v3794
      %3981 = vmatprep.subr.bf16.mxu0 %v3793
      %3982 = vmatpush2.bf16.msra.mxu0 %v3792
      %3983 = vmatprep.subr.bf16.mxu0 %v3791
      %3984 = vmatpush2.bf16.msra.mxu0 %v3790
      %3985 = vmatprep.subr.bf16.mxu0 %v3789
      %3986 = vmatpush2.bf16.msra.mxu0 %v3788
      %3987 = vmatprep.subr.bf16.mxu0 %v3787
      %3988 = vmatpush2.bf16.msra.mxu0 %v3786
      %3989 = vmatprep.subr.bf16.mxu0 %v3785
      %3990 = vmatpush2.bf16.msra.mxu0 %v3784
      %3991 = vmatprep.subr.bf16.mxu0 %v3783
      %3992 = vmatpush2.bf16.msra.mxu0 %v3782
      %3993 = vmatprep.mubr.bf16.mxu0 %v3456
      %3994 = vmatmul.mubr.bf16.gmra.mxu0 %v3455
      %v3995 = vpop.f32.mrf.mxu0
      %v3996 = vadd.f32 %v3953, %v3995
      %v3997 = vpop.f32.mrf.mxu0
      %v3998 = vadd.f32 %v3955, %v3997
      %v3999 = vpop.f32.mrf.mxu0
      %v4000 = vadd.f32 %v3957, %v3999
      %v4001 = vpop.f32.mrf.mxu0
      %v4002 = vadd.f32 %v3959, %v4001
      %4003 = vdwg.mxu0
      %4004 = vmatprep.subr.bf16.mxu0 %v3813
      %4005 = vmatpush1.bf16.msra.mxu0 %v3812
      %4006 = vmatprep.subr.bf16.mxu0 %v3811
      %4007 = vmatpush1.bf16.msra.mxu0 %v3810
      %4008 = vmatprep.subr.bf16.mxu0 %v3809
      %4009 = vmatpush1.bf16.msra.mxu0 %v3808
      %4010 = vmatprep.subr.bf16.mxu0 %v3807
      %4011 = vmatpush1.bf16.msra.mxu0 %v3806
      %4012 = vmatprep.subr.bf16.mxu0 %v3805
      %4013 = vmatpush1.bf16.msra.mxu0 %v3804
      %4014 = vmatprep.subr.bf16.mxu0 %v3803
      %4015 = vmatpush1.bf16.msra.mxu0 %v3802
      %4016 = vmatprep.subr.bf16.mxu0 %v3801
      %4017 = vmatpush1.bf16.msra.mxu0 %v3800
      %4018 = vmatprep.subr.bf16.mxu0 %v3799
      %4019 = vmatpush1.bf16.msra.mxu0 %v3798
      %4020 = vmatprep.subr.bf16.mxu0 0
      %4021 = vmatpush2.bf16.msra.mxu0 0
      %4022 = vmatprep.subr.bf16.mxu0 0
      %4023 = vmatpush2.bf16.msra.mxu0 0
      %4024 = vmatprep.subr.bf16.mxu0 0
      %4025 = vmatpush2.bf16.msra.mxu0 0
      %4026 = vmatprep.subr.bf16.mxu0 %v3823
      %4027 = vmatpush2.bf16.msra.mxu0 %v3822
      %4028 = vmatprep.subr.bf16.mxu0 %v3821
      %4029 = vmatpush2.bf16.msra.mxu0 %v3820
      %4030 = vmatprep.subr.bf16.mxu0 %v3819
      %4031 = vmatpush2.bf16.msra.mxu0 %v3818
      %4032 = vmatprep.subr.bf16.mxu0 %v3817
      %4033 = vmatpush2.bf16.msra.mxu0 %v3816
      %4034 = vmatprep.subr.bf16.mxu0 %v3815
      %4035 = vmatpush2.bf16.msra.mxu0 %v3814
      %4036 = vmatprep.mubr.bf16.mxu0 %v3916
      %4037 = vmatmul.mubr.bf16.gmra.mxu0 %v3457
      %v4038 = vpop.f32.mrf.mxu0
      %v4039 = vadd.f32 %v3996, %v4038
      %v4040 = vpop.f32.mrf.mxu0
      %v4041 = vadd.f32 %v3998, %v4040
      %v4042 = vpop.f32.mrf.mxu0
      %v4043 = vadd.f32 %v4000, %v4042
      %v4044 = vpop.f32.mrf.mxu0
      %v4045 = vadd.f32 %v4002, %v4044
      %4046 = vdwg.mxu0
      %v4047 = vmul.f32 %v4039, 0.2
      %v4048 = vmul.f32 %v4041, 0.2
      %v4049 = vmul.f32 %v4043, 0.2
      %v4050 = vmul.f32 %v4045, 0.2
      %v4051 = vadd.f32 %v4047, %v415
      %v4052 = vadd.f32 %v4048, %v416
      %v4053 = vadd.f32 %v4049, %v417
      %v4054 = vadd.f32 %v4050, %v418
      %4055 = vst [vmem:[%s386] sm:$0xff] %v4051
      %4056 = vst [vmem:[%s386 + $0x8] sm:$0xff] %v4052
      %4057 = vst [vmem:[%s386 + $0x10] sm:$0xff] %v4053
      %4058 = vst [vmem:[%s386 + $0x18] sm:$0xff] %v4054
      %p4059 = scmp.lt.s32.totalorder %s22, 1
      %s4060 = scalar_select %p4059, %s22, 1
      %s4061 = smul.addr %s4060, 4
      %s4062 = smul.addr %s4061, 8
      %s4063 = scalar_lea.vmem %s11, %s4062
      // Predicated region
      $region65: #{residual_dense_block.1} parent=63 // pred_check
        %p4064 = pneg %p276
      $region66: #{residual_dense_block.1} parent=63 // pred_check_branch
        %4066 = sbr.rel (%p4064) target = $region68
      $region67: #{residual_dense_block.1} parent=63 // pred_region
        _
      $region68: #{residual_dense_block.1} parent=63 // pred_fallthru
        _
    $region64: #{residual_dense_block.1} parent=5 // pred_fallthru
      _
    %p4067 = scmp.le.s32.totalorder 2, %s17
    // Predicated region
    $region69: #{residual_dense_block.1} parent=5 // pred_check
      %p4068 = pneg %p4067
    $region70: #{residual_dense_block.1} parent=5 // pred_check_branch
      %4070 = sbr.rel (%p4068) target = $region72
    $region71: #{residual_dense_block.1} parent=5 // pred_region
      %s4071 = ssub.s32 %s17, 2
      // Predicated region
      $region73: #{residual_dense_block.1} parent=71 // pred_check
        %p4072 = pneg %p282
      $region74: #{residual_dense_block.1} parent=71 // pred_check_branch
        %4074 = sbr.rel (%p4072) target = $region76
      $region75: #{residual_dense_block.1} parent=71 // pred_region
        %p4075 = scmp.lt.s32.totalorder %s23, 1
        %s4076 = scalar_select %p4075, %s23, 1
        %s4077 = smul.addr %s4076, 4
        %s4078 = smul.addr %s4077, 8
        %s4079 = scalar_lea.vmem %s11, %s4078
      $region76: #{residual_dense_block.1} parent=71 // pred_fallthru
        _
    $region72: #{residual_dense_block.1} parent=5 // pred_fallthru
      _
  $region6: #{residual_dense_block.1} parent=0 // loop_footer
    %s21 = sadd.s32 1, %s17
  $region7: #{residual_dense_block.1} parent=0 // loop_footer_branch
    %16 = sbr.rel target = $region3
  $region8: #{residual_dense_block.1} parent=0 // loop_exit
    _

</llo_original>
